<compile_context>
chip_gen: v5e
topology: v5e:2x2
jax: 0.10.0
libtpu: 0.0.40
codegen_flags: <defaults>
</compile_context>

<pallas_src>
import functools

import jax
import jax.numpy as jnp
import numpy as np
from jax.experimental import pallas as pl
from jax.experimental.pallas import tpu as pltpu


def _lstm_cell(x_gates, h, c, whh_t, b, H):
    """PyTorch-ordered LSTM cell (i, f, g, o) given pre-computed x-gates."""
    gates = x_gates + jnp.dot(h, whh_t, preferred_element_type=jnp.float32) + b
    i = jax.nn.sigmoid(gates[:, 0 * H:1 * H])
    f = jax.nn.sigmoid(gates[:, 1 * H:2 * H])
    g = jnp.tanh(gates[:, 2 * H:3 * H])
    o = jax.nn.sigmoid(gates[:, 3 * H:4 * H])
    c_new = f * c + i * g
    h_new = o * jnp.tanh(c_new)
    return h_new, c_new


def pcb_pointer_kernel(pos_ref,
                       enc_wih_t_ref, enc_whh_t_ref, enc_b_ref,
                       w1_t_ref, b1_ref, w2_t_ref, b2_ref, v_ref, bv_ref,
                       dec_wih_h_t_ref, dec_wih_p_t_ref, dec_whh_t_ref, dec_b_ref,
                       out_ref,
                       *, B, N, H):
    f32 = jnp.float32
    pos = pos_ref[...]                                        # (B, N, 2)
    px = pos[:, :, 0:1]                                       # (B, N, 1)
    py = pos[:, :, 1:2]                                       # (B, N, 1)

    # ---- Hoisted input-gate projections (off the recurrent critical path). ----
    # Input width is 2, so the "matmuls" are just two broadcast mul-adds (VPU).
    enc_wih_t = enc_wih_t_ref[...]                            # (2, 4H)
    enc_xg = (px * enc_wih_t[0:1, :][None, :, :]
              + py * enc_wih_t[1:2, :][None, :, :])           # (B, N, 4H)
    dec_wih_p_t = dec_wih_p_t_ref[...]                        # (2, 4H)
    pos_gates = (px * dec_wih_p_t[0:1, :][None, :, :]
                 + py * dec_wih_p_t[1:2, :][None, :, :])      # (B, N, 4H)

    # ---------------- Encoder LSTM over the N component positions -------------
    enc_whh_t = enc_whh_t_ref[...]                            # (H, 4H)
    enc_b = enc_b_ref[...]                                    # (1, 4H)
    h = jnp.zeros((B, H), f32)
    c = jnp.zeros((B, H), f32)
    enc = jnp.zeros((B, N, H), f32)
    enc_rows = jax.lax.broadcasted_iota(jnp.int32, (B, N, H), 1)
    for n in range(N):
        h, c = _lstm_cell(enc_xg[:, n, :], h, c, enc_whh_t, enc_b, H)
        # Accumulate the encoder output in registers (single full store avoided
        # entirely: enc stays a value, no masked sub-tile vst per step).
        enc = enc + jnp.where(enc_rows == n, h[:, None, :], 0.0)

    # ---------------- Pointer decoder loop with additive attention ------------
    w1_t = w1_t_ref[...]
    b1 = b1_ref[...]
    w2_t = w2_t_ref[...]
    b2 = b2_ref[...]
    v = v_ref[...]                                            # (1, H)
    bv = bv_ref[...]                                          # (1, 1)
    dec_wih_h_t = dec_wih_h_t_ref[...]                        # (H, 4H)
    dec_whh_t = dec_whh_t_ref[...]                            # (H, 4H)
    dec_b = dec_b_ref[...]                                    # (1, 4H)

    # E = W_2(encoder_outputs): constant across decode steps (same math as ref).
    E = jnp.einsum('bnh,ho->bno', enc, w2_t,
                   preferred_element_type=jnp.float32) + b2[None, :, :]

    iota = jax.lax.broadcasted_iota(jnp.int32, (B, N), 1)
    out_rows = jax.lax.broadcasted_iota(jnp.int32, (B, N, N), 1)
    ptrs = jnp.zeros((B, N, N), f32)
    din_gates = jnp.zeros((B, 4 * H), f32)   # gates from decoder_input (starts at 0)

    for t in range(N):
        # Attention(h, enc)
        D = jnp.dot(h, w1_t, preferred_element_type=jnp.float32) + b1    # (B, H)
        tnh = jnp.tanh(D[:, None, :] + E)                                # (B, N, H)
        scores = jnp.sum(tnh * v[None, :, :], axis=-1) + bv              # (B, N)
        m = jnp.max(scores, axis=1, keepdims=True)
        e = jnp.exp(scores - m)
        inv_denom = pl.reciprocal(jnp.sum(e, axis=1, keepdims=True), approx=True)
        attn = e * inv_denom                                             # (B, N)
        ptrs = ptrs + jnp.where(out_rows == t, attn[:, None, :], 0.0)

        # attention-aware hidden state, then one decoder LSTM step
        aware = jnp.sum(enc * attn[:, :, None], axis=1)                  # (B, H)
        xg = jnp.dot(aware, dec_wih_h_t,
                     preferred_element_type=jnp.float32) + din_gates
        h, c = _lstm_cell(xg, h, c, dec_whh_t, dec_b, H)

        # predictions = argmax(attention); the next decoder positional input's
        # gates come from the precomputed per-position gates via a onehot sum
        # (no gather, no per-step (B,2)x(2,4H) matmul).
        maxv = jnp.max(attn, axis=1, keepdims=True)
        first_idx = jnp.min(jnp.where(attn == maxv, iota, N), axis=1, keepdims=True)
        onehot = (iota == first_idx).astype(f32)                         # (B, N)
        din_gates = jnp.sum(pos_gates * onehot[:, :, None], axis=1)      # (B, 4H)

    # Single lane-dense store of all pointer rows.
    out_ref[...] = ptrs


def pcb_pointer_net(positions, params):
    B, N, _ = positions.shape
    H = params['w1'].shape[0]

    # Glue: pre-transpose weights, merge LSTM biases, split decoder W_ih into
    # the hidden-feature block and the 2-dim position block.
    enc_wih_t = params['enc_w_ih'].T                       # (2, 4H)
    enc_whh_t = params['enc_w_hh'].T                       # (H, 4H)
    enc_b = (params['enc_b_ih'] + params['enc_b_hh'])[None, :]
    w1_t = params['w1'].T
    b1 = params['b1'][None, :]
    w2_t = params['w2'].T
    b2 = params['b2'][None, :]
    v = params['v']                                        # (1, H)
    bv = params['bv'][None, :]                             # (1, 1)
    dec_wih_h_t = params['dec_w_ih'][:, :H].T              # (H, 4H)
    dec_wih_p_t = params['dec_w_ih'][:, H:].T              # (2, 4H)
    dec_whh_t = params['dec_w_hh'].T                       # (H, 4H)
    dec_b = (params['dec_b_ih'] + params['dec_b_hh'])[None, :]

    kernel = functools.partial(pcb_pointer_kernel, B=B, N=N, H=H)
    vmem = pl.BlockSpec(memory_space=pltpu.MemorySpace.VMEM)
    # Total footprint (weights + activations + output) << 1 MiB, so everything
    # stays whole-array in VMEM on every TPU generation; no grid / tiling.
    # TODO(synk): if B ever grows, add a "parallel" batch grid axis so v7x's
    # second TensorCore is used.
    return pl.pallas_call(
        kernel,
        out_shape=jax.ShapeDtypeStruct((B, N, N), jnp.float32),
        in_specs=[vmem] * 14,
        out_specs=vmem,
    )(positions, enc_wih_t, enc_whh_t, enc_b, w1_t, b1, w2_t, b2, v, bv,
      dec_wih_h_t, dec_wih_p_t, dec_whh_t, dec_b)


# --------------------------- pure-JAX reference --------------------------------
def reference(positions, params):
    B, N, _ = positions.shape
    H = params['w1'].shape[0]

    def lstm_cell(x, h, c, w_ih, w_hh, b_ih, b_hh):
        gates = x @ w_ih.T + b_ih + h @ w_hh.T + b_hh
        i, f, g, o = jnp.split(gates, 4, axis=1)
        i = jax.nn.sigmoid(i)
        f = jax.nn.sigmoid(f)
        g = jnp.tanh(g)
        o = jax.nn.sigmoid(o)
        c = f * c + i * g
        h = o * jnp.tanh(c)
        return h, c

    h = jnp.zeros((B, H), jnp.float32)
    c = jnp.zeros((B, H), jnp.float32)
    enc = []
    for n in range(N):
        h, c = lstm_cell(positions[:, n, :], h, c,
                         params['enc_w_ih'], params['enc_w_hh'],
                         params['enc_b_ih'], params['enc_b_hh'])
        enc.append(h)
    enc = jnp.stack(enc, axis=1)

    din = jnp.zeros((B, 2), jnp.float32)
    ptrs = []
    for _ in range(N):
        D = h @ params['w1'].T + params['b1']
        E = enc @ params['w2'].T + params['b2']
        s = jnp.tanh(D[:, None, :] + E) @ params['v'].T + params['bv']   # (B, N, 1)
        attn3 = jax.nn.softmax(s, axis=1)
        aware = jnp.sum(enc * attn3, axis=1)
        attn = attn3[:, :, 0]
        ptrs.append(attn)
        x = jnp.concatenate([aware, din], axis=1)
        h, c = lstm_cell(x, h, c,
                         params['dec_w_ih'], params['dec_w_hh'],
                         params['dec_b_ih'], params['dec_b_hh'])
        pred = jnp.argmax(attn, axis=1)
        din = positions[jnp.arange(B), pred]
    return jnp.stack(ptrs, axis=1)


def init_params(key, H):
    k = 1.0 / float(np.sqrt(H))
    keys = jax.random.split(key, 16)

    def u(kk, shape):
        return jax.random.uniform(kk, shape, jnp.float32, -k, k)

    return {
        'enc_w_ih': u(keys[0], (4 * H, 2)),
        'enc_w_hh': u(keys[1], (4 * H, H)),
        'enc_b_ih': u(keys[2], (4 * H,)),
        'enc_b_hh': u(keys[3], (4 * H,)),
        'w1': u(keys[4], (H, H)),
        'b1': u(keys[5], (H,)),
        'w2': u(keys[6], (H, H)),
        'b2': u(keys[7], (H,)),
        'v': u(keys[8], (1, H)),
        'bv': u(keys[9], (1,)),
        'dec_w_ih': u(keys[10], (4 * H, H + 2)),
        'dec_w_hh': u(keys[11], (4 * H, H)),
        'dec_b_ih': u(keys[12], (4 * H,)),
        'dec_b_hh': u(keys[13], (4 * H,)),
    }


if __name__ == "__main__":
    B, N, H = 2, 8, 32
    key = jax.random.PRNGKey(0)
    kpos, kparams = jax.random.split(key)
    positions = jax.random.uniform(kpos, (B, N, 2), jnp.float32)
    params = init_params(kparams, H)

    out = jax.jit(pcb_pointer_net)(positions, params)
    out = jax.block_until_ready(out)

    ref = reference(positions, params)
    assert out.shape == (B, N, N)
    # atol slightly above 1e-4 to accommodate the intentional EUP approximate
    # reciprocal in the softmax (common per-row scale, argmax unaffected).
    np.testing.assert_allclose(np.asarray(out), np.asarray(ref),
                               rtol=1e-3, atol=2e-4)

    print("KERNEL_OK")
</pallas_src>

<mosaic_0001>
module attributes {stable_mosaic.version = 11 : i64} {
  func.func @pcb_pointer_kernel(%arg0: memref<2x8x2xf32, #tpu.memory_space<vmem>>, %arg1: memref<2x128xf32, #tpu.memory_space<vmem>>, %arg2: memref<32x128xf32, #tpu.memory_space<vmem>>, %arg3: memref<1x128xf32, #tpu.memory_space<vmem>>, %arg4: memref<32x32xf32, #tpu.memory_space<vmem>>, %arg5: memref<1x32xf32, #tpu.memory_space<vmem>>, %arg6: memref<32x32xf32, #tpu.memory_space<vmem>>, %arg7: memref<1x32xf32, #tpu.memory_space<vmem>>, %arg8: memref<1x32xf32, #tpu.memory_space<vmem>>, %arg9: memref<1x1xf32, #tpu.memory_space<vmem>>, %arg10: memref<32x128xf32, #tpu.memory_space<vmem>>, %arg11: memref<2x128xf32, #tpu.memory_space<vmem>>, %arg12: memref<32x128xf32, #tpu.memory_space<vmem>>, %arg13: memref<1x128xf32, #tpu.memory_space<vmem>>, %arg14: memref<2x8x8xf32, #tpu.memory_space<vmem>>) attributes {dimension_semantics = [], scalar_prefetch = 0 : i64, scratch_operands = 0 : i64, tpu.core_type = #tpu.core_type<tc>} {
    %c0 = arith.constant 0 : index
    %c0_0 = arith.constant 0 : index
    %c0_1 = arith.constant 0 : index
    %0 = vector.load %arg0[%c0, %c0_0, %c0_1] : memref<2x8x2xf32, #tpu.memory_space<vmem>>, vector<2x8x2xf32>
    %1 = vector.extract_strided_slice %0 {offsets = [0, 0, 0], sizes = [2, 8, 1], strides = [1, 1, 1]} : vector<2x8x2xf32> to vector<2x8x1xf32>
    %2 = vector.extract_strided_slice %0 {offsets = [0, 0, 1], sizes = [2, 8, 1], strides = [1, 1, 1]} : vector<2x8x2xf32> to vector<2x8x1xf32>
    %c0_2 = arith.constant 0 : index
    %c0_3 = arith.constant 0 : index
    %3 = vector.load %arg1[%c0_2, %c0_3] : memref<2x128xf32, #tpu.memory_space<vmem>>, vector<2x128xf32>
    %4 = vector.extract_strided_slice %3 {offsets = [0, 0], sizes = [1, 128], strides = [1, 1]} : vector<2x128xf32> to vector<1x128xf32>
    %5 = vector.shape_cast %4 : vector<1x128xf32> to vector<1x1x128xf32>
    %6 = vector.broadcast %1 : vector<2x8x1xf32> to vector<2x8x128xf32>
    %7 = vector.broadcast %5 : vector<1x1x128xf32> to vector<2x8x128xf32>
    %8 = arith.mulf %6, %7 : vector<2x8x128xf32>
    %9 = vector.extract_strided_slice %3 {offsets = [1, 0], sizes = [1, 128], strides = [1, 1]} : vector<2x128xf32> to vector<1x128xf32>
    %10 = vector.shape_cast %9 : vector<1x128xf32> to vector<1x1x128xf32>
    %11 = vector.broadcast %2 : vector<2x8x1xf32> to vector<2x8x128xf32>
    %12 = vector.broadcast %10 : vector<1x1x128xf32> to vector<2x8x128xf32>
    %13 = arith.mulf %11, %12 : vector<2x8x128xf32>
    %14 = arith.addf %8, %13 : vector<2x8x128xf32>
    %c0_4 = arith.constant 0 : index
    %c0_5 = arith.constant 0 : index
    %15 = vector.load %arg11[%c0_4, %c0_5] : memref<2x128xf32, #tpu.memory_space<vmem>>, vector<2x128xf32>
    %16 = vector.extract_strided_slice %15 {offsets = [0, 0], sizes = [1, 128], strides = [1, 1]} : vector<2x128xf32> to vector<1x128xf32>
    %17 = vector.shape_cast %16 : vector<1x128xf32> to vector<1x1x128xf32>
    %18 = vector.broadcast %1 : vector<2x8x1xf32> to vector<2x8x128xf32>
    %19 = vector.broadcast %17 : vector<1x1x128xf32> to vector<2x8x128xf32>
    %20 = arith.mulf %18, %19 : vector<2x8x128xf32>
    %21 = vector.extract_strided_slice %15 {offsets = [1, 0], sizes = [1, 128], strides = [1, 1]} : vector<2x128xf32> to vector<1x128xf32>
    %22 = vector.shape_cast %21 : vector<1x128xf32> to vector<1x1x128xf32>
    %23 = vector.broadcast %2 : vector<2x8x1xf32> to vector<2x8x128xf32>
    %24 = vector.broadcast %22 : vector<1x1x128xf32> to vector<2x8x128xf32>
    %25 = arith.mulf %23, %24 : vector<2x8x128xf32>
    %26 = arith.addf %20, %25 : vector<2x8x128xf32>
    %c0_6 = arith.constant 0 : index
    %c0_7 = arith.constant 0 : index
    %27 = vector.load %arg2[%c0_6, %c0_7] : memref<32x128xf32, #tpu.memory_space<vmem>>, vector<32x128xf32>
    %c0_8 = arith.constant 0 : index
    %c0_9 = arith.constant 0 : index
    %28 = vector.load %arg3[%c0_8, %c0_9] : memref<1x128xf32, #tpu.memory_space<vmem>>, vector<1x128xf32>
    %cst = arith.constant 0.000000e+00 : f32
    %29 = vector.broadcast %cst : f32 to vector<2x32xf32>
    %cst_10 = arith.constant 0.000000e+00 : f32
    %30 = vector.broadcast %cst_10 : f32 to vector<2x32xf32>
    %cst_11 = arith.constant 0.000000e+00 : f32
    %31 = vector.broadcast %cst_11 : f32 to vector<2x8x32xf32>
    %32 = tpu.iota {dimensions = array<i32: 1>} : vector<2x8x32xi32>
    %33 = vector.extract_strided_slice %14 {offsets = [0, 0, 0], sizes = [2, 1, 128], strides = [1, 1, 1]} : vector<2x8x128xf32> to vector<2x1x128xf32>
    %34 = vector.shape_cast %33 : vector<2x1x128xf32> to vector<2x128xf32>
    %cst_12 = arith.constant dense<0.000000e+00> : vector<2x128xf32>
    %35 = tpu.matmul %29, %27, %cst_12 {dimension_numbers = #tpu.dot_dimension_numbers<[1], [0], [0], [1], [0, 0, 1, 1], [], []>} : vector<2x32xf32>, vector<32x128xf32>, vector<2x128xf32> -> vector<2x128xf32>
    %36 = arith.addf %34, %35 : vector<2x128xf32>
    %37 = vector.broadcast %28 : vector<1x128xf32> to vector<2x128xf32>
    %38 = arith.addf %36, %37 : vector<2x128xf32>
    %39 = vector.extract_strided_slice %38 {offsets = [0, 0], sizes = [2, 32], strides = [1, 1]} : vector<2x128xf32> to vector<2x32xf32>
    %40 = arith.negf %39 : vector<2x32xf32>
    %41 = math.exp %40 : vector<2x32xf32>
    %cst_13 = arith.constant 1.000000e+00 : f32
    %42 = vector.broadcast %cst_13 : f32 to vector<2x32xf32>
    %43 = arith.addf %42, %41 : vector<2x32xf32>
    %44 = arith.divf %42, %43 : vector<2x32xf32>
    %45 = vector.extract_strided_slice %38 {offsets = [0, 32], sizes = [2, 32], strides = [1, 1]} : vector<2x128xf32> to vector<2x32xf32>
    %46 = arith.negf %45 : vector<2x32xf32>
    %47 = math.exp %46 : vector<2x32xf32>
    %cst_14 = arith.constant 1.000000e+00 : f32
    %48 = vector.broadcast %cst_14 : f32 to vector<2x32xf32>
    %49 = arith.addf %48, %47 : vector<2x32xf32>
    %50 = arith.divf %48, %49 : vector<2x32xf32>
    %51 = vector.extract_strided_slice %38 {offsets = [0, 64], sizes = [2, 32], strides = [1, 1]} : vector<2x128xf32> to vector<2x32xf32>
    %52 = math.tanh %51 : vector<2x32xf32>
    %53 = vector.extract_strided_slice %38 {offsets = [0, 96], sizes = [2, 32], strides = [1, 1]} : vector<2x128xf32> to vector<2x32xf32>
    %54 = arith.negf %53 : vector<2x32xf32>
    %55 = math.exp %54 : vector<2x32xf32>
    %cst_15 = arith.constant 1.000000e+00 : f32
    %56 = vector.broadcast %cst_15 : f32 to vector<2x32xf32>
    %57 = arith.addf %56, %55 : vector<2x32xf32>
    %58 = arith.divf %56, %57 : vector<2x32xf32>
    %59 = arith.mulf %50, %30 : vector<2x32xf32>
    %60 = arith.mulf %44, %52 : vector<2x32xf32>
    %61 = arith.addf %59, %60 : vector<2x32xf32>
    %62 = math.tanh %61 : vector<2x32xf32>
    %63 = arith.mulf %58, %62 : vector<2x32xf32>
    %c0_i32 = arith.constant 0 : i32
    %64 = vector.broadcast %c0_i32 : i32 to vector<2x8x32xi32>
    %65 = arith.cmpi eq, %32, %64 : vector<2x8x32xi32>
    %66 = vector.shape_cast %63 : vector<2x32xf32> to vector<2x1x32xf32>
    %cst_16 = arith.constant 0.000000e+00 : f32
    %67 = vector.shape_cast %66 : vector<2x1x32xf32> to vector<2x1x32xf32>
    %68 = vector.broadcast %67 : vector<2x1x32xf32> to vector<2x8x32xf32>
    %69 = vector.broadcast %cst_16 : f32 to vector<2x8x32xf32>
    %70 = arith.select %65, %68, %69 : vector<2x8x32xi1>, vector<2x8x32xf32>
    %71 = arith.addf %31, %70 : vector<2x8x32xf32>
    %72 = vector.extract_strided_slice %14 {offsets = [0, 1, 0], sizes = [2, 1, 128], strides = [1, 1, 1]} : vector<2x8x128xf32> to vector<2x1x128xf32>
    %73 = vector.shape_cast %72 : vector<2x1x128xf32> to vector<2x128xf32>
    %cst_17 = arith.constant dense<0.000000e+00> : vector<2x128xf32>
    %74 = tpu.matmul %63, %27, %cst_17 {dimension_numbers = #tpu.dot_dimension_numbers<[1], [0], [0], [1], [0, 0, 1, 1], [], []>} : vector<2x32xf32>, vector<32x128xf32>, vector<2x128xf32> -> vector<2x128xf32>
    %75 = arith.addf %73, %74 : vector<2x128xf32>
    %76 = vector.broadcast %28 : vector<1x128xf32> to vector<2x128xf32>
    %77 = arith.addf %75, %76 : vector<2x128xf32>
    %78 = vector.extract_strided_slice %77 {offsets = [0, 0], sizes = [2, 32], strides = [1, 1]} : vector<2x128xf32> to vector<2x32xf32>
    %79 = arith.negf %78 : vector<2x32xf32>
    %80 = math.exp %79 : vector<2x32xf32>
    %cst_18 = arith.constant 1.000000e+00 : f32
    %81 = vector.broadcast %cst_18 : f32 to vector<2x32xf32>
    %82 = arith.addf %81, %80 : vector<2x32xf32>
    %83 = arith.divf %81, %82 : vector<2x32xf32>
    %84 = vector.extract_strided_slice %77 {offsets = [0, 32], sizes = [2, 32], strides = [1, 1]} : vector<2x128xf32> to vector<2x32xf32>
    %85 = arith.negf %84 : vector<2x32xf32>
    %86 = math.exp %85 : vector<2x32xf32>
    %cst_19 = arith.constant 1.000000e+00 : f32
    %87 = vector.broadcast %cst_19 : f32 to vector<2x32xf32>
    %88 = arith.addf %87, %86 : vector<2x32xf32>
    %89 = arith.divf %87, %88 : vector<2x32xf32>
    %90 = vector.extract_strided_slice %77 {offsets = [0, 64], sizes = [2, 32], strides = [1, 1]} : vector<2x128xf32> to vector<2x32xf32>
    %91 = math.tanh %90 : vector<2x32xf32>
    %92 = vector.extract_strided_slice %77 {offsets = [0, 96], sizes = [2, 32], strides = [1, 1]} : vector<2x128xf32> to vector<2x32xf32>
    %93 = arith.negf %92 : vector<2x32xf32>
    %94 = math.exp %93 : vector<2x32xf32>
    %cst_20 = arith.constant 1.000000e+00 : f32
    %95 = vector.broadcast %cst_20 : f32 to vector<2x32xf32>
    %96 = arith.addf %95, %94 : vector<2x32xf32>
    %97 = arith.divf %95, %96 : vector<2x32xf32>
    %98 = arith.mulf %89, %61 : vector<2x32xf32>
    %99 = arith.mulf %83, %91 : vector<2x32xf32>
    %100 = arith.addf %98, %99 : vector<2x32xf32>
    %101 = math.tanh %100 : vector<2x32xf32>
    %102 = arith.mulf %97, %101 : vector<2x32xf32>
    %c1_i32 = arith.constant 1 : i32
    %103 = vector.broadcast %c1_i32 : i32 to vector<2x8x32xi32>
    %104 = arith.cmpi eq, %32, %103 : vector<2x8x32xi32>
    %105 = vector.shape_cast %102 : vector<2x32xf32> to vector<2x1x32xf32>
    %cst_21 = arith.constant 0.000000e+00 : f32
    %106 = vector.shape_cast %105 : vector<2x1x32xf32> to vector<2x1x32xf32>
    %107 = vector.broadcast %106 : vector<2x1x32xf32> to vector<2x8x32xf32>
    %108 = vector.broadcast %cst_21 : f32 to vector<2x8x32xf32>
    %109 = arith.select %104, %107, %108 : vector<2x8x32xi1>, vector<2x8x32xf32>
    %110 = arith.addf %71, %109 : vector<2x8x32xf32>
    %111 = vector.extract_strided_slice %14 {offsets = [0, 2, 0], sizes = [2, 1, 128], strides = [1, 1, 1]} : vector<2x8x128xf32> to vector<2x1x128xf32>
    %112 = vector.shape_cast %111 : vector<2x1x128xf32> to vector<2x128xf32>
    %cst_22 = arith.constant dense<0.000000e+00> : vector<2x128xf32>
    %113 = tpu.matmul %102, %27, %cst_22 {dimension_numbers = #tpu.dot_dimension_numbers<[1], [0], [0], [1], [0, 0, 1, 1], [], []>} : vector<2x32xf32>, vector<32x128xf32>, vector<2x128xf32> -> vector<2x128xf32>
    %114 = arith.addf %112, %113 : vector<2x128xf32>
    %115 = vector.broadcast %28 : vector<1x128xf32> to vector<2x128xf32>
    %116 = arith.addf %114, %115 : vector<2x128xf32>
    %117 = vector.extract_strided_slice %116 {offsets = [0, 0], sizes = [2, 32], strides = [1, 1]} : vector<2x128xf32> to vector<2x32xf32>
    %118 = arith.negf %117 : vector<2x32xf32>
    %119 = math.exp %118 : vector<2x32xf32>
    %cst_23 = arith.constant 1.000000e+00 : f32
    %120 = vector.broadcast %cst_23 : f32 to vector<2x32xf32>
    %121 = arith.addf %120, %119 : vector<2x32xf32>
    %122 = arith.divf %120, %121 : vector<2x32xf32>
    %123 = vector.extract_strided_slice %116 {offsets = [0, 32], sizes = [2, 32], strides = [1, 1]} : vector<2x128xf32> to vector<2x32xf32>
    %124 = arith.negf %123 : vector<2x32xf32>
    %125 = math.exp %124 : vector<2x32xf32>
    %cst_24 = arith.constant 1.000000e+00 : f32
    %126 = vector.broadcast %cst_24 : f32 to vector<2x32xf32>
    %127 = arith.addf %126, %125 : vector<2x32xf32>
    %128 = arith.divf %126, %127 : vector<2x32xf32>
    %129 = vector.extract_strided_slice %116 {offsets = [0, 64], sizes = [2, 32], strides = [1, 1]} : vector<2x128xf32> to vector<2x32xf32>
    %130 = math.tanh %129 : vector<2x32xf32>
    %131 = vector.extract_strided_slice %116 {offsets = [0, 96], sizes = [2, 32], strides = [1, 1]} : vector<2x128xf32> to vector<2x32xf32>
    %132 = arith.negf %131 : vector<2x32xf32>
    %133 = math.exp %132 : vector<2x32xf32>
    %cst_25 = arith.constant 1.000000e+00 : f32
    %134 = vector.broadcast %cst_25 : f32 to vector<2x32xf32>
    %135 = arith.addf %134, %133 : vector<2x32xf32>
    %136 = arith.divf %134, %135 : vector<2x32xf32>
    %137 = arith.mulf %128, %100 : vector<2x32xf32>
    %138 = arith.mulf %122, %130 : vector<2x32xf32>
    %139 = arith.addf %137, %138 : vector<2x32xf32>
    %140 = math.tanh %139 : vector<2x32xf32>
    %141 = arith.mulf %136, %140 : vector<2x32xf32>
    %c2_i32 = arith.constant 2 : i32
    %142 = vector.broadcast %c2_i32 : i32 to vector<2x8x32xi32>
    %143 = arith.cmpi eq, %32, %142 : vector<2x8x32xi32>
    %144 = vector.shape_cast %141 : vector<2x32xf32> to vector<2x1x32xf32>
    %cst_26 = arith.constant 0.000000e+00 : f32
    %145 = vector.shape_cast %144 : vector<2x1x32xf32> to vector<2x1x32xf32>
    %146 = vector.broadcast %145 : vector<2x1x32xf32> to vector<2x8x32xf32>
    %147 = vector.broadcast %cst_26 : f32 to vector<2x8x32xf32>
    %148 = arith.select %143, %146, %147 : vector<2x8x32xi1>, vector<2x8x32xf32>
    %149 = arith.addf %110, %148 : vector<2x8x32xf32>
    %150 = vector.extract_strided_slice %14 {offsets = [0, 3, 0], sizes = [2, 1, 128], strides = [1, 1, 1]} : vector<2x8x128xf32> to vector<2x1x128xf32>
    %151 = vector.shape_cast %150 : vector<2x1x128xf32> to vector<2x128xf32>
    %cst_27 = arith.constant dense<0.000000e+00> : vector<2x128xf32>
    %152 = tpu.matmul %141, %27, %cst_27 {dimension_numbers = #tpu.dot_dimension_numbers<[1], [0], [0], [1], [0, 0, 1, 1], [], []>} : vector<2x32xf32>, vector<32x128xf32>, vector<2x128xf32> -> vector<2x128xf32>
    %153 = arith.addf %151, %152 : vector<2x128xf32>
    %154 = vector.broadcast %28 : vector<1x128xf32> to vector<2x128xf32>
    %155 = arith.addf %153, %154 : vector<2x128xf32>
    %156 = vector.extract_strided_slice %155 {offsets = [0, 0], sizes = [2, 32], strides = [1, 1]} : vector<2x128xf32> to vector<2x32xf32>
    %157 = arith.negf %156 : vector<2x32xf32>
    %158 = math.exp %157 : vector<2x32xf32>
    %cst_28 = arith.constant 1.000000e+00 : f32
    %159 = vector.broadcast %cst_28 : f32 to vector<2x32xf32>
    %160 = arith.addf %159, %158 : vector<2x32xf32>
    %161 = arith.divf %159, %160 : vector<2x32xf32>
    %162 = vector.extract_strided_slice %155 {offsets = [0, 32], sizes = [2, 32], strides = [1, 1]} : vector<2x128xf32> to vector<2x32xf32>
    %163 = arith.negf %162 : vector<2x32xf32>
    %164 = math.exp %163 : vector<2x32xf32>
    %cst_29 = arith.constant 1.000000e+00 : f32
    %165 = vector.broadcast %cst_29 : f32 to vector<2x32xf32>
    %166 = arith.addf %165, %164 : vector<2x32xf32>
    %167 = arith.divf %165, %166 : vector<2x32xf32>
    %168 = vector.extract_strided_slice %155 {offsets = [0, 64], sizes = [2, 32], strides = [1, 1]} : vector<2x128xf32> to vector<2x32xf32>
    %169 = math.tanh %168 : vector<2x32xf32>
    %170 = vector.extract_strided_slice %155 {offsets = [0, 96], sizes = [2, 32], strides = [1, 1]} : vector<2x128xf32> to vector<2x32xf32>
    %171 = arith.negf %170 : vector<2x32xf32>
    %172 = math.exp %171 : vector<2x32xf32>
    %cst_30 = arith.constant 1.000000e+00 : f32
    %173 = vector.broadcast %cst_30 : f32 to vector<2x32xf32>
    %174 = arith.addf %173, %172 : vector<2x32xf32>
    %175 = arith.divf %173, %174 : vector<2x32xf32>
    %176 = arith.mulf %167, %139 : vector<2x32xf32>
    %177 = arith.mulf %161, %169 : vector<2x32xf32>
    %178 = arith.addf %176, %177 : vector<2x32xf32>
    %179 = math.tanh %178 : vector<2x32xf32>
    %180 = arith.mulf %175, %179 : vector<2x32xf32>
    %c3_i32 = arith.constant 3 : i32
    %181 = vector.broadcast %c3_i32 : i32 to vector<2x8x32xi32>
    %182 = arith.cmpi eq, %32, %181 : vector<2x8x32xi32>
    %183 = vector.shape_cast %180 : vector<2x32xf32> to vector<2x1x32xf32>
    %cst_31 = arith.constant 0.000000e+00 : f32
    %184 = vector.shape_cast %183 : vector<2x1x32xf32> to vector<2x1x32xf32>
    %185 = vector.broadcast %184 : vector<2x1x32xf32> to vector<2x8x32xf32>
    %186 = vector.broadcast %cst_31 : f32 to vector<2x8x32xf32>
    %187 = arith.select %182, %185, %186 : vector<2x8x32xi1>, vector<2x8x32xf32>
    %188 = arith.addf %149, %187 : vector<2x8x32xf32>
    %189 = vector.extract_strided_slice %14 {offsets = [0, 4, 0], sizes = [2, 1, 128], strides = [1, 1, 1]} : vector<2x8x128xf32> to vector<2x1x128xf32>
    %190 = vector.shape_cast %189 : vector<2x1x128xf32> to vector<2x128xf32>
    %cst_32 = arith.constant dense<0.000000e+00> : vector<2x128xf32>
    %191 = tpu.matmul %180, %27, %cst_32 {dimension_numbers = #tpu.dot_dimension_numbers<[1], [0], [0], [1], [0, 0, 1, 1], [], []>} : vector<2x32xf32>, vector<32x128xf32>, vector<2x128xf32> -> vector<2x128xf32>
    %192 = arith.addf %190, %191 : vector<2x128xf32>
    %193 = vector.broadcast %28 : vector<1x128xf32> to vector<2x128xf32>
    %194 = arith.addf %192, %193 : vector<2x128xf32>
    %195 = vector.extract_strided_slice %194 {offsets = [0, 0], sizes = [2, 32], strides = [1, 1]} : vector<2x128xf32> to vector<2x32xf32>
    %196 = arith.negf %195 : vector<2x32xf32>
    %197 = math.exp %196 : vector<2x32xf32>
    %cst_33 = arith.constant 1.000000e+00 : f32
    %198 = vector.broadcast %cst_33 : f32 to vector<2x32xf32>
    %199 = arith.addf %198, %197 : vector<2x32xf32>
    %200 = arith.divf %198, %199 : vector<2x32xf32>
    %201 = vector.extract_strided_slice %194 {offsets = [0, 32], sizes = [2, 32], strides = [1, 1]} : vector<2x128xf32> to vector<2x32xf32>
    %202 = arith.negf %201 : vector<2x32xf32>
    %203 = math.exp %202 : vector<2x32xf32>
    %cst_34 = arith.constant 1.000000e+00 : f32
    %204 = vector.broadcast %cst_34 : f32 to vector<2x32xf32>
    %205 = arith.addf %204, %203 : vector<2x32xf32>
    %206 = arith.divf %204, %205 : vector<2x32xf32>
    %207 = vector.extract_strided_slice %194 {offsets = [0, 64], sizes = [2, 32], strides = [1, 1]} : vector<2x128xf32> to vector<2x32xf32>
    %208 = math.tanh %207 : vector<2x32xf32>
    %209 = vector.extract_strided_slice %194 {offsets = [0, 96], sizes = [2, 32], strides = [1, 1]} : vector<2x128xf32> to vector<2x32xf32>
    %210 = arith.negf %209 : vector<2x32xf32>
    %211 = math.exp %210 : vector<2x32xf32>
    %cst_35 = arith.constant 1.000000e+00 : f32
    %212 = vector.broadcast %cst_35 : f32 to vector<2x32xf32>
    %213 = arith.addf %212, %211 : vector<2x32xf32>
    %214 = arith.divf %212, %213 : vector<2x32xf32>
    %215 = arith.mulf %206, %178 : vector<2x32xf32>
    %216 = arith.mulf %200, %208 : vector<2x32xf32>
    %217 = arith.addf %215, %216 : vector<2x32xf32>
    %218 = math.tanh %217 : vector<2x32xf32>
    %219 = arith.mulf %214, %218 : vector<2x32xf32>
    %c4_i32 = arith.constant 4 : i32
    %220 = vector.broadcast %c4_i32 : i32 to vector<2x8x32xi32>
    %221 = arith.cmpi eq, %32, %220 : vector<2x8x32xi32>
    %222 = vector.shape_cast %219 : vector<2x32xf32> to vector<2x1x32xf32>
    %cst_36 = arith.constant 0.000000e+00 : f32
    %223 = vector.shape_cast %222 : vector<2x1x32xf32> to vector<2x1x32xf32>
    %224 = vector.broadcast %223 : vector<2x1x32xf32> to vector<2x8x32xf32>
    %225 = vector.broadcast %cst_36 : f32 to vector<2x8x32xf32>
    %226 = arith.select %221, %224, %225 : vector<2x8x32xi1>, vector<2x8x32xf32>
    %227 = arith.addf %188, %226 : vector<2x8x32xf32>
    %228 = vector.extract_strided_slice %14 {offsets = [0, 5, 0], sizes = [2, 1, 128], strides = [1, 1, 1]} : vector<2x8x128xf32> to vector<2x1x128xf32>
    %229 = vector.shape_cast %228 : vector<2x1x128xf32> to vector<2x128xf32>
    %cst_37 = arith.constant dense<0.000000e+00> : vector<2x128xf32>
    %230 = tpu.matmul %219, %27, %cst_37 {dimension_numbers = #tpu.dot_dimension_numbers<[1], [0], [0], [1], [0, 0, 1, 1], [], []>} : vector<2x32xf32>, vector<32x128xf32>, vector<2x128xf32> -> vector<2x128xf32>
    %231 = arith.addf %229, %230 : vector<2x128xf32>
    %232 = vector.broadcast %28 : vector<1x128xf32> to vector<2x128xf32>
    %233 = arith.addf %231, %232 : vector<2x128xf32>
    %234 = vector.extract_strided_slice %233 {offsets = [0, 0], sizes = [2, 32], strides = [1, 1]} : vector<2x128xf32> to vector<2x32xf32>
    %235 = arith.negf %234 : vector<2x32xf32>
    %236 = math.exp %235 : vector<2x32xf32>
    %cst_38 = arith.constant 1.000000e+00 : f32
    %237 = vector.broadcast %cst_38 : f32 to vector<2x32xf32>
    %238 = arith.addf %237, %236 : vector<2x32xf32>
    %239 = arith.divf %237, %238 : vector<2x32xf32>
    %240 = vector.extract_strided_slice %233 {offsets = [0, 32], sizes = [2, 32], strides = [1, 1]} : vector<2x128xf32> to vector<2x32xf32>
    %241 = arith.negf %240 : vector<2x32xf32>
    %242 = math.exp %241 : vector<2x32xf32>
    %cst_39 = arith.constant 1.000000e+00 : f32
    %243 = vector.broadcast %cst_39 : f32 to vector<2x32xf32>
    %244 = arith.addf %243, %242 : vector<2x32xf32>
    %245 = arith.divf %243, %244 : vector<2x32xf32>
    %246 = vector.extract_strided_slice %233 {offsets = [0, 64], sizes = [2, 32], strides = [1, 1]} : vector<2x128xf32> to vector<2x32xf32>
    %247 = math.tanh %246 : vector<2x32xf32>
    %248 = vector.extract_strided_slice %233 {offsets = [0, 96], sizes = [2, 32], strides = [1, 1]} : vector<2x128xf32> to vector<2x32xf32>
    %249 = arith.negf %248 : vector<2x32xf32>
    %250 = math.exp %249 : vector<2x32xf32>
    %cst_40 = arith.constant 1.000000e+00 : f32
    %251 = vector.broadcast %cst_40 : f32 to vector<2x32xf32>
    %252 = arith.addf %251, %250 : vector<2x32xf32>
    %253 = arith.divf %251, %252 : vector<2x32xf32>
    %254 = arith.mulf %245, %217 : vector<2x32xf32>
    %255 = arith.mulf %239, %247 : vector<2x32xf32>
    %256 = arith.addf %254, %255 : vector<2x32xf32>
    %257 = math.tanh %256 : vector<2x32xf32>
    %258 = arith.mulf %253, %257 : vector<2x32xf32>
    %c5_i32 = arith.constant 5 : i32
    %259 = vector.broadcast %c5_i32 : i32 to vector<2x8x32xi32>
    %260 = arith.cmpi eq, %32, %259 : vector<2x8x32xi32>
    %261 = vector.shape_cast %258 : vector<2x32xf32> to vector<2x1x32xf32>
    %cst_41 = arith.constant 0.000000e+00 : f32
    %262 = vector.shape_cast %261 : vector<2x1x32xf32> to vector<2x1x32xf32>
    %263 = vector.broadcast %262 : vector<2x1x32xf32> to vector<2x8x32xf32>
    %264 = vector.broadcast %cst_41 : f32 to vector<2x8x32xf32>
    %265 = arith.select %260, %263, %264 : vector<2x8x32xi1>, vector<2x8x32xf32>
    %266 = arith.addf %227, %265 : vector<2x8x32xf32>
    %267 = vector.extract_strided_slice %14 {offsets = [0, 6, 0], sizes = [2, 1, 128], strides = [1, 1, 1]} : vector<2x8x128xf32> to vector<2x1x128xf32>
    %268 = vector.shape_cast %267 : vector<2x1x128xf32> to vector<2x128xf32>
    %cst_42 = arith.constant dense<0.000000e+00> : vector<2x128xf32>
    %269 = tpu.matmul %258, %27, %cst_42 {dimension_numbers = #tpu.dot_dimension_numbers<[1], [0], [0], [1], [0, 0, 1, 1], [], []>} : vector<2x32xf32>, vector<32x128xf32>, vector<2x128xf32> -> vector<2x128xf32>
    %270 = arith.addf %268, %269 : vector<2x128xf32>
    %271 = vector.broadcast %28 : vector<1x128xf32> to vector<2x128xf32>
    %272 = arith.addf %270, %271 : vector<2x128xf32>
    %273 = vector.extract_strided_slice %272 {offsets = [0, 0], sizes = [2, 32], strides = [1, 1]} : vector<2x128xf32> to vector<2x32xf32>
    %274 = arith.negf %273 : vector<2x32xf32>
    %275 = math.exp %274 : vector<2x32xf32>
    %cst_43 = arith.constant 1.000000e+00 : f32
    %276 = vector.broadcast %cst_43 : f32 to vector<2x32xf32>
    %277 = arith.addf %276, %275 : vector<2x32xf32>
    %278 = arith.divf %276, %277 : vector<2x32xf32>
    %279 = vector.extract_strided_slice %272 {offsets = [0, 32], sizes = [2, 32], strides = [1, 1]} : vector<2x128xf32> to vector<2x32xf32>
    %280 = arith.negf %279 : vector<2x32xf32>
    %281 = math.exp %280 : vector<2x32xf32>
    %cst_44 = arith.constant 1.000000e+00 : f32
    %282 = vector.broadcast %cst_44 : f32 to vector<2x32xf32>
    %283 = arith.addf %282, %281 : vector<2x32xf32>
    %284 = arith.divf %282, %283 : vector<2x32xf32>
    %285 = vector.extract_strided_slice %272 {offsets = [0, 64], sizes = [2, 32], strides = [1, 1]} : vector<2x128xf32> to vector<2x32xf32>
    %286 = math.tanh %285 : vector<2x32xf32>
    %287 = vector.extract_strided_slice %272 {offsets = [0, 96], sizes = [2, 32], strides = [1, 1]} : vector<2x128xf32> to vector<2x32xf32>
    %288 = arith.negf %287 : vector<2x32xf32>
    %289 = math.exp %288 : vector<2x32xf32>
    %cst_45 = arith.constant 1.000000e+00 : f32
    %290 = vector.broadcast %cst_45 : f32 to vector<2x32xf32>
    %291 = arith.addf %290, %289 : vector<2x32xf32>
    %292 = arith.divf %290, %291 : vector<2x32xf32>
    %293 = arith.mulf %284, %256 : vector<2x32xf32>
    %294 = arith.mulf %278, %286 : vector<2x32xf32>
    %295 = arith.addf %293, %294 : vector<2x32xf32>
    %296 = math.tanh %295 : vector<2x32xf32>
    %297 = arith.mulf %292, %296 : vector<2x32xf32>
    %c6_i32 = arith.constant 6 : i32
    %298 = vector.broadcast %c6_i32 : i32 to vector<2x8x32xi32>
    %299 = arith.cmpi eq, %32, %298 : vector<2x8x32xi32>
    %300 = vector.shape_cast %297 : vector<2x32xf32> to vector<2x1x32xf32>
    %cst_46 = arith.constant 0.000000e+00 : f32
    %301 = vector.shape_cast %300 : vector<2x1x32xf32> to vector<2x1x32xf32>
    %302 = vector.broadcast %301 : vector<2x1x32xf32> to vector<2x8x32xf32>
    %303 = vector.broadcast %cst_46 : f32 to vector<2x8x32xf32>
    %304 = arith.select %299, %302, %303 : vector<2x8x32xi1>, vector<2x8x32xf32>
    %305 = arith.addf %266, %304 : vector<2x8x32xf32>
    %306 = vector.extract_strided_slice %14 {offsets = [0, 7, 0], sizes = [2, 1, 128], strides = [1, 1, 1]} : vector<2x8x128xf32> to vector<2x1x128xf32>
    %307 = vector.shape_cast %306 : vector<2x1x128xf32> to vector<2x128xf32>
    %cst_47 = arith.constant dense<0.000000e+00> : vector<2x128xf32>
    %308 = tpu.matmul %297, %27, %cst_47 {dimension_numbers = #tpu.dot_dimension_numbers<[1], [0], [0], [1], [0, 0, 1, 1], [], []>} : vector<2x32xf32>, vector<32x128xf32>, vector<2x128xf32> -> vector<2x128xf32>
    %309 = arith.addf %307, %308 : vector<2x128xf32>
    %310 = vector.broadcast %28 : vector<1x128xf32> to vector<2x128xf32>
    %311 = arith.addf %309, %310 : vector<2x128xf32>
    %312 = vector.extract_strided_slice %311 {offsets = [0, 0], sizes = [2, 32], strides = [1, 1]} : vector<2x128xf32> to vector<2x32xf32>
    %313 = arith.negf %312 : vector<2x32xf32>
    %314 = math.exp %313 : vector<2x32xf32>
    %cst_48 = arith.constant 1.000000e+00 : f32
    %315 = vector.broadcast %cst_48 : f32 to vector<2x32xf32>
    %316 = arith.addf %315, %314 : vector<2x32xf32>
    %317 = arith.divf %315, %316 : vector<2x32xf32>
    %318 = vector.extract_strided_slice %311 {offsets = [0, 32], sizes = [2, 32], strides = [1, 1]} : vector<2x128xf32> to vector<2x32xf32>
    %319 = arith.negf %318 : vector<2x32xf32>
    %320 = math.exp %319 : vector<2x32xf32>
    %cst_49 = arith.constant 1.000000e+00 : f32
    %321 = vector.broadcast %cst_49 : f32 to vector<2x32xf32>
    %322 = arith.addf %321, %320 : vector<2x32xf32>
    %323 = arith.divf %321, %322 : vector<2x32xf32>
    %324 = vector.extract_strided_slice %311 {offsets = [0, 64], sizes = [2, 32], strides = [1, 1]} : vector<2x128xf32> to vector<2x32xf32>
    %325 = math.tanh %324 : vector<2x32xf32>
    %326 = vector.extract_strided_slice %311 {offsets = [0, 96], sizes = [2, 32], strides = [1, 1]} : vector<2x128xf32> to vector<2x32xf32>
    %327 = arith.negf %326 : vector<2x32xf32>
    %328 = math.exp %327 : vector<2x32xf32>
    %cst_50 = arith.constant 1.000000e+00 : f32
    %329 = vector.broadcast %cst_50 : f32 to vector<2x32xf32>
    %330 = arith.addf %329, %328 : vector<2x32xf32>
    %331 = arith.divf %329, %330 : vector<2x32xf32>
    %332 = arith.mulf %323, %295 : vector<2x32xf32>
    %333 = arith.mulf %317, %325 : vector<2x32xf32>
    %334 = arith.addf %332, %333 : vector<2x32xf32>
    %335 = math.tanh %334 : vector<2x32xf32>
    %336 = arith.mulf %331, %335 : vector<2x32xf32>
    %c7_i32 = arith.constant 7 : i32
    %337 = vector.broadcast %c7_i32 : i32 to vector<2x8x32xi32>
    %338 = arith.cmpi eq, %32, %337 : vector<2x8x32xi32>
    %339 = vector.shape_cast %336 : vector<2x32xf32> to vector<2x1x32xf32>
    %cst_51 = arith.constant 0.000000e+00 : f32
    %340 = vector.shape_cast %339 : vector<2x1x32xf32> to vector<2x1x32xf32>
    %341 = vector.broadcast %340 : vector<2x1x32xf32> to vector<2x8x32xf32>
    %342 = vector.broadcast %cst_51 : f32 to vector<2x8x32xf32>
    %343 = arith.select %338, %341, %342 : vector<2x8x32xi1>, vector<2x8x32xf32>
    %344 = arith.addf %305, %343 : vector<2x8x32xf32>
    %c0_52 = arith.constant 0 : index
    %c0_53 = arith.constant 0 : index
    %345 = vector.load %arg4[%c0_52, %c0_53] : memref<32x32xf32, #tpu.memory_space<vmem>>, vector<32x32xf32>
    %c0_54 = arith.constant 0 : index
    %c0_55 = arith.constant 0 : index
    %346 = vector.load %arg5[%c0_54, %c0_55] : memref<1x32xf32, #tpu.memory_space<vmem>>, vector<1x32xf32>
    %c0_56 = arith.constant 0 : index
    %c0_57 = arith.constant 0 : index
    %347 = vector.load %arg6[%c0_56, %c0_57] : memref<32x32xf32, #tpu.memory_space<vmem>>, vector<32x32xf32>
    %c0_58 = arith.constant 0 : index
    %c0_59 = arith.constant 0 : index
    %348 = vector.load %arg7[%c0_58, %c0_59] : memref<1x32xf32, #tpu.memory_space<vmem>>, vector<1x32xf32>
    %c0_60 = arith.constant 0 : index
    %c0_61 = arith.constant 0 : index
    %349 = vector.load %arg8[%c0_60, %c0_61] : memref<1x32xf32, #tpu.memory_space<vmem>>, vector<1x32xf32>
    %c0_62 = arith.constant 0 : index
    %c0_63 = arith.constant 0 : index
    %350 = vector.load %arg9[%c0_62, %c0_63] : memref<1x1xf32, #tpu.memory_space<vmem>>, vector<1x1xf32>
    %c0_64 = arith.constant 0 : index
    %c0_65 = arith.constant 0 : index
    %351 = vector.load %arg10[%c0_64, %c0_65] : memref<32x128xf32, #tpu.memory_space<vmem>>, vector<32x128xf32>
    %c0_66 = arith.constant 0 : index
    %c0_67 = arith.constant 0 : index
    %352 = vector.load %arg12[%c0_66, %c0_67] : memref<32x128xf32, #tpu.memory_space<vmem>>, vector<32x128xf32>
    %c0_68 = arith.constant 0 : index
    %c0_69 = arith.constant 0 : index
    %353 = vector.load %arg13[%c0_68, %c0_69] : memref<1x128xf32, #tpu.memory_space<vmem>>, vector<1x128xf32>
    "tpu.trace_start"() <{level = 10 : i32, message = "bnh,ho->bno"}> : () -> ()
    %cst_70 = arith.constant dense<0.000000e+00> : vector<2x8x32xf32>
    %354 = tpu.matmul %344, %347, %cst_70 {dimension_numbers = #tpu.dot_dimension_numbers<[2], [0], [0, 1], [1], [0, 0, 0, 1, 1, 1], [], []>} : vector<2x8x32xf32>, vector<32x32xf32>, vector<2x8x32xf32> -> vector<2x8x32xf32>
    "tpu.trace_stop"() : () -> ()
    %355 = vector.shape_cast %348 : vector<1x32xf32> to vector<1x1x32xf32>
    %356 = vector.broadcast %355 : vector<1x1x32xf32> to vector<2x8x32xf32>
    %357 = arith.addf %354, %356 : vector<2x8x32xf32>
    %358 = tpu.iota {dimensions = array<i32: 1>} : vector<2x8xi32>
    %359 = tpu.iota {dimensions = array<i32: 1>} : vector<2x8x8xi32>
    %cst_71 = arith.constant 0.000000e+00 : f32
    %360 = vector.broadcast %cst_71 : f32 to vector<2x8x8xf32>
    %cst_72 = arith.constant 0.000000e+00 : f32
    %361 = vector.broadcast %cst_72 : f32 to vector<2x128xf32>
    %cst_73 = arith.constant dense<0.000000e+00> : vector<2x32xf32>
    %362 = tpu.matmul %336, %345, %cst_73 {dimension_numbers = #tpu.dot_dimension_numbers<[1], [0], [0], [1], [0, 0, 1, 1], [], []>} : vector<2x32xf32>, vector<32x32xf32>, vector<2x32xf32> -> vector<2x32xf32>
    %363 = vector.broadcast %346 : vector<1x32xf32> to vector<2x32xf32>
    %364 = arith.addf %362, %363 : vector<2x32xf32>
    %365 = vector.shape_cast %364 : vector<2x32xf32> to vector<2x1x32xf32>
    %366 = vector.broadcast %365 : vector<2x1x32xf32> to vector<2x8x32xf32>
    %367 = arith.addf %366, %357 : vector<2x8x32xf32>
    %368 = math.tanh %367 : vector<2x8x32xf32>
    %369 = vector.shape_cast %349 : vector<1x32xf32> to vector<1x1x32xf32>
    %370 = vector.broadcast %369 : vector<1x1x32xf32> to vector<2x8x32xf32>
    %371 = arith.mulf %368, %370 : vector<2x8x32xf32>
    %cst_74 = arith.constant dense<0.000000e+00> : vector<2x8xf32>
    %372 = vector.multi_reduction <add>, %371, %cst_74 [2] : vector<2x8x32xf32> to vector<2x8xf32>
    %373 = vector.broadcast %350 : vector<1x1xf32> to vector<2x8xf32>
    %374 = arith.addf %372, %373 : vector<2x8xf32>
    %cst_75 = arith.constant dense<0xFF800000> : vector<2xf32>
    %375 = vector.multi_reduction <maximumf>, %374, %cst_75 [1] : vector<2x8xf32> to vector<2xf32>
    %376 = vector.shape_cast %375 : vector<2xf32> to vector<2x1xf32>
    %377 = vector.broadcast %376 : vector<2x1xf32> to vector<2x8xf32>
    %378 = arith.subf %374, %377 : vector<2x8xf32>
    %379 = math.exp %378 : vector<2x8xf32>
    %cst_76 = arith.constant dense<0.000000e+00> : vector<2xf32>
    %380 = vector.multi_reduction <add>, %379, %cst_76 [1] : vector<2x8xf32> to vector<2xf32>
    %381 = vector.shape_cast %380 : vector<2xf32> to vector<2x1xf32>
    %382 = tpu.reciprocal %381 {approx = true} : vector<2x1xf32> -> vector<2x1xf32>
    %383 = vector.broadcast %382 : vector<2x1xf32> to vector<2x8xf32>
    %384 = arith.mulf %379, %383 : vector<2x8xf32>
    %c0_i32_77 = arith.constant 0 : i32
    %385 = vector.broadcast %c0_i32_77 : i32 to vector<2x8x8xi32>
    %386 = arith.cmpi eq, %359, %385 : vector<2x8x8xi32>
    %387 = vector.shape_cast %384 : vector<2x8xf32> to vector<2x1x8xf32>
    %cst_78 = arith.constant 0.000000e+00 : f32
    %388 = vector.shape_cast %387 : vector<2x1x8xf32> to vector<2x1x8xf32>
    %389 = vector.broadcast %388 : vector<2x1x8xf32> to vector<2x8x8xf32>
    %390 = vector.broadcast %cst_78 : f32 to vector<2x8x8xf32>
    %391 = arith.select %386, %389, %390 : vector<2x8x8xi1>, vector<2x8x8xf32>
    %392 = arith.addf %360, %391 : vector<2x8x8xf32>
    %393 = vector.shape_cast %384 : vector<2x8xf32> to vector<2x8x1xf32>
    %394 = vector.broadcast %393 : vector<2x8x1xf32> to vector<2x8x32xf32>
    %395 = arith.mulf %344, %394 : vector<2x8x32xf32>
    %cst_79 = arith.constant dense<0.000000e+00> : vector<2x32xf32>
    %396 = vector.multi_reduction <add>, %395, %cst_79 [1] : vector<2x8x32xf32> to vector<2x32xf32>
    %cst_80 = arith.constant dense<0.000000e+00> : vector<2x128xf32>
    %397 = tpu.matmul %396, %351, %cst_80 {dimension_numbers = #tpu.dot_dimension_numbers<[1], [0], [0], [1], [0, 0, 1, 1], [], []>} : vector<2x32xf32>, vector<32x128xf32>, vector<2x128xf32> -> vector<2x128xf32>
    %398 = arith.addf %397, %361 : vector<2x128xf32>
    %cst_81 = arith.constant dense<0.000000e+00> : vector<2x128xf32>
    %399 = tpu.matmul %336, %352, %cst_81 {dimension_numbers = #tpu.dot_dimension_numbers<[1], [0], [0], [1], [0, 0, 1, 1], [], []>} : vector<2x32xf32>, vector<32x128xf32>, vector<2x128xf32> -> vector<2x128xf32>
    %400 = arith.addf %398, %399 : vector<2x128xf32>
    %401 = vector.broadcast %353 : vector<1x128xf32> to vector<2x128xf32>
    %402 = arith.addf %400, %401 : vector<2x128xf32>
    %403 = vector.extract_strided_slice %402 {offsets = [0, 0], sizes = [2, 32], strides = [1, 1]} : vector<2x128xf32> to vector<2x32xf32>
    %404 = arith.negf %403 : vector<2x32xf32>
    %405 = math.exp %404 : vector<2x32xf32>
    %cst_82 = arith.constant 1.000000e+00 : f32
    %406 = vector.broadcast %cst_82 : f32 to vector<2x32xf32>
    %407 = arith.addf %406, %405 : vector<2x32xf32>
    %408 = arith.divf %406, %407 : vector<2x32xf32>
    %409 = vector.extract_strided_slice %402 {offsets = [0, 32], sizes = [2, 32], strides = [1, 1]} : vector<2x128xf32> to vector<2x32xf32>
    %410 = arith.negf %409 : vector<2x32xf32>
    %411 = math.exp %410 : vector<2x32xf32>
    %cst_83 = arith.constant 1.000000e+00 : f32
    %412 = vector.broadcast %cst_83 : f32 to vector<2x32xf32>
    %413 = arith.addf %412, %411 : vector<2x32xf32>
    %414 = arith.divf %412, %413 : vector<2x32xf32>
    %415 = vector.extract_strided_slice %402 {offsets = [0, 64], sizes = [2, 32], strides = [1, 1]} : vector<2x128xf32> to vector<2x32xf32>
    %416 = math.tanh %415 : vector<2x32xf32>
    %417 = vector.extract_strided_slice %402 {offsets = [0, 96], sizes = [2, 32], strides = [1, 1]} : vector<2x128xf32> to vector<2x32xf32>
    %418 = arith.negf %417 : vector<2x32xf32>
    %419 = math.exp %418 : vector<2x32xf32>
    %cst_84 = arith.constant 1.000000e+00 : f32
    %420 = vector.broadcast %cst_84 : f32 to vector<2x32xf32>
    %421 = arith.addf %420, %419 : vector<2x32xf32>
    %422 = arith.divf %420, %421 : vector<2x32xf32>
    %423 = arith.mulf %414, %334 : vector<2x32xf32>
    %424 = arith.mulf %408, %416 : vector<2x32xf32>
    %425 = arith.addf %423, %424 : vector<2x32xf32>
    %426 = math.tanh %425 : vector<2x32xf32>
    %427 = arith.mulf %422, %426 : vector<2x32xf32>
    %cst_85 = arith.constant dense<0xFF800000> : vector<2xf32>
    %428 = vector.multi_reduction <maximumf>, %384, %cst_85 [1] : vector<2x8xf32> to vector<2xf32>
    %429 = vector.shape_cast %428 : vector<2xf32> to vector<2x1xf32>
    %430 = vector.broadcast %429 : vector<2x1xf32> to vector<2x8xf32>
    %431 = arith.cmpf oeq, %384, %430 : vector<2x8xf32>
    %c8_i32 = arith.constant 8 : i32
    %432 = vector.broadcast %c8_i32 : i32 to vector<2x8xi32>
    %433 = arith.select %431, %358, %432 : vector<2x8xi1>, vector<2x8xi32>
    %cst_86 = arith.constant dense<2147483647> : vector<2xi32>
    %434 = vector.multi_reduction <minsi>, %433, %cst_86 [1] : vector<2x8xi32> to vector<2xi32>
    %435 = vector.shape_cast %434 : vector<2xi32> to vector<2x1xi32>
    %436 = vector.broadcast %435 : vector<2x1xi32> to vector<2x8xi32>
    %437 = arith.cmpi eq, %358, %436 : vector<2x8xi32>
    %438 = arith.extui %437 : vector<2x8xi1> to vector<2x8xi32>
    %439 = arith.sitofp %438 : vector<2x8xi32> to vector<2x8xf32>
    %440 = vector.shape_cast %439 : vector<2x8xf32> to vector<2x8x1xf32>
    %441 = vector.broadcast %440 : vector<2x8x1xf32> to vector<2x8x128xf32>
    %442 = arith.mulf %26, %441 : vector<2x8x128xf32>
    %cst_87 = arith.constant dense<0.000000e+00> : vector<2x128xf32>
    %443 = vector.multi_reduction <add>, %442, %cst_87 [1] : vector<2x8x128xf32> to vector<2x128xf32>
    %cst_88 = arith.constant dense<0.000000e+00> : vector<2x32xf32>
    %444 = tpu.matmul %427, %345, %cst_88 {dimension_numbers = #tpu.dot_dimension_numbers<[1], [0], [0], [1], [0, 0, 1, 1], [], []>} : vector<2x32xf32>, vector<32x32xf32>, vector<2x32xf32> -> vector<2x32xf32>
    %445 = vector.broadcast %346 : vector<1x32xf32> to vector<2x32xf32>
    %446 = arith.addf %444, %445 : vector<2x32xf32>
    %447 = vector.shape_cast %446 : vector<2x32xf32> to vector<2x1x32xf32>
    %448 = vector.broadcast %447 : vector<2x1x32xf32> to vector<2x8x32xf32>
    %449 = arith.addf %448, %357 : vector<2x8x32xf32>
    %450 = math.tanh %449 : vector<2x8x32xf32>
    %451 = vector.shape_cast %349 : vector<1x32xf32> to vector<1x1x32xf32>
    %452 = vector.broadcast %451 : vector<1x1x32xf32> to vector<2x8x32xf32>
    %453 = arith.mulf %450, %452 : vector<2x8x32xf32>
    %cst_89 = arith.constant dense<0.000000e+00> : vector<2x8xf32>
    %454 = vector.multi_reduction <add>, %453, %cst_89 [2] : vector<2x8x32xf32> to vector<2x8xf32>
    %455 = vector.broadcast %350 : vector<1x1xf32> to vector<2x8xf32>
    %456 = arith.addf %454, %455 : vector<2x8xf32>
    %cst_90 = arith.constant dense<0xFF800000> : vector<2xf32>
    %457 = vector.multi_reduction <maximumf>, %456, %cst_90 [1] : vector<2x8xf32> to vector<2xf32>
    %458 = vector.shape_cast %457 : vector<2xf32> to vector<2x1xf32>
    %459 = vector.broadcast %458 : vector<2x1xf32> to vector<2x8xf32>
    %460 = arith.subf %456, %459 : vector<2x8xf32>
    %461 = math.exp %460 : vector<2x8xf32>
    %cst_91 = arith.constant dense<0.000000e+00> : vector<2xf32>
    %462 = vector.multi_reduction <add>, %461, %cst_91 [1] : vector<2x8xf32> to vector<2xf32>
    %463 = vector.shape_cast %462 : vector<2xf32> to vector<2x1xf32>
    %464 = tpu.reciprocal %463 {approx = true} : vector<2x1xf32> -> vector<2x1xf32>
    %465 = vector.broadcast %464 : vector<2x1xf32> to vector<2x8xf32>
    %466 = arith.mulf %461, %465 : vector<2x8xf32>
    %c1_i32_92 = arith.constant 1 : i32
    %467 = vector.broadcast %c1_i32_92 : i32 to vector<2x8x8xi32>
    %468 = arith.cmpi eq, %359, %467 : vector<2x8x8xi32>
    %469 = vector.shape_cast %466 : vector<2x8xf32> to vector<2x1x8xf32>
    %cst_93 = arith.constant 0.000000e+00 : f32
    %470 = vector.shape_cast %469 : vector<2x1x8xf32> to vector<2x1x8xf32>
    %471 = vector.broadcast %470 : vector<2x1x8xf32> to vector<2x8x8xf32>
    %472 = vector.broadcast %cst_93 : f32 to vector<2x8x8xf32>
    %473 = arith.select %468, %471, %472 : vector<2x8x8xi1>, vector<2x8x8xf32>
    %474 = arith.addf %392, %473 : vector<2x8x8xf32>
    %475 = vector.shape_cast %466 : vector<2x8xf32> to vector<2x8x1xf32>
    %476 = vector.broadcast %475 : vector<2x8x1xf32> to vector<2x8x32xf32>
    %477 = arith.mulf %344, %476 : vector<2x8x32xf32>
    %cst_94 = arith.constant dense<0.000000e+00> : vector<2x32xf32>
    %478 = vector.multi_reduction <add>, %477, %cst_94 [1] : vector<2x8x32xf32> to vector<2x32xf32>
    %cst_95 = arith.constant dense<0.000000e+00> : vector<2x128xf32>
    %479 = tpu.matmul %478, %351, %cst_95 {dimension_numbers = #tpu.dot_dimension_numbers<[1], [0], [0], [1], [0, 0, 1, 1], [], []>} : vector<2x32xf32>, vector<32x128xf32>, vector<2x128xf32> -> vector<2x128xf32>
    %480 = arith.addf %479, %443 : vector<2x128xf32>
    %cst_96 = arith.constant dense<0.000000e+00> : vector<2x128xf32>
    %481 = tpu.matmul %427, %352, %cst_96 {dimension_numbers = #tpu.dot_dimension_numbers<[1], [0], [0], [1], [0, 0, 1, 1], [], []>} : vector<2x32xf32>, vector<32x128xf32>, vector<2x128xf32> -> vector<2x128xf32>
    %482 = arith.addf %480, %481 : vector<2x128xf32>
    %483 = vector.broadcast %353 : vector<1x128xf32> to vector<2x128xf32>
    %484 = arith.addf %482, %483 : vector<2x128xf32>
    %485 = vector.extract_strided_slice %484 {offsets = [0, 0], sizes = [2, 32], strides = [1, 1]} : vector<2x128xf32> to vector<2x32xf32>
    %486 = arith.negf %485 : vector<2x32xf32>
    %487 = math.exp %486 : vector<2x32xf32>
    %cst_97 = arith.constant 1.000000e+00 : f32
    %488 = vector.broadcast %cst_97 : f32 to vector<2x32xf32>
    %489 = arith.addf %488, %487 : vector<2x32xf32>
    %490 = arith.divf %488, %489 : vector<2x32xf32>
    %491 = vector.extract_strided_slice %484 {offsets = [0, 32], sizes = [2, 32], strides = [1, 1]} : vector<2x128xf32> to vector<2x32xf32>
    %492 = arith.negf %491 : vector<2x32xf32>
    %493 = math.exp %492 : vector<2x32xf32>
    %cst_98 = arith.constant 1.000000e+00 : f32
    %494 = vector.broadcast %cst_98 : f32 to vector<2x32xf32>
    %495 = arith.addf %494, %493 : vector<2x32xf32>
    %496 = arith.divf %494, %495 : vector<2x32xf32>
    %497 = vector.extract_strided_slice %484 {offsets = [0, 64], sizes = [2, 32], strides = [1, 1]} : vector<2x128xf32> to vector<2x32xf32>
    %498 = math.tanh %497 : vector<2x32xf32>
    %499 = vector.extract_strided_slice %484 {offsets = [0, 96], sizes = [2, 32], strides = [1, 1]} : vector<2x128xf32> to vector<2x32xf32>
    %500 = arith.negf %499 : vector<2x32xf32>
    %501 = math.exp %500 : vector<2x32xf32>
    %cst_99 = arith.constant 1.000000e+00 : f32
    %502 = vector.broadcast %cst_99 : f32 to vector<2x32xf32>
    %503 = arith.addf %502, %501 : vector<2x32xf32>
    %504 = arith.divf %502, %503 : vector<2x32xf32>
    %505 = arith.mulf %496, %425 : vector<2x32xf32>
    %506 = arith.mulf %490, %498 : vector<2x32xf32>
    %507 = arith.addf %505, %506 : vector<2x32xf32>
    %508 = math.tanh %507 : vector<2x32xf32>
    %509 = arith.mulf %504, %508 : vector<2x32xf32>
    %cst_100 = arith.constant dense<0xFF800000> : vector<2xf32>
    %510 = vector.multi_reduction <maximumf>, %466, %cst_100 [1] : vector<2x8xf32> to vector<2xf32>
    %511 = vector.shape_cast %510 : vector<2xf32> to vector<2x1xf32>
    %512 = vector.broadcast %511 : vector<2x1xf32> to vector<2x8xf32>
    %513 = arith.cmpf oeq, %466, %512 : vector<2x8xf32>
    %c8_i32_101 = arith.constant 8 : i32
    %514 = vector.broadcast %c8_i32_101 : i32 to vector<2x8xi32>
    %515 = arith.select %513, %358, %514 : vector<2x8xi1>, vector<2x8xi32>
    %cst_102 = arith.constant dense<2147483647> : vector<2xi32>
    %516 = vector.multi_reduction <minsi>, %515, %cst_102 [1] : vector<2x8xi32> to vector<2xi32>
    %517 = vector.shape_cast %516 : vector<2xi32> to vector<2x1xi32>
    %518 = vector.broadcast %517 : vector<2x1xi32> to vector<2x8xi32>
    %519 = arith.cmpi eq, %358, %518 : vector<2x8xi32>
    %520 = arith.extui %519 : vector<2x8xi1> to vector<2x8xi32>
    %521 = arith.sitofp %520 : vector<2x8xi32> to vector<2x8xf32>
    %522 = vector.shape_cast %521 : vector<2x8xf32> to vector<2x8x1xf32>
    %523 = vector.broadcast %522 : vector<2x8x1xf32> to vector<2x8x128xf32>
    %524 = arith.mulf %26, %523 : vector<2x8x128xf32>
    %cst_103 = arith.constant dense<0.000000e+00> : vector<2x128xf32>
    %525 = vector.multi_reduction <add>, %524, %cst_103 [1] : vector<2x8x128xf32> to vector<2x128xf32>
    %cst_104 = arith.constant dense<0.000000e+00> : vector<2x32xf32>
    %526 = tpu.matmul %509, %345, %cst_104 {dimension_numbers = #tpu.dot_dimension_numbers<[1], [0], [0], [1], [0, 0, 1, 1], [], []>} : vector<2x32xf32>, vector<32x32xf32>, vector<2x32xf32> -> vector<2x32xf32>
    %527 = vector.broadcast %346 : vector<1x32xf32> to vector<2x32xf32>
    %528 = arith.addf %526, %527 : vector<2x32xf32>
    %529 = vector.shape_cast %528 : vector<2x32xf32> to vector<2x1x32xf32>
    %530 = vector.broadcast %529 : vector<2x1x32xf32> to vector<2x8x32xf32>
    %531 = arith.addf %530, %357 : vector<2x8x32xf32>
    %532 = math.tanh %531 : vector<2x8x32xf32>
    %533 = vector.shape_cast %349 : vector<1x32xf32> to vector<1x1x32xf32>
    %534 = vector.broadcast %533 : vector<1x1x32xf32> to vector<2x8x32xf32>
    %535 = arith.mulf %532, %534 : vector<2x8x32xf32>
    %cst_105 = arith.constant dense<0.000000e+00> : vector<2x8xf32>
    %536 = vector.multi_reduction <add>, %535, %cst_105 [2] : vector<2x8x32xf32> to vector<2x8xf32>
    %537 = vector.broadcast %350 : vector<1x1xf32> to vector<2x8xf32>
    %538 = arith.addf %536, %537 : vector<2x8xf32>
    %cst_106 = arith.constant dense<0xFF800000> : vector<2xf32>
    %539 = vector.multi_reduction <maximumf>, %538, %cst_106 [1] : vector<2x8xf32> to vector<2xf32>
    %540 = vector.shape_cast %539 : vector<2xf32> to vector<2x1xf32>
    %541 = vector.broadcast %540 : vector<2x1xf32> to vector<2x8xf32>
    %542 = arith.subf %538, %541 : vector<2x8xf32>
    %543 = math.exp %542 : vector<2x8xf32>
    %cst_107 = arith.constant dense<0.000000e+00> : vector<2xf32>
    %544 = vector.multi_reduction <add>, %543, %cst_107 [1] : vector<2x8xf32> to vector<2xf32>
    %545 = vector.shape_cast %544 : vector<2xf32> to vector<2x1xf32>
    %546 = tpu.reciprocal %545 {approx = true} : vector<2x1xf32> -> vector<2x1xf32>
    %547 = vector.broadcast %546 : vector<2x1xf32> to vector<2x8xf32>
    %548 = arith.mulf %543, %547 : vector<2x8xf32>
    %c2_i32_108 = arith.constant 2 : i32
    %549 = vector.broadcast %c2_i32_108 : i32 to vector<2x8x8xi32>
    %550 = arith.cmpi eq, %359, %549 : vector<2x8x8xi32>
    %551 = vector.shape_cast %548 : vector<2x8xf32> to vector<2x1x8xf32>
    %cst_109 = arith.constant 0.000000e+00 : f32
    %552 = vector.shape_cast %551 : vector<2x1x8xf32> to vector<2x1x8xf32>
    %553 = vector.broadcast %552 : vector<2x1x8xf32> to vector<2x8x8xf32>
    %554 = vector.broadcast %cst_109 : f32 to vector<2x8x8xf32>
    %555 = arith.select %550, %553, %554 : vector<2x8x8xi1>, vector<2x8x8xf32>
    %556 = arith.addf %474, %555 : vector<2x8x8xf32>
    %557 = vector.shape_cast %548 : vector<2x8xf32> to vector<2x8x1xf32>
    %558 = vector.broadcast %557 : vector<2x8x1xf32> to vector<2x8x32xf32>
    %559 = arith.mulf %344, %558 : vector<2x8x32xf32>
    %cst_110 = arith.constant dense<0.000000e+00> : vector<2x32xf32>
    %560 = vector.multi_reduction <add>, %559, %cst_110 [1] : vector<2x8x32xf32> to vector<2x32xf32>
    %cst_111 = arith.constant dense<0.000000e+00> : vector<2x128xf32>
    %561 = tpu.matmul %560, %351, %cst_111 {dimension_numbers = #tpu.dot_dimension_numbers<[1], [0], [0], [1], [0, 0, 1, 1], [], []>} : vector<2x32xf32>, vector<32x128xf32>, vector<2x128xf32> -> vector<2x128xf32>
    %562 = arith.addf %561, %525 : vector<2x128xf32>
    %cst_112 = arith.constant dense<0.000000e+00> : vector<2x128xf32>
    %563 = tpu.matmul %509, %352, %cst_112 {dimension_numbers = #tpu.dot_dimension_numbers<[1], [0], [0], [1], [0, 0, 1, 1], [], []>} : vector<2x32xf32>, vector<32x128xf32>, vector<2x128xf32> -> vector<2x128xf32>
    %564 = arith.addf %562, %563 : vector<2x128xf32>
    %565 = vector.broadcast %353 : vector<1x128xf32> to vector<2x128xf32>
    %566 = arith.addf %564, %565 : vector<2x128xf32>
    %567 = vector.extract_strided_slice %566 {offsets = [0, 0], sizes = [2, 32], strides = [1, 1]} : vector<2x128xf32> to vector<2x32xf32>
    %568 = arith.negf %567 : vector<2x32xf32>
    %569 = math.exp %568 : vector<2x32xf32>
    %cst_113 = arith.constant 1.000000e+00 : f32
    %570 = vector.broadcast %cst_113 : f32 to vector<2x32xf32>
    %571 = arith.addf %570, %569 : vector<2x32xf32>
    %572 = arith.divf %570, %571 : vector<2x32xf32>
    %573 = vector.extract_strided_slice %566 {offsets = [0, 32], sizes = [2, 32], strides = [1, 1]} : vector<2x128xf32> to vector<2x32xf32>
    %574 = arith.negf %573 : vector<2x32xf32>
    %575 = math.exp %574 : vector<2x32xf32>
    %cst_114 = arith.constant 1.000000e+00 : f32
    %576 = vector.broadcast %cst_114 : f32 to vector<2x32xf32>
    %577 = arith.addf %576, %575 : vector<2x32xf32>
    %578 = arith.divf %576, %577 : vector<2x32xf32>
    %579 = vector.extract_strided_slice %566 {offsets = [0, 64], sizes = [2, 32], strides = [1, 1]} : vector<2x128xf32> to vector<2x32xf32>
    %580 = math.tanh %579 : vector<2x32xf32>
    %581 = vector.extract_strided_slice %566 {offsets = [0, 96], sizes = [2, 32], strides = [1, 1]} : vector<2x128xf32> to vector<2x32xf32>
    %582 = arith.negf %581 : vector<2x32xf32>
    %583 = math.exp %582 : vector<2x32xf32>
    %cst_115 = arith.constant 1.000000e+00 : f32
    %584 = vector.broadcast %cst_115 : f32 to vector<2x32xf32>
    %585 = arith.addf %584, %583 : vector<2x32xf32>
    %586 = arith.divf %584, %585 : vector<2x32xf32>
    %587 = arith.mulf %578, %507 : vector<2x32xf32>
    %588 = arith.mulf %572, %580 : vector<2x32xf32>
    %589 = arith.addf %587, %588 : vector<2x32xf32>
    %590 = math.tanh %589 : vector<2x32xf32>
    %591 = arith.mulf %586, %590 : vector<2x32xf32>
    %cst_116 = arith.constant dense<0xFF800000> : vector<2xf32>
    %592 = vector.multi_reduction <maximumf>, %548, %cst_116 [1] : vector<2x8xf32> to vector<2xf32>
    %593 = vector.shape_cast %592 : vector<2xf32> to vector<2x1xf32>
    %594 = vector.broadcast %593 : vector<2x1xf32> to vector<2x8xf32>
    %595 = arith.cmpf oeq, %548, %594 : vector<2x8xf32>
    %c8_i32_117 = arith.constant 8 : i32
    %596 = vector.broadcast %c8_i32_117 : i32 to vector<2x8xi32>
    %597 = arith.select %595, %358, %596 : vector<2x8xi1>, vector<2x8xi32>
    %cst_118 = arith.constant dense<2147483647> : vector<2xi32>
    %598 = vector.multi_reduction <minsi>, %597, %cst_118 [1] : vector<2x8xi32> to vector<2xi32>
    %599 = vector.shape_cast %598 : vector<2xi32> to vector<2x1xi32>
    %600 = vector.broadcast %599 : vector<2x1xi32> to vector<2x8xi32>
    %601 = arith.cmpi eq, %358, %600 : vector<2x8xi32>
    %602 = arith.extui %601 : vector<2x8xi1> to vector<2x8xi32>
    %603 = arith.sitofp %602 : vector<2x8xi32> to vector<2x8xf32>
    %604 = vector.shape_cast %603 : vector<2x8xf32> to vector<2x8x1xf32>
    %605 = vector.broadcast %604 : vector<2x8x1xf32> to vector<2x8x128xf32>
    %606 = arith.mulf %26, %605 : vector<2x8x128xf32>
    %cst_119 = arith.constant dense<0.000000e+00> : vector<2x128xf32>
    %607 = vector.multi_reduction <add>, %606, %cst_119 [1] : vector<2x8x128xf32> to vector<2x128xf32>
    %cst_120 = arith.constant dense<0.000000e+00> : vector<2x32xf32>
    %608 = tpu.matmul %591, %345, %cst_120 {dimension_numbers = #tpu.dot_dimension_numbers<[1], [0], [0], [1], [0, 0, 1, 1], [], []>} : vector<2x32xf32>, vector<32x32xf32>, vector<2x32xf32> -> vector<2x32xf32>
    %609 = vector.broadcast %346 : vector<1x32xf32> to vector<2x32xf32>
    %610 = arith.addf %608, %609 : vector<2x32xf32>
    %611 = vector.shape_cast %610 : vector<2x32xf32> to vector<2x1x32xf32>
    %612 = vector.broadcast %611 : vector<2x1x32xf32> to vector<2x8x32xf32>
    %613 = arith.addf %612, %357 : vector<2x8x32xf32>
    %614 = math.tanh %613 : vector<2x8x32xf32>
    %615 = vector.shape_cast %349 : vector<1x32xf32> to vector<1x1x32xf32>
    %616 = vector.broadcast %615 : vector<1x1x32xf32> to vector<2x8x32xf32>
    %617 = arith.mulf %614, %616 : vector<2x8x32xf32>
    %cst_121 = arith.constant dense<0.000000e+00> : vector<2x8xf32>
    %618 = vector.multi_reduction <add>, %617, %cst_121 [2] : vector<2x8x32xf32> to vector<2x8xf32>
    %619 = vector.broadcast %350 : vector<1x1xf32> to vector<2x8xf32>
    %620 = arith.addf %618, %619 : vector<2x8xf32>
    %cst_122 = arith.constant dense<0xFF800000> : vector<2xf32>
    %621 = vector.multi_reduction <maximumf>, %620, %cst_122 [1] : vector<2x8xf32> to vector<2xf32>
    %622 = vector.shape_cast %621 : vector<2xf32> to vector<2x1xf32>
    %623 = vector.broadcast %622 : vector<2x1xf32> to vector<2x8xf32>
    %624 = arith.subf %620, %623 : vector<2x8xf32>
    %625 = math.exp %624 : vector<2x8xf32>
    %cst_123 = arith.constant dense<0.000000e+00> : vector<2xf32>
    %626 = vector.multi_reduction <add>, %625, %cst_123 [1] : vector<2x8xf32> to vector<2xf32>
    %627 = vector.shape_cast %626 : vector<2xf32> to vector<2x1xf32>
    %628 = tpu.reciprocal %627 {approx = true} : vector<2x1xf32> -> vector<2x1xf32>
    %629 = vector.broadcast %628 : vector<2x1xf32> to vector<2x8xf32>
    %630 = arith.mulf %625, %629 : vector<2x8xf32>
    %c3_i32_124 = arith.constant 3 : i32
    %631 = vector.broadcast %c3_i32_124 : i32 to vector<2x8x8xi32>
    %632 = arith.cmpi eq, %359, %631 : vector<2x8x8xi32>
    %633 = vector.shape_cast %630 : vector<2x8xf32> to vector<2x1x8xf32>
    %cst_125 = arith.constant 0.000000e+00 : f32
    %634 = vector.shape_cast %633 : vector<2x1x8xf32> to vector<2x1x8xf32>
    %635 = vector.broadcast %634 : vector<2x1x8xf32> to vector<2x8x8xf32>
    %636 = vector.broadcast %cst_125 : f32 to vector<2x8x8xf32>
    %637 = arith.select %632, %635, %636 : vector<2x8x8xi1>, vector<2x8x8xf32>
    %638 = arith.addf %556, %637 : vector<2x8x8xf32>
    %639 = vector.shape_cast %630 : vector<2x8xf32> to vector<2x8x1xf32>
    %640 = vector.broadcast %639 : vector<2x8x1xf32> to vector<2x8x32xf32>
    %641 = arith.mulf %344, %640 : vector<2x8x32xf32>
    %cst_126 = arith.constant dense<0.000000e+00> : vector<2x32xf32>
    %642 = vector.multi_reduction <add>, %641, %cst_126 [1] : vector<2x8x32xf32> to vector<2x32xf32>
    %cst_127 = arith.constant dense<0.000000e+00> : vector<2x128xf32>
    %643 = tpu.matmul %642, %351, %cst_127 {dimension_numbers = #tpu.dot_dimension_numbers<[1], [0], [0], [1], [0, 0, 1, 1], [], []>} : vector<2x32xf32>, vector<32x128xf32>, vector<2x128xf32> -> vector<2x128xf32>
    %644 = arith.addf %643, %607 : vector<2x128xf32>
    %cst_128 = arith.constant dense<0.000000e+00> : vector<2x128xf32>
    %645 = tpu.matmul %591, %352, %cst_128 {dimension_numbers = #tpu.dot_dimension_numbers<[1], [0], [0], [1], [0, 0, 1, 1], [], []>} : vector<2x32xf32>, vector<32x128xf32>, vector<2x128xf32> -> vector<2x128xf32>
    %646 = arith.addf %644, %645 : vector<2x128xf32>
    %647 = vector.broadcast %353 : vector<1x128xf32> to vector<2x128xf32>
    %648 = arith.addf %646, %647 : vector<2x128xf32>
    %649 = vector.extract_strided_slice %648 {offsets = [0, 0], sizes = [2, 32], strides = [1, 1]} : vector<2x128xf32> to vector<2x32xf32>
    %650 = arith.negf %649 : vector<2x32xf32>
    %651 = math.exp %650 : vector<2x32xf32>
    %cst_129 = arith.constant 1.000000e+00 : f32
    %652 = vector.broadcast %cst_129 : f32 to vector<2x32xf32>
    %653 = arith.addf %652, %651 : vector<2x32xf32>
    %654 = arith.divf %652, %653 : vector<2x32xf32>
    %655 = vector.extract_strided_slice %648 {offsets = [0, 32], sizes = [2, 32], strides = [1, 1]} : vector<2x128xf32> to vector<2x32xf32>
    %656 = arith.negf %655 : vector<2x32xf32>
    %657 = math.exp %656 : vector<2x32xf32>
    %cst_130 = arith.constant 1.000000e+00 : f32
    %658 = vector.broadcast %cst_130 : f32 to vector<2x32xf32>
    %659 = arith.addf %658, %657 : vector<2x32xf32>
    %660 = arith.divf %658, %659 : vector<2x32xf32>
    %661 = vector.extract_strided_slice %648 {offsets = [0, 64], sizes = [2, 32], strides = [1, 1]} : vector<2x128xf32> to vector<2x32xf32>
    %662 = math.tanh %661 : vector<2x32xf32>
    %663 = vector.extract_strided_slice %648 {offsets = [0, 96], sizes = [2, 32], strides = [1, 1]} : vector<2x128xf32> to vector<2x32xf32>
    %664 = arith.negf %663 : vector<2x32xf32>
    %665 = math.exp %664 : vector<2x32xf32>
    %cst_131 = arith.constant 1.000000e+00 : f32
    %666 = vector.broadcast %cst_131 : f32 to vector<2x32xf32>
    %667 = arith.addf %666, %665 : vector<2x32xf32>
    %668 = arith.divf %666, %667 : vector<2x32xf32>
    %669 = arith.mulf %660, %589 : vector<2x32xf32>
    %670 = arith.mulf %654, %662 : vector<2x32xf32>
    %671 = arith.addf %669, %670 : vector<2x32xf32>
    %672 = math.tanh %671 : vector<2x32xf32>
    %673 = arith.mulf %668, %672 : vector<2x32xf32>
    %cst_132 = arith.constant dense<0xFF800000> : vector<2xf32>
    %674 = vector.multi_reduction <maximumf>, %630, %cst_132 [1] : vector<2x8xf32> to vector<2xf32>
    %675 = vector.shape_cast %674 : vector<2xf32> to vector<2x1xf32>
    %676 = vector.broadcast %675 : vector<2x1xf32> to vector<2x8xf32>
    %677 = arith.cmpf oeq, %630, %676 : vector<2x8xf32>
    %c8_i32_133 = arith.constant 8 : i32
    %678 = vector.broadcast %c8_i32_133 : i32 to vector<2x8xi32>
    %679 = arith.select %677, %358, %678 : vector<2x8xi1>, vector<2x8xi32>
    %cst_134 = arith.constant dense<2147483647> : vector<2xi32>
    %680 = vector.multi_reduction <minsi>, %679, %cst_134 [1] : vector<2x8xi32> to vector<2xi32>
    %681 = vector.shape_cast %680 : vector<2xi32> to vector<2x1xi32>
    %682 = vector.broadcast %681 : vector<2x1xi32> to vector<2x8xi32>
    %683 = arith.cmpi eq, %358, %682 : vector<2x8xi32>
    %684 = arith.extui %683 : vector<2x8xi1> to vector<2x8xi32>
    %685 = arith.sitofp %684 : vector<2x8xi32> to vector<2x8xf32>
    %686 = vector.shape_cast %685 : vector<2x8xf32> to vector<2x8x1xf32>
    %687 = vector.broadcast %686 : vector<2x8x1xf32> to vector<2x8x128xf32>
    %688 = arith.mulf %26, %687 : vector<2x8x128xf32>
    %cst_135 = arith.constant dense<0.000000e+00> : vector<2x128xf32>
    %689 = vector.multi_reduction <add>, %688, %cst_135 [1] : vector<2x8x128xf32> to vector<2x128xf32>
    %cst_136 = arith.constant dense<0.000000e+00> : vector<2x32xf32>
    %690 = tpu.matmul %673, %345, %cst_136 {dimension_numbers = #tpu.dot_dimension_numbers<[1], [0], [0], [1], [0, 0, 1, 1], [], []>} : vector<2x32xf32>, vector<32x32xf32>, vector<2x32xf32> -> vector<2x32xf32>
    %691 = vector.broadcast %346 : vector<1x32xf32> to vector<2x32xf32>
    %692 = arith.addf %690, %691 : vector<2x32xf32>
    %693 = vector.shape_cast %692 : vector<2x32xf32> to vector<2x1x32xf32>
    %694 = vector.broadcast %693 : vector<2x1x32xf32> to vector<2x8x32xf32>
    %695 = arith.addf %694, %357 : vector<2x8x32xf32>
    %696 = math.tanh %695 : vector<2x8x32xf32>
    %697 = vector.shape_cast %349 : vector<1x32xf32> to vector<1x1x32xf32>
    %698 = vector.broadcast %697 : vector<1x1x32xf32> to vector<2x8x32xf32>
    %699 = arith.mulf %696, %698 : vector<2x8x32xf32>
    %cst_137 = arith.constant dense<0.000000e+00> : vector<2x8xf32>
    %700 = vector.multi_reduction <add>, %699, %cst_137 [2] : vector<2x8x32xf32> to vector<2x8xf32>
    %701 = vector.broadcast %350 : vector<1x1xf32> to vector<2x8xf32>
    %702 = arith.addf %700, %701 : vector<2x8xf32>
    %cst_138 = arith.constant dense<0xFF800000> : vector<2xf32>
    %703 = vector.multi_reduction <maximumf>, %702, %cst_138 [1] : vector<2x8xf32> to vector<2xf32>
    %704 = vector.shape_cast %703 : vector<2xf32> to vector<2x1xf32>
    %705 = vector.broadcast %704 : vector<2x1xf32> to vector<2x8xf32>
    %706 = arith.subf %702, %705 : vector<2x8xf32>
    %707 = math.exp %706 : vector<2x8xf32>
    %cst_139 = arith.constant dense<0.000000e+00> : vector<2xf32>
    %708 = vector.multi_reduction <add>, %707, %cst_139 [1] : vector<2x8xf32> to vector<2xf32>
    %709 = vector.shape_cast %708 : vector<2xf32> to vector<2x1xf32>
    %710 = tpu.reciprocal %709 {approx = true} : vector<2x1xf32> -> vector<2x1xf32>
    %711 = vector.broadcast %710 : vector<2x1xf32> to vector<2x8xf32>
    %712 = arith.mulf %707, %711 : vector<2x8xf32>
    %c4_i32_140 = arith.constant 4 : i32
    %713 = vector.broadcast %c4_i32_140 : i32 to vector<2x8x8xi32>
    %714 = arith.cmpi eq, %359, %713 : vector<2x8x8xi32>
    %715 = vector.shape_cast %712 : vector<2x8xf32> to vector<2x1x8xf32>
    %cst_141 = arith.constant 0.000000e+00 : f32
    %716 = vector.shape_cast %715 : vector<2x1x8xf32> to vector<2x1x8xf32>
    %717 = vector.broadcast %716 : vector<2x1x8xf32> to vector<2x8x8xf32>
    %718 = vector.broadcast %cst_141 : f32 to vector<2x8x8xf32>
    %719 = arith.select %714, %717, %718 : vector<2x8x8xi1>, vector<2x8x8xf32>
    %720 = arith.addf %638, %719 : vector<2x8x8xf32>
    %721 = vector.shape_cast %712 : vector<2x8xf32> to vector<2x8x1xf32>
    %722 = vector.broadcast %721 : vector<2x8x1xf32> to vector<2x8x32xf32>
    %723 = arith.mulf %344, %722 : vector<2x8x32xf32>
    %cst_142 = arith.constant dense<0.000000e+00> : vector<2x32xf32>
    %724 = vector.multi_reduction <add>, %723, %cst_142 [1] : vector<2x8x32xf32> to vector<2x32xf32>
    %cst_143 = arith.constant dense<0.000000e+00> : vector<2x128xf32>
    %725 = tpu.matmul %724, %351, %cst_143 {dimension_numbers = #tpu.dot_dimension_numbers<[1], [0], [0], [1], [0, 0, 1, 1], [], []>} : vector<2x32xf32>, vector<32x128xf32>, vector<2x128xf32> -> vector<2x128xf32>
    %726 = arith.addf %725, %689 : vector<2x128xf32>
    %cst_144 = arith.constant dense<0.000000e+00> : vector<2x128xf32>
    %727 = tpu.matmul %673, %352, %cst_144 {dimension_numbers = #tpu.dot_dimension_numbers<[1], [0], [0], [1], [0, 0, 1, 1], [], []>} : vector<2x32xf32>, vector<32x128xf32>, vector<2x128xf32> -> vector<2x128xf32>
    %728 = arith.addf %726, %727 : vector<2x128xf32>
    %729 = vector.broadcast %353 : vector<1x128xf32> to vector<2x128xf32>
    %730 = arith.addf %728, %729 : vector<2x128xf32>
    %731 = vector.extract_strided_slice %730 {offsets = [0, 0], sizes = [2, 32], strides = [1, 1]} : vector<2x128xf32> to vector<2x32xf32>
    %732 = arith.negf %731 : vector<2x32xf32>
    %733 = math.exp %732 : vector<2x32xf32>
    %cst_145 = arith.constant 1.000000e+00 : f32
    %734 = vector.broadcast %cst_145 : f32 to vector<2x32xf32>
    %735 = arith.addf %734, %733 : vector<2x32xf32>
    %736 = arith.divf %734, %735 : vector<2x32xf32>
    %737 = vector.extract_strided_slice %730 {offsets = [0, 32], sizes = [2, 32], strides = [1, 1]} : vector<2x128xf32> to vector<2x32xf32>
    %738 = arith.negf %737 : vector<2x32xf32>
    %739 = math.exp %738 : vector<2x32xf32>
    %cst_146 = arith.constant 1.000000e+00 : f32
    %740 = vector.broadcast %cst_146 : f32 to vector<2x32xf32>
    %741 = arith.addf %740, %739 : vector<2x32xf32>
    %742 = arith.divf %740, %741 : vector<2x32xf32>
    %743 = vector.extract_strided_slice %730 {offsets = [0, 64], sizes = [2, 32], strides = [1, 1]} : vector<2x128xf32> to vector<2x32xf32>
    %744 = math.tanh %743 : vector<2x32xf32>
    %745 = vector.extract_strided_slice %730 {offsets = [0, 96], sizes = [2, 32], strides = [1, 1]} : vector<2x128xf32> to vector<2x32xf32>
    %746 = arith.negf %745 : vector<2x32xf32>
    %747 = math.exp %746 : vector<2x32xf32>
    %cst_147 = arith.constant 1.000000e+00 : f32
    %748 = vector.broadcast %cst_147 : f32 to vector<2x32xf32>
    %749 = arith.addf %748, %747 : vector<2x32xf32>
    %750 = arith.divf %748, %749 : vector<2x32xf32>
    %751 = arith.mulf %742, %671 : vector<2x32xf32>
    %752 = arith.mulf %736, %744 : vector<2x32xf32>
    %753 = arith.addf %751, %752 : vector<2x32xf32>
    %754 = math.tanh %753 : vector<2x32xf32>
    %755 = arith.mulf %750, %754 : vector<2x32xf32>
    %cst_148 = arith.constant dense<0xFF800000> : vector<2xf32>
    %756 = vector.multi_reduction <maximumf>, %712, %cst_148 [1] : vector<2x8xf32> to vector<2xf32>
    %757 = vector.shape_cast %756 : vector<2xf32> to vector<2x1xf32>
    %758 = vector.broadcast %757 : vector<2x1xf32> to vector<2x8xf32>
    %759 = arith.cmpf oeq, %712, %758 : vector<2x8xf32>
    %c8_i32_149 = arith.constant 8 : i32
    %760 = vector.broadcast %c8_i32_149 : i32 to vector<2x8xi32>
    %761 = arith.select %759, %358, %760 : vector<2x8xi1>, vector<2x8xi32>
    %cst_150 = arith.constant dense<2147483647> : vector<2xi32>
    %762 = vector.multi_reduction <minsi>, %761, %cst_150 [1] : vector<2x8xi32> to vector<2xi32>
    %763 = vector.shape_cast %762 : vector<2xi32> to vector<2x1xi32>
    %764 = vector.broadcast %763 : vector<2x1xi32> to vector<2x8xi32>
    %765 = arith.cmpi eq, %358, %764 : vector<2x8xi32>
    %766 = arith.extui %765 : vector<2x8xi1> to vector<2x8xi32>
    %767 = arith.sitofp %766 : vector<2x8xi32> to vector<2x8xf32>
    %768 = vector.shape_cast %767 : vector<2x8xf32> to vector<2x8x1xf32>
    %769 = vector.broadcast %768 : vector<2x8x1xf32> to vector<2x8x128xf32>
    %770 = arith.mulf %26, %769 : vector<2x8x128xf32>
    %cst_151 = arith.constant dense<0.000000e+00> : vector<2x128xf32>
    %771 = vector.multi_reduction <add>, %770, %cst_151 [1] : vector<2x8x128xf32> to vector<2x128xf32>
    %cst_152 = arith.constant dense<0.000000e+00> : vector<2x32xf32>
    %772 = tpu.matmul %755, %345, %cst_152 {dimension_numbers = #tpu.dot_dimension_numbers<[1], [0], [0], [1], [0, 0, 1, 1], [], []>} : vector<2x32xf32>, vector<32x32xf32>, vector<2x32xf32> -> vector<2x32xf32>
    %773 = vector.broadcast %346 : vector<1x32xf32> to vector<2x32xf32>
    %774 = arith.addf %772, %773 : vector<2x32xf32>
    %775 = vector.shape_cast %774 : vector<2x32xf32> to vector<2x1x32xf32>
    %776 = vector.broadcast %775 : vector<2x1x32xf32> to vector<2x8x32xf32>
    %777 = arith.addf %776, %357 : vector<2x8x32xf32>
    %778 = math.tanh %777 : vector<2x8x32xf32>
    %779 = vector.shape_cast %349 : vector<1x32xf32> to vector<1x1x32xf32>
    %780 = vector.broadcast %779 : vector<1x1x32xf32> to vector<2x8x32xf32>
    %781 = arith.mulf %778, %780 : vector<2x8x32xf32>
    %cst_153 = arith.constant dense<0.000000e+00> : vector<2x8xf32>
    %782 = vector.multi_reduction <add>, %781, %cst_153 [2] : vector<2x8x32xf32> to vector<2x8xf32>
    %783 = vector.broadcast %350 : vector<1x1xf32> to vector<2x8xf32>
    %784 = arith.addf %782, %783 : vector<2x8xf32>
    %cst_154 = arith.constant dense<0xFF800000> : vector<2xf32>
    %785 = vector.multi_reduction <maximumf>, %784, %cst_154 [1] : vector<2x8xf32> to vector<2xf32>
    %786 = vector.shape_cast %785 : vector<2xf32> to vector<2x1xf32>
    %787 = vector.broadcast %786 : vector<2x1xf32> to vector<2x8xf32>
    %788 = arith.subf %784, %787 : vector<2x8xf32>
    %789 = math.exp %788 : vector<2x8xf32>
    %cst_155 = arith.constant dense<0.000000e+00> : vector<2xf32>
    %790 = vector.multi_reduction <add>, %789, %cst_155 [1] : vector<2x8xf32> to vector<2xf32>
    %791 = vector.shape_cast %790 : vector<2xf32> to vector<2x1xf32>
    %792 = tpu.reciprocal %791 {approx = true} : vector<2x1xf32> -> vector<2x1xf32>
    %793 = vector.broadcast %792 : vector<2x1xf32> to vector<2x8xf32>
    %794 = arith.mulf %789, %793 : vector<2x8xf32>
    %c5_i32_156 = arith.constant 5 : i32
    %795 = vector.broadcast %c5_i32_156 : i32 to vector<2x8x8xi32>
    %796 = arith.cmpi eq, %359, %795 : vector<2x8x8xi32>
    %797 = vector.shape_cast %794 : vector<2x8xf32> to vector<2x1x8xf32>
    %cst_157 = arith.constant 0.000000e+00 : f32
    %798 = vector.shape_cast %797 : vector<2x1x8xf32> to vector<2x1x8xf32>
    %799 = vector.broadcast %798 : vector<2x1x8xf32> to vector<2x8x8xf32>
    %800 = vector.broadcast %cst_157 : f32 to vector<2x8x8xf32>
    %801 = arith.select %796, %799, %800 : vector<2x8x8xi1>, vector<2x8x8xf32>
    %802 = arith.addf %720, %801 : vector<2x8x8xf32>
    %803 = vector.shape_cast %794 : vector<2x8xf32> to vector<2x8x1xf32>
    %804 = vector.broadcast %803 : vector<2x8x1xf32> to vector<2x8x32xf32>
    %805 = arith.mulf %344, %804 : vector<2x8x32xf32>
    %cst_158 = arith.constant dense<0.000000e+00> : vector<2x32xf32>
    %806 = vector.multi_reduction <add>, %805, %cst_158 [1] : vector<2x8x32xf32> to vector<2x32xf32>
    %cst_159 = arith.constant dense<0.000000e+00> : vector<2x128xf32>
    %807 = tpu.matmul %806, %351, %cst_159 {dimension_numbers = #tpu.dot_dimension_numbers<[1], [0], [0], [1], [0, 0, 1, 1], [], []>} : vector<2x32xf32>, vector<32x128xf32>, vector<2x128xf32> -> vector<2x128xf32>
    %808 = arith.addf %807, %771 : vector<2x128xf32>
    %cst_160 = arith.constant dense<0.000000e+00> : vector<2x128xf32>
    %809 = tpu.matmul %755, %352, %cst_160 {dimension_numbers = #tpu.dot_dimension_numbers<[1], [0], [0], [1], [0, 0, 1, 1], [], []>} : vector<2x32xf32>, vector<32x128xf32>, vector<2x128xf32> -> vector<2x128xf32>
    %810 = arith.addf %808, %809 : vector<2x128xf32>
    %811 = vector.broadcast %353 : vector<1x128xf32> to vector<2x128xf32>
    %812 = arith.addf %810, %811 : vector<2x128xf32>
    %813 = vector.extract_strided_slice %812 {offsets = [0, 0], sizes = [2, 32], strides = [1, 1]} : vector<2x128xf32> to vector<2x32xf32>
    %814 = arith.negf %813 : vector<2x32xf32>
    %815 = math.exp %814 : vector<2x32xf32>
    %cst_161 = arith.constant 1.000000e+00 : f32
    %816 = vector.broadcast %cst_161 : f32 to vector<2x32xf32>
    %817 = arith.addf %816, %815 : vector<2x32xf32>
    %818 = arith.divf %816, %817 : vector<2x32xf32>
    %819 = vector.extract_strided_slice %812 {offsets = [0, 32], sizes = [2, 32], strides = [1, 1]} : vector<2x128xf32> to vector<2x32xf32>
    %820 = arith.negf %819 : vector<2x32xf32>
    %821 = math.exp %820 : vector<2x32xf32>
    %cst_162 = arith.constant 1.000000e+00 : f32
    %822 = vector.broadcast %cst_162 : f32 to vector<2x32xf32>
    %823 = arith.addf %822, %821 : vector<2x32xf32>
    %824 = arith.divf %822, %823 : vector<2x32xf32>
    %825 = vector.extract_strided_slice %812 {offsets = [0, 64], sizes = [2, 32], strides = [1, 1]} : vector<2x128xf32> to vector<2x32xf32>
    %826 = math.tanh %825 : vector<2x32xf32>
    %827 = vector.extract_strided_slice %812 {offsets = [0, 96], sizes = [2, 32], strides = [1, 1]} : vector<2x128xf32> to vector<2x32xf32>
    %828 = arith.negf %827 : vector<2x32xf32>
    %829 = math.exp %828 : vector<2x32xf32>
    %cst_163 = arith.constant 1.000000e+00 : f32
    %830 = vector.broadcast %cst_163 : f32 to vector<2x32xf32>
    %831 = arith.addf %830, %829 : vector<2x32xf32>
    %832 = arith.divf %830, %831 : vector<2x32xf32>
    %833 = arith.mulf %824, %753 : vector<2x32xf32>
    %834 = arith.mulf %818, %826 : vector<2x32xf32>
    %835 = arith.addf %833, %834 : vector<2x32xf32>
    %836 = math.tanh %835 : vector<2x32xf32>
    %837 = arith.mulf %832, %836 : vector<2x32xf32>
    %cst_164 = arith.constant dense<0xFF800000> : vector<2xf32>
    %838 = vector.multi_reduction <maximumf>, %794, %cst_164 [1] : vector<2x8xf32> to vector<2xf32>
    %839 = vector.shape_cast %838 : vector<2xf32> to vector<2x1xf32>
    %840 = vector.broadcast %839 : vector<2x1xf32> to vector<2x8xf32>
    %841 = arith.cmpf oeq, %794, %840 : vector<2x8xf32>
    %c8_i32_165 = arith.constant 8 : i32
    %842 = vector.broadcast %c8_i32_165 : i32 to vector<2x8xi32>
    %843 = arith.select %841, %358, %842 : vector<2x8xi1>, vector<2x8xi32>
    %cst_166 = arith.constant dense<2147483647> : vector<2xi32>
    %844 = vector.multi_reduction <minsi>, %843, %cst_166 [1] : vector<2x8xi32> to vector<2xi32>
    %845 = vector.shape_cast %844 : vector<2xi32> to vector<2x1xi32>
    %846 = vector.broadcast %845 : vector<2x1xi32> to vector<2x8xi32>
    %847 = arith.cmpi eq, %358, %846 : vector<2x8xi32>
    %848 = arith.extui %847 : vector<2x8xi1> to vector<2x8xi32>
    %849 = arith.sitofp %848 : vector<2x8xi32> to vector<2x8xf32>
    %850 = vector.shape_cast %849 : vector<2x8xf32> to vector<2x8x1xf32>
    %851 = vector.broadcast %850 : vector<2x8x1xf32> to vector<2x8x128xf32>
    %852 = arith.mulf %26, %851 : vector<2x8x128xf32>
    %cst_167 = arith.constant dense<0.000000e+00> : vector<2x128xf32>
    %853 = vector.multi_reduction <add>, %852, %cst_167 [1] : vector<2x8x128xf32> to vector<2x128xf32>
    %cst_168 = arith.constant dense<0.000000e+00> : vector<2x32xf32>
    %854 = tpu.matmul %837, %345, %cst_168 {dimension_numbers = #tpu.dot_dimension_numbers<[1], [0], [0], [1], [0, 0, 1, 1], [], []>} : vector<2x32xf32>, vector<32x32xf32>, vector<2x32xf32> -> vector<2x32xf32>
    %855 = vector.broadcast %346 : vector<1x32xf32> to vector<2x32xf32>
    %856 = arith.addf %854, %855 : vector<2x32xf32>
    %857 = vector.shape_cast %856 : vector<2x32xf32> to vector<2x1x32xf32>
    %858 = vector.broadcast %857 : vector<2x1x32xf32> to vector<2x8x32xf32>
    %859 = arith.addf %858, %357 : vector<2x8x32xf32>
    %860 = math.tanh %859 : vector<2x8x32xf32>
    %861 = vector.shape_cast %349 : vector<1x32xf32> to vector<1x1x32xf32>
    %862 = vector.broadcast %861 : vector<1x1x32xf32> to vector<2x8x32xf32>
    %863 = arith.mulf %860, %862 : vector<2x8x32xf32>
    %cst_169 = arith.constant dense<0.000000e+00> : vector<2x8xf32>
    %864 = vector.multi_reduction <add>, %863, %cst_169 [2] : vector<2x8x32xf32> to vector<2x8xf32>
    %865 = vector.broadcast %350 : vector<1x1xf32> to vector<2x8xf32>
    %866 = arith.addf %864, %865 : vector<2x8xf32>
    %cst_170 = arith.constant dense<0xFF800000> : vector<2xf32>
    %867 = vector.multi_reduction <maximumf>, %866, %cst_170 [1] : vector<2x8xf32> to vector<2xf32>
    %868 = vector.shape_cast %867 : vector<2xf32> to vector<2x1xf32>
    %869 = vector.broadcast %868 : vector<2x1xf32> to vector<2x8xf32>
    %870 = arith.subf %866, %869 : vector<2x8xf32>
    %871 = math.exp %870 : vector<2x8xf32>
    %cst_171 = arith.constant dense<0.000000e+00> : vector<2xf32>
    %872 = vector.multi_reduction <add>, %871, %cst_171 [1] : vector<2x8xf32> to vector<2xf32>
    %873 = vector.shape_cast %872 : vector<2xf32> to vector<2x1xf32>
    %874 = tpu.reciprocal %873 {approx = true} : vector<2x1xf32> -> vector<2x1xf32>
    %875 = vector.broadcast %874 : vector<2x1xf32> to vector<2x8xf32>
    %876 = arith.mulf %871, %875 : vector<2x8xf32>
    %c6_i32_172 = arith.constant 6 : i32
    %877 = vector.broadcast %c6_i32_172 : i32 to vector<2x8x8xi32>
    %878 = arith.cmpi eq, %359, %877 : vector<2x8x8xi32>
    %879 = vector.shape_cast %876 : vector<2x8xf32> to vector<2x1x8xf32>
    %cst_173 = arith.constant 0.000000e+00 : f32
    %880 = vector.shape_cast %879 : vector<2x1x8xf32> to vector<2x1x8xf32>
    %881 = vector.broadcast %880 : vector<2x1x8xf32> to vector<2x8x8xf32>
    %882 = vector.broadcast %cst_173 : f32 to vector<2x8x8xf32>
    %883 = arith.select %878, %881, %882 : vector<2x8x8xi1>, vector<2x8x8xf32>
    %884 = arith.addf %802, %883 : vector<2x8x8xf32>
    %885 = vector.shape_cast %876 : vector<2x8xf32> to vector<2x8x1xf32>
    %886 = vector.broadcast %885 : vector<2x8x1xf32> to vector<2x8x32xf32>
    %887 = arith.mulf %344, %886 : vector<2x8x32xf32>
    %cst_174 = arith.constant dense<0.000000e+00> : vector<2x32xf32>
    %888 = vector.multi_reduction <add>, %887, %cst_174 [1] : vector<2x8x32xf32> to vector<2x32xf32>
    %cst_175 = arith.constant dense<0.000000e+00> : vector<2x128xf32>
    %889 = tpu.matmul %888, %351, %cst_175 {dimension_numbers = #tpu.dot_dimension_numbers<[1], [0], [0], [1], [0, 0, 1, 1], [], []>} : vector<2x32xf32>, vector<32x128xf32>, vector<2x128xf32> -> vector<2x128xf32>
    %890 = arith.addf %889, %853 : vector<2x128xf32>
    %cst_176 = arith.constant dense<0.000000e+00> : vector<2x128xf32>
    %891 = tpu.matmul %837, %352, %cst_176 {dimension_numbers = #tpu.dot_dimension_numbers<[1], [0], [0], [1], [0, 0, 1, 1], [], []>} : vector<2x32xf32>, vector<32x128xf32>, vector<2x128xf32> -> vector<2x128xf32>
    %892 = arith.addf %890, %891 : vector<2x128xf32>
    %893 = vector.broadcast %353 : vector<1x128xf32> to vector<2x128xf32>
    %894 = arith.addf %892, %893 : vector<2x128xf32>
    %895 = vector.extract_strided_slice %894 {offsets = [0, 0], sizes = [2, 32], strides = [1, 1]} : vector<2x128xf32> to vector<2x32xf32>
    %896 = arith.negf %895 : vector<2x32xf32>
    %897 = math.exp %896 : vector<2x32xf32>
    %cst_177 = arith.constant 1.000000e+00 : f32
    %898 = vector.broadcast %cst_177 : f32 to vector<2x32xf32>
    %899 = arith.addf %898, %897 : vector<2x32xf32>
    %900 = arith.divf %898, %899 : vector<2x32xf32>
    %901 = vector.extract_strided_slice %894 {offsets = [0, 32], sizes = [2, 32], strides = [1, 1]} : vector<2x128xf32> to vector<2x32xf32>
    %902 = arith.negf %901 : vector<2x32xf32>
    %903 = math.exp %902 : vector<2x32xf32>
    %cst_178 = arith.constant 1.000000e+00 : f32
    %904 = vector.broadcast %cst_178 : f32 to vector<2x32xf32>
    %905 = arith.addf %904, %903 : vector<2x32xf32>
    %906 = arith.divf %904, %905 : vector<2x32xf32>
    %907 = vector.extract_strided_slice %894 {offsets = [0, 64], sizes = [2, 32], strides = [1, 1]} : vector<2x128xf32> to vector<2x32xf32>
    %908 = math.tanh %907 : vector<2x32xf32>
    %909 = vector.extract_strided_slice %894 {offsets = [0, 96], sizes = [2, 32], strides = [1, 1]} : vector<2x128xf32> to vector<2x32xf32>
    %910 = arith.negf %909 : vector<2x32xf32>
    %911 = math.exp %910 : vector<2x32xf32>
    %cst_179 = arith.constant 1.000000e+00 : f32
    %912 = vector.broadcast %cst_179 : f32 to vector<2x32xf32>
    %913 = arith.addf %912, %911 : vector<2x32xf32>
    %914 = arith.divf %912, %913 : vector<2x32xf32>
    %915 = arith.mulf %906, %835 : vector<2x32xf32>
    %916 = arith.mulf %900, %908 : vector<2x32xf32>
    %917 = arith.addf %915, %916 : vector<2x32xf32>
    %918 = math.tanh %917 : vector<2x32xf32>
    %919 = arith.mulf %914, %918 : vector<2x32xf32>
    %cst_180 = arith.constant dense<0.000000e+00> : vector<2x32xf32>
    %920 = tpu.matmul %919, %345, %cst_180 {dimension_numbers = #tpu.dot_dimension_numbers<[1], [0], [0], [1], [0, 0, 1, 1], [], []>} : vector<2x32xf32>, vector<32x32xf32>, vector<2x32xf32> -> vector<2x32xf32>
    %921 = vector.broadcast %346 : vector<1x32xf32> to vector<2x32xf32>
    %922 = arith.addf %920, %921 : vector<2x32xf32>
    %923 = vector.shape_cast %922 : vector<2x32xf32> to vector<2x1x32xf32>
    %924 = vector.broadcast %923 : vector<2x1x32xf32> to vector<2x8x32xf32>
    %925 = arith.addf %924, %357 : vector<2x8x32xf32>
    %926 = math.tanh %925 : vector<2x8x32xf32>
    %927 = vector.shape_cast %349 : vector<1x32xf32> to vector<1x1x32xf32>
    %928 = vector.broadcast %927 : vector<1x1x32xf32> to vector<2x8x32xf32>
    %929 = arith.mulf %926, %928 : vector<2x8x32xf32>
    %cst_181 = arith.constant dense<0.000000e+00> : vector<2x8xf32>
    %930 = vector.multi_reduction <add>, %929, %cst_181 [2] : vector<2x8x32xf32> to vector<2x8xf32>
    %931 = vector.broadcast %350 : vector<1x1xf32> to vector<2x8xf32>
    %932 = arith.addf %930, %931 : vector<2x8xf32>
    %cst_182 = arith.constant dense<0xFF800000> : vector<2xf32>
    %933 = vector.multi_reduction <maximumf>, %932, %cst_182 [1] : vector<2x8xf32> to vector<2xf32>
    %934 = vector.shape_cast %933 : vector<2xf32> to vector<2x1xf32>
    %935 = vector.broadcast %934 : vector<2x1xf32> to vector<2x8xf32>
    %936 = arith.subf %932, %935 : vector<2x8xf32>
    %937 = math.exp %936 : vector<2x8xf32>
    %cst_183 = arith.constant dense<0.000000e+00> : vector<2xf32>
    %938 = vector.multi_reduction <add>, %937, %cst_183 [1] : vector<2x8xf32> to vector<2xf32>
    %939 = vector.shape_cast %938 : vector<2xf32> to vector<2x1xf32>
    %940 = tpu.reciprocal %939 {approx = true} : vector<2x1xf32> -> vector<2x1xf32>
    %941 = vector.broadcast %940 : vector<2x1xf32> to vector<2x8xf32>
    %942 = arith.mulf %937, %941 : vector<2x8xf32>
    %c7_i32_184 = arith.constant 7 : i32
    %943 = vector.broadcast %c7_i32_184 : i32 to vector<2x8x8xi32>
    %944 = arith.cmpi eq, %359, %943 : vector<2x8x8xi32>
    %945 = vector.shape_cast %942 : vector<2x8xf32> to vector<2x1x8xf32>
    %cst_185 = arith.constant 0.000000e+00 : f32
    %946 = vector.shape_cast %945 : vector<2x1x8xf32> to vector<2x1x8xf32>
    %947 = vector.broadcast %946 : vector<2x1x8xf32> to vector<2x8x8xf32>
    %948 = vector.broadcast %cst_185 : f32 to vector<2x8x8xf32>
    %949 = arith.select %944, %947, %948 : vector<2x8x8xi1>, vector<2x8x8xf32>
    %950 = arith.addf %884, %949 : vector<2x8x8xf32>
    %c0_186 = arith.constant 0 : index
    %c0_187 = arith.constant 0 : index
    %c0_188 = arith.constant 0 : index
    %951 = vector.load %arg14[%c0_186, %c0_187, %c0_188] : memref<2x8x8xf32, #tpu.memory_space<vmem>>, vector<2x8x8xf32>
    tpu.vector_store %arg14[%c0_186, %c0_187, %c0_188], %950 {strides = array<i32>} : memref<2x8x8xf32, #tpu.memory_space<vmem>>, vector<2x8x8xf32>,
    return
  }
}

</mosaic_0001>

<llo_original>
// kernel: pcb_pointer_net.1
$region0: #{pcb_pointer_net.1}
  #allocation0 [shape = 'u32[]', space=smem, size = 0x4, offset = 0x4, fixed_abs, tag = 'smem constant byte address 0x4 - core index']
  #allocation1 [shape = 'u32[72,128]{1,0:T(1,128)}', space=vmem, size = 0x9000, scoped, tag = 'internal scratch']
  #allocation2 [shape = 'f32[1,1]{1,0:T(1,128)S(1)}', space=vmem, size = 0x200, scoped, tag = 'scoped memory for pcb_pointer_net.1']
  %s0 = inlined_call_operand.vmem [shape: f32[2,8,2], index: 0, kind: input, shape index: {}]
  %s1 = inlined_call_operand.vmem [shape: f32[2,128], index: 1, kind: input, shape index: {}]
  %s2 = inlined_call_operand.vmem [shape: f32[32,128], index: 2, kind: input, shape index: {}]
  %s3 = inlined_call_operand.vmem [shape: f32[1,128], index: 3, kind: input, shape index: {}]
  %s4 = inlined_call_operand.vmem [shape: f32[32,32], index: 4, kind: input, shape index: {}]
  %s5 = inlined_call_operand.vmem [shape: f32[1,32], index: 5, kind: input, shape index: {}]
  %s6 = inlined_call_operand.vmem [shape: f32[32,32], index: 6, kind: input, shape index: {}]
  %s7 = inlined_call_operand.vmem [shape: f32[1,32], index: 7, kind: input, shape index: {}]
  %s8 = inlined_call_operand.vmem [shape: f32[1,32], index: 8, kind: input, shape index: {}]
  %s9 = inlined_call_operand.<no memory space> [shape: f32[1,1], index: 9, kind: input, shape index: {}]
  %s10 = inlined_call_operand.vmem [shape: f32[32,128], index: 10, kind: input, shape index: {}]
  %s11 = inlined_call_operand.vmem [shape: f32[2,128], index: 11, kind: input, shape index: {}]
  %s12 = inlined_call_operand.vmem [shape: f32[32,128], index: 12, kind: input, shape index: {}]
  %s13 = inlined_call_operand.vmem [shape: f32[1,128], index: 13, kind: input, shape index: {}]
  %s14 = inlined_call_operand.hbm [shape: f32[2,8,8], index: 14, kind: output, shape index: {}]
  %s15 = sld [smem:[#allocation0]]
  $region66: #{pcb_pointer_net.1} parent=0
    _
  %s17 = ssub.s32 1, %s15
  %s18 = scalar_select 0, %s17, %s15
  %v19 = vstv %s9
  %20 = vst [vmem:[#allocation2] sm:$0x1] %v19
  $region1: #{pcb_pointer_net.1} parent=0
    #allocation3 [shape = 'u8[8192]{0}', space=vmem, size = 0x2000, scoped, tag = 'output window, operand 0, single buffered']
    #allocation4 [shape = 's32[1]{0}', space=sflag, size = 0x4, scoped, tag = 'scoped memory for pcb_pointer_net.1']
    %21 = vsyncpa [#allocation4], 0
    // Predicated region
    $region2: #{pcb_pointer_net.1} parent=1 // pred_check
      _
    $region3: #{pcb_pointer_net.1} parent=1 // pred_check_branch
      %23 = sbr.rel (0) target = $region5
    $region4: #{pcb_pointer_net.1} parent=1 // pred_region
      _
    $region5: #{pcb_pointer_net.1} parent=1 // pred_fallthru
      _
    // Predicated region
    $region6: #{pcb_pointer_net.1} parent=1 // pred_check
      _
    $region7: #{pcb_pointer_net.1} parent=1 // pred_check_branch
      %25 = sbr.rel (0) target = $region9
    $region8: #{pcb_pointer_net.1} parent=1 // pred_region
      _
    $region9: #{pcb_pointer_net.1} parent=1 // pred_fallthru
      _
    // Predicated region
    $region10: #{pcb_pointer_net.1} parent=1 // pred_check
      _
    $region11: #{pcb_pointer_net.1} parent=1 // pred_check_branch
      %27 = sbr.rel (0) target = $region13
    $region12: #{pcb_pointer_net.1} parent=1 // pred_region
      _
    $region13: #{pcb_pointer_net.1} parent=1 // pred_fallthru
      _
    // Predicated region
    $region14: #{pcb_pointer_net.1} parent=1 // pred_check
      _
    $region15: #{pcb_pointer_net.1} parent=1 // pred_check_branch
      %29 = sbr.rel (0) target = $region17
    $region16: #{pcb_pointer_net.1} parent=1 // pred_region
      _
    $region17: #{pcb_pointer_net.1} parent=1 // pred_fallthru
      _
    // Predicated region
    $region18: #{pcb_pointer_net.1} parent=1 // pred_check
      _
    $region19: #{pcb_pointer_net.1} parent=1 // pred_check_branch
      %31 = sbr.rel (0) target = $region21
    $region20: #{pcb_pointer_net.1} parent=1 // pred_region
      _
    $region21: #{pcb_pointer_net.1} parent=1 // pred_fallthru
      _
    // Predicated region
    $region22: #{pcb_pointer_net.1} parent=1 // pred_check
      _
    $region23: #{pcb_pointer_net.1} parent=1 // pred_check_branch
      %33 = sbr.rel (0) target = $region25
    $region24: #{pcb_pointer_net.1} parent=1 // pred_region
      _
    $region25: #{pcb_pointer_net.1} parent=1 // pred_fallthru
      _
    // Predicated region
    $region26: #{pcb_pointer_net.1} parent=1 // pred_check
      _
    $region27: #{pcb_pointer_net.1} parent=1 // pred_check_branch
      %35 = sbr.rel (0) target = $region29
    $region28: #{pcb_pointer_net.1} parent=1 // pred_region
      _
    $region29: #{pcb_pointer_net.1} parent=1 // pred_fallthru
      _
    // Predicated region
    $region30: #{pcb_pointer_net.1} parent=1 // pred_check
      _
    $region31: #{pcb_pointer_net.1} parent=1 // pred_check_branch
      %37 = sbr.rel (0) target = $region33
    $region32: #{pcb_pointer_net.1} parent=1 // pred_region
      _
    $region33: #{pcb_pointer_net.1} parent=1 // pred_fallthru
      _
    // Predicated region
    $region34: #{pcb_pointer_net.1} parent=1 // pred_check
      _
    $region35: #{pcb_pointer_net.1} parent=1 // pred_check_branch
      %39 = sbr.rel (0) target = $region37
    $region36: #{pcb_pointer_net.1} parent=1 // pred_region
      _
    $region37: #{pcb_pointer_net.1} parent=1 // pred_fallthru
      _
    // Predicated region
    $region38: #{pcb_pointer_net.1} parent=1 // pred_check
      _
    $region39: #{pcb_pointer_net.1} parent=1 // pred_check_branch
      %41 = sbr.rel (0) target = $region41
    $region40: #{pcb_pointer_net.1} parent=1 // pred_region
      _
    $region41: #{pcb_pointer_net.1} parent=1 // pred_fallthru
      _
    // Predicated region
    $region42: #{pcb_pointer_net.1} parent=1 // pred_check
      _
    $region43: #{pcb_pointer_net.1} parent=1 // pred_check_branch
      %43 = sbr.rel (0) target = $region45
    $region44: #{pcb_pointer_net.1} parent=1 // pred_region
      _
    $region45: #{pcb_pointer_net.1} parent=1 // pred_fallthru
      _
    // Predicated region
    $region46: #{pcb_pointer_net.1} parent=1 // pred_check
      _
    $region47: #{pcb_pointer_net.1} parent=1 // pred_check_branch
      %45 = sbr.rel (0) target = $region49
    $region48: #{pcb_pointer_net.1} parent=1 // pred_region
      _
    $region49: #{pcb_pointer_net.1} parent=1 // pred_fallthru
      _
    // Predicated region
    $region50: #{pcb_pointer_net.1} parent=1 // pred_check
      _
    $region51: #{pcb_pointer_net.1} parent=1 // pred_check_branch
      %47 = sbr.rel (0) target = $region53
    $region52: #{pcb_pointer_net.1} parent=1 // pred_region
      _
    $region53: #{pcb_pointer_net.1} parent=1 // pred_fallthru
      _
    // Predicated region
    $region54: #{pcb_pointer_net.1} parent=1 // pred_check
      _
    $region55: #{pcb_pointer_net.1} parent=1 // pred_check_branch
      %49 = sbr.rel (0) target = $region57
    $region56: #{pcb_pointer_net.1} parent=1 // pred_region
      _
    $region57: #{pcb_pointer_net.1} parent=1 // pred_fallthru
      _
    %v50 = vld [vmem:[%s0] sm:$0xff]
    %v51 = vld [vmem:[%s0 + $0x8] sm:$0xff]
    %v52 = vld [vmem:[%s1] sm:$0x3]
    %54 = vset.pattern.permute.xlu0 0
    %55 = vperm.xlu0 %54, %v50
    %v56 = vpop.permute.xlu0 %55
    %59 = vset.pattern.permute.xlu0 0
    %60 = vperm.xlu0 %59, %v51
    %v61 = vpop.permute.xlu0 %60
    %v63 = vperm.slane %v52, 0
    %v64 = vmul.f32 %v56, %v63
    %v65 = vmul.f32 %v61, %v63
    %66 = vset.pattern.permute.xlu0 1
    %67 = vperm.xlu0 %66, %v50
    %v68 = vpop.permute.xlu0 %67
    %70 = vset.pattern.permute.xlu0 1
    %71 = vperm.xlu0 %70, %v51
    %v72 = vpop.permute.xlu0 %71
    %v74 = vperm.slane %v52, 1
    %v75 = vmul.f32 %v68, %v74
    %v76 = vmul.f32 %v72, %v74
    %v77 = vadd.f32 %v64, %v75
    %v78 = vadd.f32 %v65, %v76
    %v79 = vld [vmem:[%s11] sm:$0x3]
    %v80 = vperm.slane %v79, 0
    %v81 = vmul.f32 %v56, %v80
    %v82 = vmul.f32 %v61, %v80
    %v83 = vperm.slane %v79, 1
    %v84 = vmul.f32 %v68, %v83
    %v85 = vmul.f32 %v72, %v83
    %v86 = vadd.f32 %v81, %v84
    %v87 = vadd.f32 %v82, %v85
    %v88 = vld [vmem:[%s2] sm:$0xff]
    %v89 = vld [vmem:[%s2 + $0x8] sm:$0xff]
    %v90 = vld [vmem:[%s2 + $0x10] sm:$0xff]
    %v91 = vld [vmem:[%s2 + $0x18] sm:$0xff]
    %v92 = vld [vmem:[%s3] sm:$0x1]
    %v93 = vlaneseq
    %v94 = vshrl.u32 %v93, 7
    %vm95 = vcmask 261120
    %v97 = vsel %vm95, 0.0, 0
    %99 = vmatpush.msra.mxu0 0.0
    %100 = vmatpush.msra.mxu0 0.0
    %101 = vmatpush.msra.mxu0 0.0
    %102 = vmatpush.msra.mxu0 0.0
    %103 = vmatpush.msra.mxu0 0.0
    %104 = vmatpush.msra.mxu0 0.0
    %105 = vmatpush.msra.mxu0 0.0
    %106 = vmatpush.msra.mxu0 0.0
    %107 = vmatpush.msra.mxu0 0.0
    %108 = vmatpush.msra.mxu0 0.0
    %109 = vmatpush.msra.mxu0 0.0
    %110 = vmatpush.msra.mxu0 0.0
    %111 = vmatpush.msra.mxu0 %v91
    %112 = vmatpush.msra.mxu0 %v90
    %113 = vmatpush.msra.mxu0 %v89
    %114 = vmatpush.msra.mxu0 %v88
    %115 = vmatmul.f32.gmra.mxu0 %v97
    %v116 = vpop.f32.mrf.mxu0
    %v117 = vadd.f32 0.0, %v116
    %118 = vdwg.mxu0
    %v120 = vrot.slane %v117, 1
    %v123 = vadd.f32 %v77, %v117
    %v124 = vadd.f32 %v78, %v120
    %v126 = vperm.slane %v92, 0
    %v128 = vadd.f32 %v123, %v126
    %v129 = vadd.f32 %v124, %v126
    %v130 = vxor.u32 %v128, 2147483648
    %v131 = vxor.u32 %v129, 2147483648
    %v132 = vmul.f32 %v130, 1.442695
    %v133 = vpow.pop %v132
    %v134 = vmul.f32 %v131, 1.442695
    %v135 = vpow.pop %v134
    %v136 = vadd.f32 %v133, 1.0
    %v137 = vadd.f32 %v135, 1.0
    %v138 = vrcp.pop %v136
    %v139 = vmul.f32 %v136, %v138
    %v140 = vsub.f32 1.0, %v139
    %v141 = vmul.f32 %v138, %v140
    %v142 = vadd.f32 %v138, %v141
    %vm143 = vweird.f32 %v136
    %vm144 = vweird.f32 %v138
    %vm145 = vmor %vm143, %vm144
    %v146 = vsel %vm145, %v138, %v142
    %v147 = vand.u32 2147483647, %v136
    %vm148 = vcmp.eq.f32.partialorder %v147, 8.507059e+37
    %v149 = vand.u32 %v136, 2147483648
    %v150 = vor.u32 1.1754944e-38, %v149
    %v151 = vsel %vm148, %v150, %v146
    %v152 = vmul.f32 1.0, %v151
    %v153 = vrcp.pop %v137
    %v154 = vmul.f32 %v137, %v153
    %v155 = vsub.f32 1.0, %v154
    %v156 = vmul.f32 %v153, %v155
    %v157 = vadd.f32 %v153, %v156
    %vm158 = vweird.f32 %v137
    %vm159 = vweird.f32 %v153
    %vm160 = vmor %vm158, %vm159
    %v161 = vsel %vm160, %v153, %v157
    %v162 = vand.u32 2147483647, %v137
    %vm163 = vcmp.eq.f32.partialorder %v162, 8.507059e+37
    %v164 = vand.u32 %v137, 2147483648
    %v165 = vor.u32 1.1754944e-38, %v164
    %v166 = vsel %vm163, %v165, %v161
    %v167 = vmul.f32 1.0, %v166
    %v168 = vtanh.pop %v128
    %v169 = vtanh.pop %v129
    %v170 = vmul.f32 %v152, 0.0
    %v171 = vmul.f32 %v167, 0.0
    %174 = vrot.lane.b32.xlu0 %v168, 64
    %v175 = vpop.permute.xlu0 %174
    %176 = vrot.lane.b32.xlu0 %v169, 64
    %v177 = vpop.permute.xlu0 %176
    %v180 = vmul.f32 %v152, %v175
    %v181 = vmul.f32 %v167, %v177
    %184 = vrot.lane.b32.xlu0 %v180, 32
    %v185 = vpop.permute.xlu0 %184
    %186 = vrot.lane.b32.xlu0 %v181, 32
    %v187 = vpop.permute.xlu0 %186
    %v190 = vadd.f32 %v170, %v185
    %v191 = vadd.f32 %v171, %v187
    %v192 = vtanh.pop %v190
    %v193 = vtanh.pop %v191
    %196 = vrot.lane.b32.xlu0 %v192, 64
    %v197 = vpop.permute.xlu0 %196
    %198 = vrot.lane.b32.xlu0 %v193, 64
    %v199 = vpop.permute.xlu0 %198
    %v202 = vmul.f32 %v152, %v197
    %v203 = vmul.f32 %v167, %v199
    %vm204 = vcmp.eq.s32.totalorder %v94, 0
    %v205 = vperm.slane %v202, 0
    %v206 = vperm.slane %v203, 0
    %v207 = vsel %vm204, %v205, 0.0
    %v208 = vsel %vm204, %v206, 0.0
    %v209 = vadd.f32 %v207, 0.0
    %v210 = vadd.f32 %v208, 0.0
    %v213 = vrot.slane %v203, 7
    %vm214 = vcmask 1041409
    %v215 = vsel %vm214, %v213, %v202
    %216 = vrot.lane.b32.xlu0 %v215, 32
    %v217 = vpop.permute.xlu0 %216
    %v218 = vsel %vm95, %v217, 0
    %220 = vmatpush.msra.mxu0 0.0
    %221 = vmatpush.msra.mxu0 0.0
    %222 = vmatpush.msra.mxu0 0.0
    %223 = vmatpush.msra.mxu0 0.0
    %224 = vmatpush.msra.mxu0 0.0
    %225 = vmatpush.msra.mxu0 0.0
    %226 = vmatpush.msra.mxu0 0.0
    %227 = vmatpush.msra.mxu0 0.0
    %228 = vmatpush.msra.mxu0 0.0
    %229 = vmatpush.msra.mxu0 0.0
    %230 = vmatpush.msra.mxu0 0.0
    %231 = vmatpush.msra.mxu0 0.0
    %232 = vmatpush.msra.mxu0 %v91
    %233 = vmatpush.msra.mxu0 %v90
    %234 = vmatpush.msra.mxu0 %v89
    %235 = vmatpush.msra.mxu0 %v88
    %236 = vmatmul.f32.gmra.mxu0 %v218
    %v237 = vpop.f32.mrf.mxu0
    %v238 = vadd.f32 0.0, %v237
    %239 = vdwg.mxu0
    %v241 = vrot.slane %v238, 7
    %v244 = vadd.f32 %v77, %v241
    %v245 = vadd.f32 %v78, %v238
    %v246 = vadd.f32 %v244, %v126
    %v247 = vadd.f32 %v245, %v126
    %v248 = vxor.u32 %v246, 2147483648
    %v249 = vxor.u32 %v247, 2147483648
    %v250 = vmul.f32 %v248, 1.442695
    %v251 = vpow.pop %v250
    %v252 = vmul.f32 %v249, 1.442695
    %v253 = vpow.pop %v252
    %v254 = vadd.f32 %v251, 1.0
    %v255 = vadd.f32 %v253, 1.0
    %v256 = vrcp.pop %v254
    %v257 = vmul.f32 %v254, %v256
    %v258 = vsub.f32 1.0, %v257
    %v259 = vmul.f32 %v256, %v258
    %v260 = vadd.f32 %v256, %v259
    %vm261 = vweird.f32 %v254
    %vm262 = vweird.f32 %v256
    %vm263 = vmor %vm261, %vm262
    %v264 = vsel %vm263, %v256, %v260
    %v265 = vand.u32 2147483647, %v254
    %vm266 = vcmp.eq.f32.partialorder %v265, 8.507059e+37
    %v267 = vand.u32 %v254, 2147483648
    %v268 = vor.u32 1.1754944e-38, %v267
    %v269 = vsel %vm266, %v268, %v264
    %v270 = vmul.f32 1.0, %v269
    %v271 = vrcp.pop %v255
    %v272 = vmul.f32 %v255, %v271
    %v273 = vsub.f32 1.0, %v272
    %v274 = vmul.f32 %v271, %v273
    %v275 = vadd.f32 %v271, %v274
    %vm276 = vweird.f32 %v255
    %vm277 = vweird.f32 %v271
    %vm278 = vmor %vm276, %vm277
    %v279 = vsel %vm278, %v271, %v275
    %v280 = vand.u32 2147483647, %v255
    %vm281 = vcmp.eq.f32.partialorder %v280, 8.507059e+37
    %v282 = vand.u32 %v255, 2147483648
    %v283 = vor.u32 1.1754944e-38, %v282
    %v284 = vsel %vm281, %v283, %v279
    %v285 = vmul.f32 1.0, %v284
    %v286 = vtanh.pop %v246
    %v287 = vtanh.pop %v247
    %v290 = vrot.slane %v190, 7
    %v291 = vrot.slane %v191, 7
    %v294 = vmul.f32 %v270, %v290
    %v295 = vmul.f32 %v285, %v291
    %298 = vrot.lane.b32.xlu0 %v286, 64
    %v299 = vpop.permute.xlu0 %298
    %300 = vrot.lane.b32.xlu0 %v287, 64
    %v301 = vpop.permute.xlu0 %300
    %v304 = vmul.f32 %v270, %v299
    %v305 = vmul.f32 %v285, %v301
    %308 = vrot.lane.b32.xlu0 %v304, 32
    %v309 = vpop.permute.xlu0 %308
    %310 = vrot.lane.b32.xlu0 %v305, 32
    %v311 = vpop.permute.xlu0 %310
    %v314 = vadd.f32 %v294, %v309
    %v315 = vadd.f32 %v295, %v311
    %v316 = vtanh.pop %v314
    %v317 = vtanh.pop %v315
    %320 = vrot.lane.b32.xlu0 %v316, 64
    %v321 = vpop.permute.xlu0 %320
    %322 = vrot.lane.b32.xlu0 %v317, 64
    %v323 = vpop.permute.xlu0 %322
    %v326 = vmul.f32 %v270, %v321
    %v327 = vmul.f32 %v285, %v323
    %vm328 = vcmp.eq.s32.totalorder %v94, 1
    %v329 = vperm.slane %v326, 1
    %v330 = vperm.slane %v327, 1
    %v331 = vsel %vm328, %v329, 0.0
    %v332 = vsel %vm328, %v330, 0.0
    %v333 = vadd.f32 %v209, %v331
    %v334 = vadd.f32 %v210, %v332
    %v337 = vrot.slane %v326, 1
    %v338 = vsel %vm214, %v327, %v337
    %339 = vrot.lane.b32.xlu0 %v338, 32
    %v340 = vpop.permute.xlu0 %339
    %v341 = vsel %vm95, %v340, 0
    %343 = vmatpush.msra.mxu0 0.0
    %344 = vmatpush.msra.mxu0 0.0
    %345 = vmatpush.msra.mxu0 0.0
    %346 = vmatpush.msra.mxu0 0.0
    %347 = vmatpush.msra.mxu0 0.0
    %348 = vmatpush.msra.mxu0 0.0
    %349 = vmatpush.msra.mxu0 0.0
    %350 = vmatpush.msra.mxu0 0.0
    %351 = vmatpush.msra.mxu0 0.0
    %352 = vmatpush.msra.mxu0 0.0
    %353 = vmatpush.msra.mxu0 0.0
    %354 = vmatpush.msra.mxu0 0.0
    %355 = vmatpush.msra.mxu0 %v91
    %356 = vmatpush.msra.mxu0 %v90
    %357 = vmatpush.msra.mxu0 %v89
    %358 = vmatpush.msra.mxu0 %v88
    %359 = vmatmul.f32.gmra.mxu0 %v341
    %v360 = vpop.f32.mrf.mxu0
    %v361 = vadd.f32 0.0, %v360
    %362 = vdwg.mxu0
    %v364 = vrot.slane %v361, 6
    %v365 = vrot.slane %v361, 7
    %v368 = vadd.f32 %v77, %v364
    %v369 = vadd.f32 %v78, %v365
    %v370 = vadd.f32 %v368, %v126
    %v371 = vadd.f32 %v369, %v126
    %v372 = vxor.u32 %v370, 2147483648
    %v373 = vxor.u32 %v371, 2147483648
    %v374 = vmul.f32 %v372, 1.442695
    %v375 = vpow.pop %v374
    %v376 = vmul.f32 %v373, 1.442695
    %v377 = vpow.pop %v376
    %v378 = vadd.f32 %v375, 1.0
    %v379 = vadd.f32 %v377, 1.0
    %v380 = vrcp.pop %v378
    %v381 = vmul.f32 %v378, %v380
    %v382 = vsub.f32 1.0, %v381
    %v383 = vmul.f32 %v380, %v382
    %v384 = vadd.f32 %v380, %v383
    %vm385 = vweird.f32 %v378
    %vm386 = vweird.f32 %v380
    %vm387 = vmor %vm385, %vm386
    %v388 = vsel %vm387, %v380, %v384
    %v389 = vand.u32 2147483647, %v378
    %vm390 = vcmp.eq.f32.partialorder %v389, 8.507059e+37
    %v391 = vand.u32 %v378, 2147483648
    %v392 = vor.u32 1.1754944e-38, %v391
    %v393 = vsel %vm390, %v392, %v388
    %v394 = vmul.f32 1.0, %v393
    %v395 = vrcp.pop %v379
    %v396 = vmul.f32 %v379, %v395
    %v397 = vsub.f32 1.0, %v396
    %v398 = vmul.f32 %v395, %v397
    %v399 = vadd.f32 %v395, %v398
    %vm400 = vweird.f32 %v379
    %vm401 = vweird.f32 %v395
    %vm402 = vmor %vm400, %vm401
    %v403 = vsel %vm402, %v395, %v399
    %v404 = vand.u32 2147483647, %v379
    %vm405 = vcmp.eq.f32.partialorder %v404, 8.507059e+37
    %v406 = vand.u32 %v379, 2147483648
    %v407 = vor.u32 1.1754944e-38, %v406
    %v408 = vsel %vm405, %v407, %v403
    %v409 = vmul.f32 1.0, %v408
    %v410 = vtanh.pop %v370
    %v411 = vtanh.pop %v371
    %v414 = vrot.slane %v314, 7
    %v415 = vrot.slane %v315, 7
    %v418 = vmul.f32 %v394, %v414
    %v419 = vmul.f32 %v409, %v415
    %422 = vrot.lane.b32.xlu0 %v410, 64
    %v423 = vpop.permute.xlu0 %422
    %424 = vrot.lane.b32.xlu0 %v411, 64
    %v425 = vpop.permute.xlu0 %424
    %v428 = vmul.f32 %v394, %v423
    %v429 = vmul.f32 %v409, %v425
    %432 = vrot.lane.b32.xlu0 %v428, 32
    %v433 = vpop.permute.xlu0 %432
    %434 = vrot.lane.b32.xlu0 %v429, 32
    %v435 = vpop.permute.xlu0 %434
    %v438 = vadd.f32 %v418, %v433
    %v439 = vadd.f32 %v419, %v435
    %v440 = vtanh.pop %v438
    %v441 = vtanh.pop %v439
    %444 = vrot.lane.b32.xlu0 %v440, 64
    %v445 = vpop.permute.xlu0 %444
    %446 = vrot.lane.b32.xlu0 %v441, 64
    %v447 = vpop.permute.xlu0 %446
    %v450 = vmul.f32 %v394, %v445
    %v451 = vmul.f32 %v409, %v447
    %vm452 = vcmp.eq.s32.totalorder %v94, 2
    %v453 = vperm.slane %v450, 2
    %v454 = vperm.slane %v451, 2
    %v455 = vsel %vm452, %v453, 0.0
    %v456 = vsel %vm452, %v454, 0.0
    %v457 = vadd.f32 %v333, %v455
    %v458 = vadd.f32 %v334, %v456
    %v461 = vrot.slane %v450, 2
    %v462 = vrot.slane %v451, 1
    %v463 = vsel %vm214, %v462, %v461
    %464 = vrot.lane.b32.xlu0 %v463, 32
    %v465 = vpop.permute.xlu0 %464
    %v466 = vsel %vm95, %v465, 0
    %468 = vmatpush.msra.mxu0 0.0
    %469 = vmatpush.msra.mxu0 0.0
    %470 = vmatpush.msra.mxu0 0.0
    %471 = vmatpush.msra.mxu0 0.0
    %472 = vmatpush.msra.mxu0 0.0
    %473 = vmatpush.msra.mxu0 0.0
    %474 = vmatpush.msra.mxu0 0.0
    %475 = vmatpush.msra.mxu0 0.0
    %476 = vmatpush.msra.mxu0 0.0
    %477 = vmatpush.msra.mxu0 0.0
    %478 = vmatpush.msra.mxu0 0.0
    %479 = vmatpush.msra.mxu0 0.0
    %480 = vmatpush.msra.mxu0 %v91
    %481 = vmatpush.msra.mxu0 %v90
    %482 = vmatpush.msra.mxu0 %v89
    %483 = vmatpush.msra.mxu0 %v88
    %484 = vmatmul.f32.gmra.mxu0 %v466
    %v485 = vpop.f32.mrf.mxu0
    %v486 = vadd.f32 0.0, %v485
    %487 = vdwg.mxu0
    %v489 = vrot.slane %v486, 5
    %v490 = vrot.slane %v486, 6
    %v493 = vadd.f32 %v77, %v489
    %v494 = vadd.f32 %v78, %v490
    %v495 = vadd.f32 %v493, %v126
    %v496 = vadd.f32 %v494, %v126
    %v497 = vxor.u32 %v495, 2147483648
    %v498 = vxor.u32 %v496, 2147483648
    %v499 = vmul.f32 %v497, 1.442695
    %v500 = vpow.pop %v499
    %v501 = vmul.f32 %v498, 1.442695
    %v502 = vpow.pop %v501
    %v503 = vadd.f32 %v500, 1.0
    %v504 = vadd.f32 %v502, 1.0
    %v505 = vrcp.pop %v503
    %v506 = vmul.f32 %v503, %v505
    %v507 = vsub.f32 1.0, %v506
    %v508 = vmul.f32 %v505, %v507
    %v509 = vadd.f32 %v505, %v508
    %vm510 = vweird.f32 %v503
    %vm511 = vweird.f32 %v505
    %vm512 = vmor %vm510, %vm511
    %v513 = vsel %vm512, %v505, %v509
    %v514 = vand.u32 2147483647, %v503
    %vm515 = vcmp.eq.f32.partialorder %v514, 8.507059e+37
    %v516 = vand.u32 %v503, 2147483648
    %v517 = vor.u32 1.1754944e-38, %v516
    %v518 = vsel %vm515, %v517, %v513
    %v519 = vmul.f32 1.0, %v518
    %v520 = vrcp.pop %v504
    %v521 = vmul.f32 %v504, %v520
    %v522 = vsub.f32 1.0, %v521
    %v523 = vmul.f32 %v520, %v522
    %v524 = vadd.f32 %v520, %v523
    %vm525 = vweird.f32 %v504
    %vm526 = vweird.f32 %v520
    %vm527 = vmor %vm525, %vm526
    %v528 = vsel %vm527, %v520, %v524
    %v529 = vand.u32 2147483647, %v504
    %vm530 = vcmp.eq.f32.partialorder %v529, 8.507059e+37
    %v531 = vand.u32 %v504, 2147483648
    %v532 = vor.u32 1.1754944e-38, %v531
    %v533 = vsel %vm530, %v532, %v528
    %v534 = vmul.f32 1.0, %v533
    %v535 = vtanh.pop %v495
    %v536 = vtanh.pop %v496
    %v539 = vrot.slane %v438, 7
    %v540 = vrot.slane %v439, 7
    %v543 = vmul.f32 %v519, %v539
    %v544 = vmul.f32 %v534, %v540
    %547 = vrot.lane.b32.xlu0 %v535, 64
    %v548 = vpop.permute.xlu0 %547
    %549 = vrot.lane.b32.xlu0 %v536, 64
    %v550 = vpop.permute.xlu0 %549
    %v553 = vmul.f32 %v519, %v548
    %v554 = vmul.f32 %v534, %v550
    %557 = vrot.lane.b32.xlu0 %v553, 32
    %v558 = vpop.permute.xlu0 %557
    %559 = vrot.lane.b32.xlu0 %v554, 32
    %v560 = vpop.permute.xlu0 %559
    %v563 = vadd.f32 %v543, %v558
    %v564 = vadd.f32 %v544, %v560
    %v565 = vtanh.pop %v563
    %v566 = vtanh.pop %v564
    %569 = vrot.lane.b32.xlu0 %v565, 64
    %v570 = vpop.permute.xlu0 %569
    %571 = vrot.lane.b32.xlu0 %v566, 64
    %v572 = vpop.permute.xlu0 %571
    %v575 = vmul.f32 %v519, %v570
    %v576 = vmul.f32 %v534, %v572
    %vm577 = vcmp.eq.s32.totalorder %v94, 3
    %v578 = vperm.slane %v575, 3
    %v579 = vperm.slane %v576, 3
    %v580 = vsel %vm577, %v578, 0.0
    %v581 = vsel %vm577, %v579, 0.0
    %v582 = vadd.f32 %v457, %v580
    %v583 = vadd.f32 %v458, %v581
    %v586 = vrot.slane %v575, 3
    %v587 = vrot.slane %v576, 2
    %v588 = vsel %vm214, %v587, %v586
    %589 = vrot.lane.b32.xlu0 %v588, 32
    %v590 = vpop.permute.xlu0 %589
    %v591 = vsel %vm95, %v590, 0
    %593 = vmatpush.msra.mxu0 0.0
    %594 = vmatpush.msra.mxu0 0.0
    %595 = vmatpush.msra.mxu0 0.0
    %596 = vmatpush.msra.mxu0 0.0
    %597 = vmatpush.msra.mxu0 0.0
    %598 = vmatpush.msra.mxu0 0.0
    %599 = vmatpush.msra.mxu0 0.0
    %600 = vmatpush.msra.mxu0 0.0
    %601 = vmatpush.msra.mxu0 0.0
    %602 = vmatpush.msra.mxu0 0.0
    %603 = vmatpush.msra.mxu0 0.0
    %604 = vmatpush.msra.mxu0 0.0
    %605 = vmatpush.msra.mxu0 %v91
    %606 = vmatpush.msra.mxu0 %v90
    %607 = vmatpush.msra.mxu0 %v89
    %608 = vmatpush.msra.mxu0 %v88
    %609 = vmatmul.f32.gmra.mxu0 %v591
    %v610 = vpop.f32.mrf.mxu0
    %v611 = vadd.f32 0.0, %v610
    %612 = vdwg.mxu0
    %v614 = vrot.slane %v611, 4
    %v615 = vrot.slane %v611, 5
    %v618 = vadd.f32 %v77, %v614
    %v619 = vadd.f32 %v78, %v615
    %v620 = vadd.f32 %v618, %v126
    %v621 = vadd.f32 %v619, %v126
    %v622 = vxor.u32 %v620, 2147483648
    %v623 = vxor.u32 %v621, 2147483648
    %v624 = vmul.f32 %v622, 1.442695
    %v625 = vpow.pop %v624
    %v626 = vmul.f32 %v623, 1.442695
    %v627 = vpow.pop %v626
    %v628 = vadd.f32 %v625, 1.0
    %v629 = vadd.f32 %v627, 1.0
    %v630 = vrcp.pop %v628
    %v631 = vmul.f32 %v628, %v630
    %v632 = vsub.f32 1.0, %v631
    %v633 = vmul.f32 %v630, %v632
    %v634 = vadd.f32 %v630, %v633
    %vm635 = vweird.f32 %v628
    %vm636 = vweird.f32 %v630
    %vm637 = vmor %vm635, %vm636
    %v638 = vsel %vm637, %v630, %v634
    %v639 = vand.u32 2147483647, %v628
    %vm640 = vcmp.eq.f32.partialorder %v639, 8.507059e+37
    %v641 = vand.u32 %v628, 2147483648
    %v642 = vor.u32 1.1754944e-38, %v641
    %v643 = vsel %vm640, %v642, %v638
    %v644 = vmul.f32 1.0, %v643
    %v645 = vrcp.pop %v629
    %v646 = vmul.f32 %v629, %v645
    %v647 = vsub.f32 1.0, %v646
    %v648 = vmul.f32 %v645, %v647
    %v649 = vadd.f32 %v645, %v648
    %vm650 = vweird.f32 %v629
    %vm651 = vweird.f32 %v645
    %vm652 = vmor %vm650, %vm651
    %v653 = vsel %vm652, %v645, %v649
    %v654 = vand.u32 2147483647, %v629
    %vm655 = vcmp.eq.f32.partialorder %v654, 8.507059e+37
    %v656 = vand.u32 %v629, 2147483648
    %v657 = vor.u32 1.1754944e-38, %v656
    %v658 = vsel %vm655, %v657, %v653
    %v659 = vmul.f32 1.0, %v658
    %v660 = vtanh.pop %v620
    %v661 = vtanh.pop %v621
    %v664 = vrot.slane %v563, 7
    %v665 = vrot.slane %v564, 7
    %v668 = vmul.f32 %v644, %v664
    %v669 = vmul.f32 %v659, %v665
    %672 = vrot.lane.b32.xlu0 %v660, 64
    %v673 = vpop.permute.xlu0 %672
    %674 = vrot.lane.b32.xlu0 %v661, 64
    %v675 = vpop.permute.xlu0 %674
    %v678 = vmul.f32 %v644, %v673
    %v679 = vmul.f32 %v659, %v675
    %682 = vrot.lane.b32.xlu0 %v678, 32
    %v683 = vpop.permute.xlu0 %682
    %684 = vrot.lane.b32.xlu0 %v679, 32
    %v685 = vpop.permute.xlu0 %684
    %v688 = vadd.f32 %v668, %v683
    %v689 = vadd.f32 %v669, %v685
    %v690 = vtanh.pop %v688
    %v691 = vtanh.pop %v689
    %694 = vrot.lane.b32.xlu0 %v690, 64
    %v695 = vpop.permute.xlu0 %694
    %696 = vrot.lane.b32.xlu0 %v691, 64
    %v697 = vpop.permute.xlu0 %696
    %v700 = vmul.f32 %v644, %v695
    %v701 = vmul.f32 %v659, %v697
    %vm702 = vcmp.eq.s32.totalorder %v94, 4
    %v703 = vperm.slane %v700, 4
    %v704 = vperm.slane %v701, 4
    %v705 = vsel %vm702, %v703, 0.0
    %v706 = vsel %vm702, %v704, 0.0
    %v707 = vadd.f32 %v582, %v705
    %v708 = vadd.f32 %v583, %v706
    %v711 = vrot.slane %v700, 4
    %v712 = vrot.slane %v701, 3
    %v713 = vsel %vm214, %v712, %v711
    %714 = vrot.lane.b32.xlu0 %v713, 32
    %v715 = vpop.permute.xlu0 %714
    %v716 = vsel %vm95, %v715, 0
    %718 = vmatpush.msra.mxu0 0.0
    %719 = vmatpush.msra.mxu0 0.0
    %720 = vmatpush.msra.mxu0 0.0
    %721 = vmatpush.msra.mxu0 0.0
    %722 = vmatpush.msra.mxu0 0.0
    %723 = vmatpush.msra.mxu0 0.0
    %724 = vmatpush.msra.mxu0 0.0
    %725 = vmatpush.msra.mxu0 0.0
    %726 = vmatpush.msra.mxu0 0.0
    %727 = vmatpush.msra.mxu0 0.0
    %728 = vmatpush.msra.mxu0 0.0
    %729 = vmatpush.msra.mxu0 0.0
    %730 = vmatpush.msra.mxu0 %v91
    %731 = vmatpush.msra.mxu0 %v90
    %732 = vmatpush.msra.mxu0 %v89
    %733 = vmatpush.msra.mxu0 %v88
    %734 = vmatmul.f32.gmra.mxu0 %v716
    %v735 = vpop.f32.mrf.mxu0
    %v736 = vadd.f32 0.0, %v735
    %737 = vdwg.mxu0
    %v739 = vrot.slane %v736, 3
    %v740 = vrot.slane %v736, 4
    %v743 = vadd.f32 %v77, %v739
    %v744 = vadd.f32 %v78, %v740
    %v745 = vadd.f32 %v743, %v126
    %v746 = vadd.f32 %v744, %v126
    %v747 = vxor.u32 %v745, 2147483648
    %v748 = vxor.u32 %v746, 2147483648
    %v749 = vmul.f32 %v747, 1.442695
    %v750 = vpow.pop %v749
    %v751 = vmul.f32 %v748, 1.442695
    %v752 = vpow.pop %v751
    %v753 = vadd.f32 %v750, 1.0
    %v754 = vadd.f32 %v752, 1.0
    %v755 = vrcp.pop %v753
    %v756 = vmul.f32 %v753, %v755
    %v757 = vsub.f32 1.0, %v756
    %v758 = vmul.f32 %v755, %v757
    %v759 = vadd.f32 %v755, %v758
    %vm760 = vweird.f32 %v753
    %vm761 = vweird.f32 %v755
    %vm762 = vmor %vm760, %vm761
    %v763 = vsel %vm762, %v755, %v759
    %v764 = vand.u32 2147483647, %v753
    %vm765 = vcmp.eq.f32.partialorder %v764, 8.507059e+37
    %v766 = vand.u32 %v753, 2147483648
    %v767 = vor.u32 1.1754944e-38, %v766
    %v768 = vsel %vm765, %v767, %v763
    %v769 = vmul.f32 1.0, %v768
    %v770 = vrcp.pop %v754
    %v771 = vmul.f32 %v754, %v770
    %v772 = vsub.f32 1.0, %v771
    %v773 = vmul.f32 %v770, %v772
    %v774 = vadd.f32 %v770, %v773
    %vm775 = vweird.f32 %v754
    %vm776 = vweird.f32 %v770
    %vm777 = vmor %vm775, %vm776
    %v778 = vsel %vm777, %v770, %v774
    %v779 = vand.u32 2147483647, %v754
    %vm780 = vcmp.eq.f32.partialorder %v779, 8.507059e+37
    %v781 = vand.u32 %v754, 2147483648
    %v782 = vor.u32 1.1754944e-38, %v781
    %v783 = vsel %vm780, %v782, %v778
    %v784 = vmul.f32 1.0, %v783
    %v785 = vtanh.pop %v745
    %v786 = vtanh.pop %v746
    %v789 = vrot.slane %v688, 7
    %v790 = vrot.slane %v689, 7
    %v793 = vmul.f32 %v769, %v789
    %v794 = vmul.f32 %v784, %v790
    %797 = vrot.lane.b32.xlu0 %v785, 64
    %v798 = vpop.permute.xlu0 %797
    %799 = vrot.lane.b32.xlu0 %v786, 64
    %v800 = vpop.permute.xlu0 %799
    %v803 = vmul.f32 %v769, %v798
    %v804 = vmul.f32 %v784, %v800
    %807 = vrot.lane.b32.xlu0 %v803, 32
    %v808 = vpop.permute.xlu0 %807
    %809 = vrot.lane.b32.xlu0 %v804, 32
    %v810 = vpop.permute.xlu0 %809
    %v813 = vadd.f32 %v793, %v808
    %v814 = vadd.f32 %v794, %v810
    %v815 = vtanh.pop %v813
    %v816 = vtanh.pop %v814
    %819 = vrot.lane.b32.xlu0 %v815, 64
    %v820 = vpop.permute.xlu0 %819
    %821 = vrot.lane.b32.xlu0 %v816, 64
    %v822 = vpop.permute.xlu0 %821
    %v825 = vmul.f32 %v769, %v820
    %v826 = vmul.f32 %v784, %v822
    %vm827 = vcmp.eq.s32.totalorder %v94, 5
    %v828 = vperm.slane %v825, 5
    %v829 = vperm.slane %v826, 5
    %v830 = vsel %vm827, %v828, 0.0
    %v831 = vsel %vm827, %v829, 0.0
    %v832 = vadd.f32 %v707, %v830
    %v833 = vadd.f32 %v708, %v831
    %v836 = vrot.slane %v825, 5
    %v837 = vrot.slane %v826, 4
    %v838 = vsel %vm214, %v837, %v836
    %839 = vrot.lane.b32.xlu0 %v838, 32
    %v840 = vpop.permute.xlu0 %839
    %v841 = vsel %vm95, %v840, 0
    %843 = vmatpush.msra.mxu0 0.0
    %844 = vmatpush.msra.mxu0 0.0
    %845 = vmatpush.msra.mxu0 0.0
    %846 = vmatpush.msra.mxu0 0.0
    %847 = vmatpush.msra.mxu0 0.0
    %848 = vmatpush.msra.mxu0 0.0
    %849 = vmatpush.msra.mxu0 0.0
    %850 = vmatpush.msra.mxu0 0.0
    %851 = vmatpush.msra.mxu0 0.0
    %852 = vmatpush.msra.mxu0 0.0
    %853 = vmatpush.msra.mxu0 0.0
    %854 = vmatpush.msra.mxu0 0.0
    %855 = vmatpush.msra.mxu0 %v91
    %856 = vmatpush.msra.mxu0 %v90
    %857 = vmatpush.msra.mxu0 %v89
    %858 = vmatpush.msra.mxu0 %v88
    %859 = vmatmul.f32.gmra.mxu0 %v841
    %v860 = vpop.f32.mrf.mxu0
    %v861 = vadd.f32 0.0, %v860
    %862 = vdwg.mxu0
    %v864 = vrot.slane %v861, 2
    %v865 = vrot.slane %v861, 3
    %v868 = vadd.f32 %v77, %v864
    %v869 = vadd.f32 %v78, %v865
    %v870 = vadd.f32 %v868, %v126
    %v871 = vadd.f32 %v869, %v126
    %v872 = vxor.u32 %v870, 2147483648
    %v873 = vxor.u32 %v871, 2147483648
    %v874 = vmul.f32 %v872, 1.442695
    %v875 = vpow.pop %v874
    %v876 = vmul.f32 %v873, 1.442695
    %v877 = vpow.pop %v876
    %v878 = vadd.f32 %v875, 1.0
    %v879 = vadd.f32 %v877, 1.0
    %v880 = vrcp.pop %v878
    %v881 = vmul.f32 %v878, %v880
    %v882 = vsub.f32 1.0, %v881
    %v883 = vmul.f32 %v880, %v882
    %v884 = vadd.f32 %v880, %v883
    %vm885 = vweird.f32 %v878
    %vm886 = vweird.f32 %v880
    %vm887 = vmor %vm885, %vm886
    %v888 = vsel %vm887, %v880, %v884
    %v889 = vand.u32 2147483647, %v878
    %vm890 = vcmp.eq.f32.partialorder %v889, 8.507059e+37
    %v891 = vand.u32 %v878, 2147483648
    %v892 = vor.u32 1.1754944e-38, %v891
    %v893 = vsel %vm890, %v892, %v888
    %v894 = vmul.f32 1.0, %v893
    %v895 = vrcp.pop %v879
    %v896 = vmul.f32 %v879, %v895
    %v897 = vsub.f32 1.0, %v896
    %v898 = vmul.f32 %v895, %v897
    %v899 = vadd.f32 %v895, %v898
    %vm900 = vweird.f32 %v879
    %vm901 = vweird.f32 %v895
    %vm902 = vmor %vm900, %vm901
    %v903 = vsel %vm902, %v895, %v899
    %v904 = vand.u32 2147483647, %v879
    %vm905 = vcmp.eq.f32.partialorder %v904, 8.507059e+37
    %v906 = vand.u32 %v879, 2147483648
    %v907 = vor.u32 1.1754944e-38, %v906
    %v908 = vsel %vm905, %v907, %v903
    %v909 = vmul.f32 1.0, %v908
    %v910 = vtanh.pop %v870
    %v911 = vtanh.pop %v871
    %v914 = vrot.slane %v813, 7
    %v915 = vrot.slane %v814, 7
    %v918 = vmul.f32 %v894, %v914
    %v919 = vmul.f32 %v909, %v915
    %922 = vrot.lane.b32.xlu0 %v910, 64
    %v923 = vpop.permute.xlu0 %922
    %924 = vrot.lane.b32.xlu0 %v911, 64
    %v925 = vpop.permute.xlu0 %924
    %v928 = vmul.f32 %v894, %v923
    %v929 = vmul.f32 %v909, %v925
    %932 = vrot.lane.b32.xlu0 %v928, 32
    %v933 = vpop.permute.xlu0 %932
    %934 = vrot.lane.b32.xlu0 %v929, 32
    %v935 = vpop.permute.xlu0 %934
    %v938 = vadd.f32 %v918, %v933
    %v939 = vadd.f32 %v919, %v935
    %v940 = vtanh.pop %v938
    %v941 = vtanh.pop %v939
    %944 = vrot.lane.b32.xlu0 %v940, 64
    %v945 = vpop.permute.xlu0 %944
    %946 = vrot.lane.b32.xlu0 %v941, 64
    %v947 = vpop.permute.xlu0 %946
    %v950 = vmul.f32 %v894, %v945
    %v951 = vmul.f32 %v909, %v947
    %vm952 = vcmp.eq.s32.totalorder %v94, 6
    %v953 = vperm.slane %v950, 6
    %v954 = vperm.slane %v951, 6
    %v955 = vsel %vm952, %v953, 0.0
    %v956 = vsel %vm952, %v954, 0.0
    %v957 = vadd.f32 %v832, %v955
    %v958 = vadd.f32 %v833, %v956
    %v961 = vrot.slane %v950, 6
    %v962 = vrot.slane %v951, 5
    %v963 = vsel %vm214, %v962, %v961
    %964 = vrot.lane.b32.xlu0 %v963, 32
    %v965 = vpop.permute.xlu0 %964
    %v966 = vsel %vm95, %v965, 0
    %968 = vmatpush.msra.mxu0 0.0
    %969 = vmatpush.msra.mxu0 0.0
    %970 = vmatpush.msra.mxu0 0.0
    %971 = vmatpush.msra.mxu0 0.0
    %972 = vmatpush.msra.mxu0 0.0
    %973 = vmatpush.msra.mxu0 0.0
    %974 = vmatpush.msra.mxu0 0.0
    %975 = vmatpush.msra.mxu0 0.0
    %976 = vmatpush.msra.mxu0 0.0
    %977 = vmatpush.msra.mxu0 0.0
    %978 = vmatpush.msra.mxu0 0.0
    %979 = vmatpush.msra.mxu0 0.0
    %980 = vmatpush.msra.mxu0 %v91
    %981 = vmatpush.msra.mxu0 %v90
    %982 = vmatpush.msra.mxu0 %v89
    %983 = vmatpush.msra.mxu0 %v88
    %984 = vmatmul.f32.gmra.mxu0 %v966
    %v985 = vpop.f32.mrf.mxu0
    %v986 = vadd.f32 0.0, %v985
    %987 = vdwg.mxu0
    %v989 = vrot.slane %v986, 1
    %v990 = vrot.slane %v986, 2
    %v993 = vadd.f32 %v77, %v989
    %v994 = vadd.f32 %v78, %v990
    %v995 = vadd.f32 %v993, %v126
    %v996 = vadd.f32 %v994, %v126
    %v997 = vxor.u32 %v995, 2147483648
    %v998 = vxor.u32 %v996, 2147483648
    %v999 = vmul.f32 %v997, 1.442695
    %v1000 = vpow.pop %v999
    %v1001 = vmul.f32 %v998, 1.442695
    %v1002 = vpow.pop %v1001
    %v1003 = vadd.f32 %v1000, 1.0
    %v1004 = vadd.f32 %v1002, 1.0
    %v1005 = vrcp.pop %v1003
    %v1006 = vmul.f32 %v1003, %v1005
    %v1007 = vsub.f32 1.0, %v1006
    %v1008 = vmul.f32 %v1005, %v1007
    %v1009 = vadd.f32 %v1005, %v1008
    %vm1010 = vweird.f32 %v1003
    %vm1011 = vweird.f32 %v1005
    %vm1012 = vmor %vm1010, %vm1011
    %v1013 = vsel %vm1012, %v1005, %v1009
    %v1014 = vand.u32 2147483647, %v1003
    %vm1015 = vcmp.eq.f32.partialorder %v1014, 8.507059e+37
    %v1016 = vand.u32 %v1003, 2147483648
    %v1017 = vor.u32 1.1754944e-38, %v1016
    %v1018 = vsel %vm1015, %v1017, %v1013
    %v1019 = vmul.f32 1.0, %v1018
    %v1020 = vrcp.pop %v1004
    %v1021 = vmul.f32 %v1004, %v1020
    %v1022 = vsub.f32 1.0, %v1021
    %v1023 = vmul.f32 %v1020, %v1022
    %v1024 = vadd.f32 %v1020, %v1023
    %vm1025 = vweird.f32 %v1004
    %vm1026 = vweird.f32 %v1020
    %vm1027 = vmor %vm1025, %vm1026
    %v1028 = vsel %vm1027, %v1020, %v1024
    %v1029 = vand.u32 2147483647, %v1004
    %vm1030 = vcmp.eq.f32.partialorder %v1029, 8.507059e+37
    %v1031 = vand.u32 %v1004, 2147483648
    %v1032 = vor.u32 1.1754944e-38, %v1031
    %v1033 = vsel %vm1030, %v1032, %v1028
    %v1034 = vmul.f32 1.0, %v1033
    %v1035 = vtanh.pop %v995
    %v1036 = vtanh.pop %v996
    %v1039 = vrot.slane %v938, 7
    %v1040 = vrot.slane %v939, 7
    %v1043 = vmul.f32 %v1019, %v1039
    %v1044 = vmul.f32 %v1034, %v1040
    %1047 = vrot.lane.b32.xlu0 %v1035, 64
    %v1048 = vpop.permute.xlu0 %1047
    %1049 = vrot.lane.b32.xlu0 %v1036, 64
    %v1050 = vpop.permute.xlu0 %1049
    %v1053 = vmul.f32 %v1019, %v1048
    %v1054 = vmul.f32 %v1034, %v1050
    %1057 = vrot.lane.b32.xlu0 %v1053, 32
    %v1058 = vpop.permute.xlu0 %1057
    %1059 = vrot.lane.b32.xlu0 %v1054, 32
    %v1060 = vpop.permute.xlu0 %1059
    %v1063 = vadd.f32 %v1043, %v1058
    %v1064 = vadd.f32 %v1044, %v1060
    %v1065 = vtanh.pop %v1063
    %v1066 = vtanh.pop %v1064
    %1069 = vrot.lane.b32.xlu0 %v1065, 64
    %v1070 = vpop.permute.xlu0 %1069
    %1071 = vrot.lane.b32.xlu0 %v1066, 64
    %v1072 = vpop.permute.xlu0 %1071
    %v1075 = vmul.f32 %v1019, %v1070
    %v1076 = vmul.f32 %v1034, %v1072
    %vm1077 = vcmp.eq.s32.totalorder %v94, 7
    %v1078 = vperm.slane %v1075, 7
    %v1079 = vperm.slane %v1076, 7
    %v1080 = vsel %vm1077, %v1078, 0.0
    %v1081 = vsel %vm1077, %v1079, 0.0
    %v1082 = vadd.f32 %v957, %v1080
    %v1083 = vadd.f32 %v958, %v1081
    %v1084 = vld [vmem:[%s4] sm:$0xff]
    %v1085 = vld [vmem:[%s4 + $0x8] sm:$0xff]
    %v1086 = vld [vmem:[%s4 + $0x10] sm:$0xff]
    %v1087 = vld [vmem:[%s4 + $0x18] sm:$0xff]
    %v1088 = vld [vmem:[%s5] sm:$0x1]
    %v1089 = vld [vmem:[%s6] sm:$0xff]
    %v1090 = vld [vmem:[%s6 + $0x8] sm:$0xff]
    %v1091 = vld [vmem:[%s6 + $0x10] sm:$0xff]
    %v1092 = vld [vmem:[%s6 + $0x18] sm:$0xff]
    %v1093 = vld [vmem:[%s7] sm:$0x1]
    %v1094 = vld [vmem:[%s8] sm:$0x1]
    %v1095 = vld [vmem:[#allocation2] sm:$0x1]
    %v1096 = vld [vmem:[%s10] sm:$0xff]
    %v1097 = vld [vmem:[%s10 + $0x8] sm:$0xff]
    %v1098 = vld [vmem:[%s10 + $0x10] sm:$0xff]
    %v1099 = vld [vmem:[%s10 + $0x18] sm:$0xff]
    %v1100 = vld [vmem:[%s12] sm:$0xff]
    %v1101 = vld [vmem:[%s12 + $0x8] sm:$0xff]
    %v1102 = vld [vmem:[%s12 + $0x10] sm:$0xff]
    %v1103 = vld [vmem:[%s12 + $0x18] sm:$0xff]
    %v1104 = vld [vmem:[%s13] sm:$0x1]
    %v1106 = vperm.slane %v1093, 0
    %1110 = vrot.lane.b32.xlu0 %v1082, 32
    %v1111 = vpop.permute.xlu0 %1110
    %1112 = vrot.lane.b32.xlu0 %v1083, 32
    %v1113 = vpop.permute.xlu0 %1112
    %v1114 = vsel %vm95, %v1111, 0
    %v1116 = vsel %vm95, %v1113, 0
    %1118 = vmatpush.msra.mxu0 0.0
    %1119 = vmatpush.msra.mxu0 0.0
    %1120 = vmatpush.msra.mxu0 0.0
    %1121 = vmatpush.msra.mxu0 0.0
    %1122 = vmatpush.msra.mxu0 0.0
    %1123 = vmatpush.msra.mxu0 0.0
    %1124 = vmatpush.msra.mxu0 0.0
    %1125 = vmatpush.msra.mxu0 0.0
    %1126 = vmatpush.msra.mxu0 0.0
    %1127 = vmatpush.msra.mxu0 0.0
    %1128 = vmatpush.msra.mxu0 0.0
    %1129 = vmatpush.msra.mxu0 0.0
    %1130 = vmatpush.msra.mxu0 %v1092
    %1131 = vmatpush.msra.mxu0 %v1091
    %1132 = vmatpush.msra.mxu0 %v1090
    %1133 = vmatpush.msra.mxu0 %v1089
    %1134 = vmatmul.f32.gmra.mxu0 %v1114
    %v1135 = vpop.f32.mrf.mxu0
    %v1136 = vadd.f32 %v1106, %v1135
    %1137 = vmatmul.f32.gmra.mxu0 %v1116
    %v1138 = vpop.f32.mrf.mxu0
    %v1139 = vadd.f32 %v1106, %v1138
    %1140 = vdwg.mxu0
    %v1141 = vlaneseq
    %v1142 = vand.u32 %v1141, 127
    %v1144 = vperm.slane %v1088, 0
    %v1148 = vrot.slane %v1075, 7
    %v1149 = vrot.slane %v1076, 6
    %v1150 = vsel %vm214, %v1149, %v1148
    %1151 = vrot.lane.b32.xlu0 %v1150, 32
    %v1152 = vpop.permute.xlu0 %1151
    %v1153 = vsel %vm95, %v1152, 0
    %1155 = vmatpush.msra.mxu0 0.0
    %1156 = vmatpush.msra.mxu0 0.0
    %1157 = vmatpush.msra.mxu0 0.0
    %1158 = vmatpush.msra.mxu0 0.0
    %1159 = vmatpush.msra.mxu0 0.0
    %1160 = vmatpush.msra.mxu0 0.0
    %1161 = vmatpush.msra.mxu0 0.0
    %1162 = vmatpush.msra.mxu0 0.0
    %1163 = vmatpush.msra.mxu0 0.0
    %1164 = vmatpush.msra.mxu0 0.0
    %1165 = vmatpush.msra.mxu0 0.0
    %1166 = vmatpush.msra.mxu0 0.0
    %1167 = vmatpush.msra.mxu0 %v1087
    %1168 = vmatpush.msra.mxu0 %v1086
    %1169 = vmatpush.msra.mxu0 %v1085
    %1170 = vmatpush.msra.mxu0 %v1084
    %1171 = vmatmul.f32.gmra.mxu0 %v1153
    %v1172 = vpop.f32.mrf.mxu0
    %v1173 = vadd.f32 %v1144, %v1172
    %1174 = vdwg.mxu0
    %v1176 = vrot.slane %v1173, 1
    %v1177 = vperm.slane %v1173, 0
    %v1178 = vperm.slane %v1176, 0
    %v1181 = vadd.f32 %v1177, %v1136
    %v1182 = vadd.f32 %v1178, %v1139
    %v1183 = vtanh.pop %v1181
    %v1184 = vtanh.pop %v1182
    %v1186 = vperm.slane %v1094, 0
    %v1188 = vmul.f32 %v1183, %v1186
    %v1189 = vmul.f32 %v1184, %v1186
    %v1190 = vsel %vm95, %v1188, 0.0
    %1191 = vadd.xlane.f32.xlu0 %v1190
    %v1192 = vpop.xlane.xlu0 %1191
    %v1193 = vsel %vm95, %v1189, 0.0
    %1194 = vadd.xlane.f32.xlu0 %v1193
    %v1195 = vpop.xlane.xlu0 %1194
    %v1197 = vperm.slane %v1095, 0
    %1198 = vset.pattern.permute.xlu0 0
    %1199 = vperm.xlu0 %1198, %v1197
    %v1200 = vpop.permute.xlu0 %1199
    %v1202 = vadd.f32 %v1192, %v1200
    %v1203 = vadd.f32 %v1195, %v1200
    %v1206 = vperm.slane %v1202, %v1142
    %v1207 = vperm.slane %v1203, %v1142
    %v1208 = vsel %vm214, %v1207, %v1206
    %vm1210 = vcmask 58368
    %v1211 = vsel %vm1210, %v1208, -inf
    %1212 = vmax.xlane.f32.xlu0 %v1211
    %v1213 = vpop.xlane.xlu0 %1212
    %v1215 = vperm.slane %v1213, 0
    %v1216 = vperm.slane %v1213, 1
    %v1219 = vsub.f32 %v1202, %v1215
    %v1220 = vsub.f32 %v1203, %v1216
    %v1221 = vmul.f32 %v1219, 1.442695
    %v1222 = vpow.pop %v1221
    %v1223 = vmul.f32 %v1220, 1.442695
    %v1224 = vpow.pop %v1223
    %1227 = vset.pattern.permute.xlu0 0
    %1228 = vperm.xlu0 %1227, %v1222
    %v1229 = vpop.permute.xlu0 %1228
    %1230 = vset.pattern.permute.xlu0 0
    %1231 = vperm.xlu0 %1230, %v1224
    %v1232 = vpop.permute.xlu0 %1231
    %v1233 = vperm.slane %v1229, %v1142
    %v1234 = vperm.slane %v1232, %v1142
    %v1235 = vsel %vm214, %v1234, %v1233
    %v1237 = vsel %vm1210, %v1235, 0.0
    %1238 = vadd.xlane.f32.xlu0 %v1237
    %v1239 = vpop.xlane.xlu0 %1238
    %v1240 = vrcp.pop %v1239
    %v1242 = vperm.slane %v1240, 0
    %v1243 = vperm.slane %v1240, 1
    %v1246 = vmul.f32 %v1222, %v1242
    %v1247 = vmul.f32 %v1224, %v1243
    %1250 = vset.pattern.permute.xlu0 0
    %1251 = vperm.xlu0 %1250, %v1246
    %v1252 = vpop.permute.xlu0 %1251
    %1253 = vset.pattern.permute.xlu0 0
    %1254 = vperm.xlu0 %1253, %v1247
    %v1255 = vpop.permute.xlu0 %1254
    %v1256 = vperm.slane %v1252, %v1142
    %v1257 = vperm.slane %v1255, %v1142
    %vm1258 = vcmask 1042434
    %v1259 = vsel %vm1258, %v1256, %v1256
    %vm1260 = vcmask 1043459
    %v1261 = vsel %vm1260, %v1256, %v1259
    %vm1262 = vcmask 1044484
    %v1263 = vsel %vm1262, %v1256, %v1261
    %vm1264 = vcmask 1045509
    %v1265 = vsel %vm1264, %v1256, %v1263
    %vm1266 = vcmask 1046534
    %v1267 = vsel %vm1266, %v1256, %v1265
    %vm1268 = vcmask 1047559
    %v1269 = vsel %vm1268, %v1256, %v1267
    %v1270 = vsel %vm1258, %v1257, %v1257
    %v1271 = vsel %vm1260, %v1257, %v1270
    %v1272 = vsel %vm1262, %v1257, %v1271
    %v1273 = vsel %vm1264, %v1257, %v1272
    %v1274 = vsel %vm1266, %v1257, %v1273
    %v1275 = vsel %vm1268, %v1257, %v1274
    %v1278 = vsel %vm204, %v1269, 0.0
    %v1279 = vsel %vm204, %v1275, 0.0
    %v1280 = vadd.f32 %v1278, 0.0
    %v1281 = vadd.f32 %v1279, 0.0
    %v1284 = vmul.f32 %v1082, %v1252
    %v1285 = vmul.f32 %v1083, %v1255
    %vm1286 = vcmask 1048320
    %v1287 = vsel %vm1286, %v1284, 0.0
    %v1288 = vrot.slane %v1287, 4
    %v1289 = vadd.f32 %v1287, %v1288
    %v1290 = vrot.slane %v1289, 2
    %v1291 = vadd.f32 %v1289, %v1290
    %v1292 = vrot.slane %v1291, 1
    %v1293 = vadd.f32 %v1291, %v1292
    %v1294 = vsel %vm1286, %v1285, 0.0
    %v1295 = vrot.slane %v1294, 4
    %v1296 = vadd.f32 %v1294, %v1295
    %v1297 = vrot.slane %v1296, 2
    %v1298 = vadd.f32 %v1296, %v1297
    %v1299 = vrot.slane %v1298, 1
    %v1300 = vadd.f32 %v1298, %v1299
    %1301 = vmatpush.msra.mxu0 0.0
    %1302 = vmatpush.msra.mxu0 0.0
    %1303 = vmatpush.msra.mxu0 0.0
    %1304 = vmatpush.msra.mxu0 0.0
    %1305 = vmatpush.msra.mxu0 0.0
    %1306 = vmatpush.msra.mxu0 0.0
    %1307 = vmatpush.msra.mxu0 0.0
    %1308 = vmatpush.msra.mxu0 0.0
    %1309 = vmatpush.msra.mxu0 0.0
    %1310 = vmatpush.msra.mxu0 0.0
    %1311 = vmatpush.msra.mxu0 0.0
    %1312 = vmatpush.msra.mxu0 0.0
    %1313 = vmatpush.msra.mxu0 %v1103
    %1314 = vmatpush.msra.mxu0 %v1102
    %1315 = vmatpush.msra.mxu0 %v1101
    %1316 = vmatpush.msra.mxu0 %v1100
    %1317 = vmatmul.f32.gmra.mxu0 %v1153
    %v1318 = vpop.f32.mrf.mxu0
    %v1319 = vadd.f32 0.0, %v1318
    %1320 = vdwg.mxu0
    %v1323 = vsel %vm214, %v1300, %v1293
    %1324 = vrot.lane.b32.xlu0 %v1323, 32
    %v1325 = vpop.permute.xlu0 %1324
    %v1326 = vsel %vm95, %v1325, 0
    %1328 = vmatpush.msra.mxu0 0.0
    %1329 = vmatpush.msra.mxu0 0.0
    %1330 = vmatpush.msra.mxu0 0.0
    %1331 = vmatpush.msra.mxu0 0.0
    %1332 = vmatpush.msra.mxu0 0.0
    %1333 = vmatpush.msra.mxu0 0.0
    %1334 = vmatpush.msra.mxu0 0.0
    %1335 = vmatpush.msra.mxu0 0.0
    %1336 = vmatpush.msra.mxu0 0.0
    %1337 = vmatpush.msra.mxu0 0.0
    %1338 = vmatpush.msra.mxu0 0.0
    %1339 = vmatpush.msra.mxu0 0.0
    %1340 = vmatpush.msra.mxu0 %v1099
    %1341 = vmatpush.msra.mxu0 %v1098
    %1342 = vmatpush.msra.mxu0 %v1097
    %1343 = vmatpush.msra.mxu0 %v1096
    %1344 = vmatmul.f32.gmra.mxu0 %v1326
    %v1345 = vpop.f32.mrf.mxu0
    %v1346 = vadd.f32 %v1319, %v1345
    %1347 = vdwg.mxu0
    %v1349 = vperm.slane %v1104, 0
    %v1351 = vadd.f32 %v1346, %v1349
    %v1352 = vxor.u32 %v1351, 2147483648
    %v1353 = vmul.f32 %v1352, 1.442695
    %v1354 = vpow.pop %v1353
    %v1355 = vadd.f32 %v1354, 1.0
    %v1356 = vrcp.pop %v1355
    %v1357 = vmul.f32 %v1355, %v1356
    %v1358 = vsub.f32 1.0, %v1357
    %v1359 = vmul.f32 %v1356, %v1358
    %v1360 = vadd.f32 %v1356, %v1359
    %vm1361 = vweird.f32 %v1355
    %vm1362 = vweird.f32 %v1356
    %vm1363 = vmor %vm1361, %vm1362
    %v1364 = vsel %vm1363, %v1356, %v1360
    %v1365 = vand.u32 2147483647, %v1355
    %vm1366 = vcmp.eq.f32.partialorder %v1365, 8.507059e+37
    %v1367 = vand.u32 %v1355, 2147483648
    %v1368 = vor.u32 1.1754944e-38, %v1367
    %v1369 = vsel %vm1366, %v1368, %v1364
    %v1370 = vmul.f32 1.0, %v1369
    %v1371 = vtanh.pop %v1351
    %v1374 = vrot.slane %v1063, 7
    %v1375 = vrot.slane %v1064, 6
    %v1376 = vsel %vm214, %v1375, %v1374
    %v1378 = vmul.f32 %v1370, %v1376
    %1380 = vrot.lane.b32.xlu0 %v1371, 64
    %v1381 = vpop.permute.xlu0 %1380
    %v1383 = vmul.f32 %v1370, %v1381
    %1385 = vrot.lane.b32.xlu0 %v1383, 32
    %v1386 = vpop.permute.xlu0 %1385
    %v1388 = vadd.f32 %v1378, %v1386
    %v1389 = vtanh.pop %v1388
    %1391 = vrot.lane.b32.xlu0 %v1389, 64
    %v1392 = vpop.permute.xlu0 %1391
    %v1394 = vmul.f32 %v1370, %v1392
    %v1395 = vsel %vm214, %v1257, %v1256
    %v1397 = vsel %vm1210, %v1395, -inf
    %1398 = vmax.xlane.f32.xlu0 %v1397
    %v1399 = vpop.xlane.xlu0 %1398
    %v1401 = vperm.slane %v1399, 0
    %v1402 = vperm.slane %v1399, 1
    %vm1405 = vcmp.eq.f32.partialorder %v1246, %v1401
    %vm1406 = vcmp.eq.f32.partialorder %v1247, %v1402
    %v1407 = vlaneseq
    %v1408 = vshrl.u32 %v1407, 7
    %1410 = vset.pattern.permute.xlu0 %v1408
    %1411 = vperm.xlu0 %1410, %v1142
    %v1412 = vpop.permute.xlu0 %1411
    %v1413 = vsel %vm1405, %v1412, 8
    %v1414 = vsel %vm1406, %v1412, 8
    %1415 = vset.pattern.permute.xlu0 0
    %1416 = vperm.xlu0 %1415, %v1413
    %v1417 = vpop.permute.xlu0 %1416
    %1418 = vset.pattern.permute.xlu0 0
    %1419 = vperm.xlu0 %1418, %v1414
    %v1420 = vpop.permute.xlu0 %1419
    %v1421 = vperm.slane %v1417, %v1142
    %v1422 = vperm.slane %v1420, %v1142
    %v1423 = vsel %vm214, %v1422, %v1421
    %v1424 = vsel %vm1210, %v1423, 2147483647
    %v1425 = vand.u32 %v1424, 65535
    %v1426 = vshra.s32 %v1424, 16
    %v1427 = vcvt.s32.f32 %v1425
    %v1428 = vcvt.s32.f32 %v1426
    %1429 = vmin.xlane.f32.xlu0 %v1428
    %v1430 = vpop.xlane.xlu0 %1429
    %vm1431 = vcmp.eq.f32.partialorder %v1428, %v1430
    %v1432 = vsel %vm1431, %v1427, inf
    %1433 = vmin.xlane.f32.xlu0 %v1432
    %v1434 = vpop.xlane.xlu0 %1433
    %v1435 = vcvt.f32.s32 %v1434
    %v1436 = vcvt.f32.s32 %v1430
    %v1437 = vshll.u32 %v1436, 16
    %v1438 = vadd.s32 %v1437, %v1435
    %vm1439 = vcmp.eq.s32.totalorder %v1142, %v1438
    %v1440 = vsel %vm1439, 1, 0
    %v1441 = vcvt.s32.f32 %v1440
    %v1442 = vperm.slane %v1441, 0
    %v1443 = vlaneseq
    %v1444 = vshrl.u32 %v1443, 7
    %1446 = vset.pattern.permute.xlu0 %v1444
    %1447 = vperm.xlu0 %1446, %v1442
    %v1448 = vpop.permute.xlu0 %1447
    %v1449 = vperm.slane %v1441, 1
    %v1450 = vlaneseq
    %v1451 = vshrl.u32 %v1450, 7
    %1453 = vset.pattern.permute.xlu0 %v1451
    %1454 = vperm.xlu0 %1453, %v1449
    %v1455 = vpop.permute.xlu0 %1454
    %v1456 = vmul.f32 %v86, %v1448
    %v1457 = vmul.f32 %v87, %v1455
    %v1458 = vrot.slane %v1456, 4
    %v1459 = vadd.f32 %v1456, %v1458
    %v1460 = vrot.slane %v1459, 2
    %v1461 = vadd.f32 %v1459, %v1460
    %v1462 = vrot.slane %v1461, 1
    %v1463 = vadd.f32 %v1461, %v1462
    %v1464 = vrot.slane %v1457, 4
    %v1465 = vadd.f32 %v1457, %v1464
    %v1466 = vrot.slane %v1465, 2
    %v1467 = vadd.f32 %v1465, %v1466
    %v1468 = vrot.slane %v1467, 1
    %v1469 = vadd.f32 %v1467, %v1468
    %1471 = vrot.lane.b32.xlu0 %v1394, 32
    %v1472 = vpop.permute.xlu0 %1471
    %v1473 = vsel %vm95, %v1472, 0
    %1475 = vmatpush.msra.mxu0 0.0
    %1476 = vmatpush.msra.mxu0 0.0
    %1477 = vmatpush.msra.mxu0 0.0
    %1478 = vmatpush.msra.mxu0 0.0
    %1479 = vmatpush.msra.mxu0 0.0
    %1480 = vmatpush.msra.mxu0 0.0
    %1481 = vmatpush.msra.mxu0 0.0
    %1482 = vmatpush.msra.mxu0 0.0
    %1483 = vmatpush.msra.mxu0 0.0
    %1484 = vmatpush.msra.mxu0 0.0
    %1485 = vmatpush.msra.mxu0 0.0
    %1486 = vmatpush.msra.mxu0 0.0
    %1487 = vmatpush.msra.mxu0 %v1087
    %1488 = vmatpush.msra.mxu0 %v1086
    %1489 = vmatpush.msra.mxu0 %v1085
    %1490 = vmatpush.msra.mxu0 %v1084
    %1491 = vmatmul.f32.gmra.mxu0 %v1473
    %v1492 = vpop.f32.mrf.mxu0
    %v1493 = vadd.f32 %v1144, %v1492
    %1494 = vdwg.mxu0
    %v1496 = vrot.slane %v1493, 1
    %v1497 = vperm.slane %v1493, 0
    %v1498 = vperm.slane %v1496, 0
    %v1501 = vadd.f32 %v1497, %v1136
    %v1502 = vadd.f32 %v1498, %v1139
    %v1503 = vtanh.pop %v1501
    %v1504 = vtanh.pop %v1502
    %v1505 = vmul.f32 %v1503, %v1186
    %v1506 = vmul.f32 %v1504, %v1186
    %v1507 = vsel %vm95, %v1505, 0.0
    %1508 = vadd.xlane.f32.xlu0 %v1507
    %v1509 = vpop.xlane.xlu0 %1508
    %v1510 = vsel %vm95, %v1506, 0.0
    %1511 = vadd.xlane.f32.xlu0 %v1510
    %v1512 = vpop.xlane.xlu0 %1511
    %v1513 = vadd.f32 %v1509, %v1200
    %v1514 = vadd.f32 %v1512, %v1200
    %v1517 = vperm.slane %v1513, %v1142
    %v1518 = vperm.slane %v1514, %v1142
    %v1519 = vsel %vm214, %v1518, %v1517
    %v1521 = vsel %vm1210, %v1519, -inf
    %1522 = vmax.xlane.f32.xlu0 %v1521
    %v1523 = vpop.xlane.xlu0 %1522
    %v1525 = vperm.slane %v1523, 0
    %v1526 = vperm.slane %v1523, 1
    %v1529 = vsub.f32 %v1513, %v1525
    %v1530 = vsub.f32 %v1514, %v1526
    %v1531 = vmul.f32 %v1529, 1.442695
    %v1532 = vpow.pop %v1531
    %v1533 = vmul.f32 %v1530, 1.442695
    %v1534 = vpow.pop %v1533
    %1537 = vset.pattern.permute.xlu0 0
    %1538 = vperm.xlu0 %1537, %v1532
    %v1539 = vpop.permute.xlu0 %1538
    %1540 = vset.pattern.permute.xlu0 0
    %1541 = vperm.xlu0 %1540, %v1534
    %v1542 = vpop.permute.xlu0 %1541
    %v1543 = vperm.slane %v1539, %v1142
    %v1544 = vperm.slane %v1542, %v1142
    %v1545 = vsel %vm214, %v1544, %v1543
    %v1547 = vsel %vm1210, %v1545, 0.0
    %1548 = vadd.xlane.f32.xlu0 %v1547
    %v1549 = vpop.xlane.xlu0 %1548
    %v1550 = vrcp.pop %v1549
    %v1552 = vperm.slane %v1550, 0
    %v1553 = vperm.slane %v1550, 1
    %v1556 = vmul.f32 %v1532, %v1552
    %v1557 = vmul.f32 %v1534, %v1553
    %1560 = vset.pattern.permute.xlu0 0
    %1561 = vperm.xlu0 %1560, %v1556
    %v1562 = vpop.permute.xlu0 %1561
    %1563 = vset.pattern.permute.xlu0 0
    %1564 = vperm.xlu0 %1563, %v1557
    %v1565 = vpop.permute.xlu0 %1564
    %v1566 = vperm.slane %v1562, %v1142
    %v1567 = vperm.slane %v1565, %v1142
    %v1568 = vsel %vm1258, %v1566, %v1566
    %v1569 = vsel %vm1260, %v1566, %v1568
    %v1570 = vsel %vm1262, %v1566, %v1569
    %v1571 = vsel %vm1264, %v1566, %v1570
    %v1572 = vsel %vm1266, %v1566, %v1571
    %v1573 = vsel %vm1268, %v1566, %v1572
    %v1574 = vsel %vm1258, %v1567, %v1567
    %v1575 = vsel %vm1260, %v1567, %v1574
    %v1576 = vsel %vm1262, %v1567, %v1575
    %v1577 = vsel %vm1264, %v1567, %v1576
    %v1578 = vsel %vm1266, %v1567, %v1577
    %v1579 = vsel %vm1268, %v1567, %v1578
    %v1582 = vsel %vm328, %v1573, 0.0
    %v1583 = vsel %vm328, %v1579, 0.0
    %v1584 = vadd.f32 %v1280, %v1582
    %v1585 = vadd.f32 %v1281, %v1583
    %v1588 = vmul.f32 %v1082, %v1562
    %v1589 = vmul.f32 %v1083, %v1565
    %v1590 = vsel %vm1286, %v1588, 0.0
    %v1591 = vrot.slane %v1590, 4
    %v1592 = vadd.f32 %v1590, %v1591
    %v1593 = vrot.slane %v1592, 2
    %v1594 = vadd.f32 %v1592, %v1593
    %v1595 = vrot.slane %v1594, 1
    %v1596 = vadd.f32 %v1594, %v1595
    %v1597 = vsel %vm1286, %v1589, 0.0
    %v1598 = vrot.slane %v1597, 4
    %v1599 = vadd.f32 %v1597, %v1598
    %v1600 = vrot.slane %v1599, 2
    %v1601 = vadd.f32 %v1599, %v1600
    %v1602 = vrot.slane %v1601, 1
    %v1603 = vadd.f32 %v1601, %v1602
    %v1606 = vsel %vm214, %v1603, %v1596
    %1607 = vrot.lane.b32.xlu0 %v1606, 32
    %v1608 = vpop.permute.xlu0 %1607
    %v1611 = vsel %vm214, %v1469, %v1463
    %v1613 = vsel %vm95, %v1608, 0
    %1615 = vmatpush.msra.mxu0 0.0
    %1616 = vmatpush.msra.mxu0 0.0
    %1617 = vmatpush.msra.mxu0 0.0
    %1618 = vmatpush.msra.mxu0 0.0
    %1619 = vmatpush.msra.mxu0 0.0
    %1620 = vmatpush.msra.mxu0 0.0
    %1621 = vmatpush.msra.mxu0 0.0
    %1622 = vmatpush.msra.mxu0 0.0
    %1623 = vmatpush.msra.mxu0 0.0
    %1624 = vmatpush.msra.mxu0 0.0
    %1625 = vmatpush.msra.mxu0 0.0
    %1626 = vmatpush.msra.mxu0 0.0
    %1627 = vmatpush.msra.mxu0 %v1099
    %1628 = vmatpush.msra.mxu0 %v1098
    %1629 = vmatpush.msra.mxu0 %v1097
    %1630 = vmatpush.msra.mxu0 %v1096
    %1631 = vmatmul.f32.gmra.mxu0 %v1613
    %v1632 = vpop.f32.mrf.mxu0
    %v1633 = vadd.f32 %v1611, %v1632
    %1634 = vdwg.mxu0
    %1635 = vmatpush.msra.mxu0 0.0
    %1636 = vmatpush.msra.mxu0 0.0
    %1637 = vmatpush.msra.mxu0 0.0
    %1638 = vmatpush.msra.mxu0 0.0
    %1639 = vmatpush.msra.mxu0 0.0
    %1640 = vmatpush.msra.mxu0 0.0
    %1641 = vmatpush.msra.mxu0 0.0
    %1642 = vmatpush.msra.mxu0 0.0
    %1643 = vmatpush.msra.mxu0 0.0
    %1644 = vmatpush.msra.mxu0 0.0
    %1645 = vmatpush.msra.mxu0 0.0
    %1646 = vmatpush.msra.mxu0 0.0
    %1647 = vmatpush.msra.mxu0 %v1103
    %1648 = vmatpush.msra.mxu0 %v1102
    %1649 = vmatpush.msra.mxu0 %v1101
    %1650 = vmatpush.msra.mxu0 %v1100
    %1651 = vmatmul.f32.gmra.mxu0 %v1473
    %v1652 = vpop.f32.mrf.mxu0
    %v1653 = vadd.f32 0.0, %v1652
    %1654 = vdwg.mxu0
    %v1655 = vadd.f32 %v1633, %v1653
    %v1656 = vadd.f32 %v1655, %v1349
    %v1657 = vxor.u32 %v1656, 2147483648
    %v1658 = vmul.f32 %v1657, 1.442695
    %v1659 = vpow.pop %v1658
    %v1660 = vadd.f32 %v1659, 1.0
    %v1661 = vrcp.pop %v1660
    %v1662 = vmul.f32 %v1660, %v1661
    %v1663 = vsub.f32 1.0, %v1662
    %v1664 = vmul.f32 %v1661, %v1663
    %v1665 = vadd.f32 %v1661, %v1664
    %vm1666 = vweird.f32 %v1660
    %vm1667 = vweird.f32 %v1661
    %vm1668 = vmor %vm1666, %vm1667
    %v1669 = vsel %vm1668, %v1661, %v1665
    %v1670 = vand.u32 2147483647, %v1660
    %vm1671 = vcmp.eq.f32.partialorder %v1670, 8.507059e+37
    %v1672 = vand.u32 %v1660, 2147483648
    %v1673 = vor.u32 1.1754944e-38, %v1672
    %v1674 = vsel %vm1671, %v1673, %v1669
    %v1675 = vmul.f32 1.0, %v1674
    %v1676 = vtanh.pop %v1656
    %v1677 = vmul.f32 %v1675, %v1388
    %1679 = vrot.lane.b32.xlu0 %v1676, 64
    %v1680 = vpop.permute.xlu0 %1679
    %v1682 = vmul.f32 %v1675, %v1680
    %1684 = vrot.lane.b32.xlu0 %v1682, 32
    %v1685 = vpop.permute.xlu0 %1684
    %v1687 = vadd.f32 %v1677, %v1685
    %v1688 = vtanh.pop %v1687
    %1690 = vrot.lane.b32.xlu0 %v1688, 64
    %v1691 = vpop.permute.xlu0 %1690
    %v1693 = vmul.f32 %v1675, %v1691
    %v1694 = vsel %vm214, %v1567, %v1566
    %v1696 = vsel %vm1210, %v1694, -inf
    %1697 = vmax.xlane.f32.xlu0 %v1696
    %v1698 = vpop.xlane.xlu0 %1697
    %v1700 = vperm.slane %v1698, 0
    %v1701 = vperm.slane %v1698, 1
    %vm1704 = vcmp.eq.f32.partialorder %v1556, %v1700
    %vm1705 = vcmp.eq.f32.partialorder %v1557, %v1701
    %v1706 = vsel %vm1704, %v1412, 8
    %v1707 = vsel %vm1705, %v1412, 8
    %1708 = vset.pattern.permute.xlu0 0
    %1709 = vperm.xlu0 %1708, %v1706
    %v1710 = vpop.permute.xlu0 %1709
    %1711 = vset.pattern.permute.xlu0 0
    %1712 = vperm.xlu0 %1711, %v1707
    %v1713 = vpop.permute.xlu0 %1712
    %v1714 = vperm.slane %v1710, %v1142
    %v1715 = vperm.slane %v1713, %v1142
    %v1716 = vsel %vm214, %v1715, %v1714
    %v1717 = vsel %vm1210, %v1716, 2147483647
    %v1718 = vand.u32 %v1717, 65535
    %v1719 = vshra.s32 %v1717, 16
    %v1720 = vcvt.s32.f32 %v1718
    %v1721 = vcvt.s32.f32 %v1719
    %1722 = vmin.xlane.f32.xlu0 %v1721
    %v1723 = vpop.xlane.xlu0 %1722
    %vm1724 = vcmp.eq.f32.partialorder %v1721, %v1723
    %v1725 = vsel %vm1724, %v1720, inf
    %1726 = vmin.xlane.f32.xlu0 %v1725
    %v1727 = vpop.xlane.xlu0 %1726
    %v1728 = vcvt.f32.s32 %v1727
    %v1729 = vcvt.f32.s32 %v1723
    %v1730 = vshll.u32 %v1729, 16
    %v1731 = vadd.s32 %v1730, %v1728
    %vm1732 = vcmp.eq.s32.totalorder %v1142, %v1731
    %v1733 = vsel %vm1732, 1, 0
    %v1734 = vcvt.s32.f32 %v1733
    %v1735 = vperm.slane %v1734, 0
    %v1736 = vlaneseq
    %v1737 = vshrl.u32 %v1736, 7
    %1739 = vset.pattern.permute.xlu0 %v1737
    %1740 = vperm.xlu0 %1739, %v1735
    %v1741 = vpop.permute.xlu0 %1740
    %v1742 = vperm.slane %v1734, 1
    %v1743 = vlaneseq
    %v1744 = vshrl.u32 %v1743, 7
    %1746 = vset.pattern.permute.xlu0 %v1744
    %1747 = vperm.xlu0 %1746, %v1742
    %v1748 = vpop.permute.xlu0 %1747
    %v1749 = vmul.f32 %v86, %v1741
    %v1750 = vmul.f32 %v87, %v1748
    %v1751 = vrot.slane %v1749, 4
    %v1752 = vadd.f32 %v1749, %v1751
    %v1753 = vrot.slane %v1752, 2
    %v1754 = vadd.f32 %v1752, %v1753
    %v1755 = vrot.slane %v1754, 1
    %v1756 = vadd.f32 %v1754, %v1755
    %v1757 = vrot.slane %v1750, 4
    %v1758 = vadd.f32 %v1750, %v1757
    %v1759 = vrot.slane %v1758, 2
    %v1760 = vadd.f32 %v1758, %v1759
    %v1761 = vrot.slane %v1760, 1
    %v1762 = vadd.f32 %v1760, %v1761
    %1764 = vrot.lane.b32.xlu0 %v1693, 32
    %v1765 = vpop.permute.xlu0 %1764
    %v1766 = vsel %vm95, %v1765, 0
    %1768 = vmatpush.msra.mxu0 0.0
    %1769 = vmatpush.msra.mxu0 0.0
    %1770 = vmatpush.msra.mxu0 0.0
    %1771 = vmatpush.msra.mxu0 0.0
    %1772 = vmatpush.msra.mxu0 0.0
    %1773 = vmatpush.msra.mxu0 0.0
    %1774 = vmatpush.msra.mxu0 0.0
    %1775 = vmatpush.msra.mxu0 0.0
    %1776 = vmatpush.msra.mxu0 0.0
    %1777 = vmatpush.msra.mxu0 0.0
    %1778 = vmatpush.msra.mxu0 0.0
    %1779 = vmatpush.msra.mxu0 0.0
    %1780 = vmatpush.msra.mxu0 %v1087
    %1781 = vmatpush.msra.mxu0 %v1086
    %1782 = vmatpush.msra.mxu0 %v1085
    %1783 = vmatpush.msra.mxu0 %v1084
    %1784 = vmatmul.f32.gmra.mxu0 %v1766
    %v1785 = vpop.f32.mrf.mxu0
    %v1786 = vadd.f32 %v1144, %v1785
    %1787 = vdwg.mxu0
    %v1789 = vrot.slane %v1786, 1
    %v1790 = vperm.slane %v1786, 0
    %v1791 = vperm.slane %v1789, 0
    %v1794 = vadd.f32 %v1790, %v1136
    %v1795 = vadd.f32 %v1791, %v1139
    %v1796 = vtanh.pop %v1794
    %v1797 = vtanh.pop %v1795
    %v1798 = vmul.f32 %v1796, %v1186
    %v1799 = vmul.f32 %v1797, %v1186
    %v1800 = vsel %vm95, %v1798, 0.0
    %1801 = vadd.xlane.f32.xlu0 %v1800
    %v1802 = vpop.xlane.xlu0 %1801
    %v1803 = vsel %vm95, %v1799, 0.0
    %1804 = vadd.xlane.f32.xlu0 %v1803
    %v1805 = vpop.xlane.xlu0 %1804
    %v1806 = vadd.f32 %v1802, %v1200
    %v1807 = vadd.f32 %v1805, %v1200
    %v1810 = vperm.slane %v1806, %v1142
    %v1811 = vperm.slane %v1807, %v1142
    %v1812 = vsel %vm214, %v1811, %v1810
    %v1814 = vsel %vm1210, %v1812, -inf
    %1815 = vmax.xlane.f32.xlu0 %v1814
    %v1816 = vpop.xlane.xlu0 %1815
    %v1818 = vperm.slane %v1816, 0
    %v1819 = vperm.slane %v1816, 1
    %v1822 = vsub.f32 %v1806, %v1818
    %v1823 = vsub.f32 %v1807, %v1819
    %v1824 = vmul.f32 %v1822, 1.442695
    %v1825 = vpow.pop %v1824
    %v1826 = vmul.f32 %v1823, 1.442695
    %v1827 = vpow.pop %v1826
    %1830 = vset.pattern.permute.xlu0 0
    %1831 = vperm.xlu0 %1830, %v1825
    %v1832 = vpop.permute.xlu0 %1831
    %1833 = vset.pattern.permute.xlu0 0
    %1834 = vperm.xlu0 %1833, %v1827
    %v1835 = vpop.permute.xlu0 %1834
    %v1836 = vperm.slane %v1832, %v1142
    %v1837 = vperm.slane %v1835, %v1142
    %v1838 = vsel %vm214, %v1837, %v1836
    %v1840 = vsel %vm1210, %v1838, 0.0
    %1841 = vadd.xlane.f32.xlu0 %v1840
    %v1842 = vpop.xlane.xlu0 %1841
    %v1843 = vrcp.pop %v1842
    %v1845 = vperm.slane %v1843, 0
    %v1846 = vperm.slane %v1843, 1
    %v1849 = vmul.f32 %v1825, %v1845
    %v1850 = vmul.f32 %v1827, %v1846
    %1853 = vset.pattern.permute.xlu0 0
    %1854 = vperm.xlu0 %1853, %v1849
    %v1855 = vpop.permute.xlu0 %1854
    %1856 = vset.pattern.permute.xlu0 0
    %1857 = vperm.xlu0 %1856, %v1850
    %v1858 = vpop.permute.xlu0 %1857
    %v1859 = vperm.slane %v1855, %v1142
    %v1860 = vperm.slane %v1858, %v1142
    %v1861 = vsel %vm1258, %v1859, %v1859
    %v1862 = vsel %vm1260, %v1859, %v1861
    %v1863 = vsel %vm1262, %v1859, %v1862
    %v1864 = vsel %vm1264, %v1859, %v1863
    %v1865 = vsel %vm1266, %v1859, %v1864
    %v1866 = vsel %vm1268, %v1859, %v1865
    %v1867 = vsel %vm1258, %v1860, %v1860
    %v1868 = vsel %vm1260, %v1860, %v1867
    %v1869 = vsel %vm1262, %v1860, %v1868
    %v1870 = vsel %vm1264, %v1860, %v1869
    %v1871 = vsel %vm1266, %v1860, %v1870
    %v1872 = vsel %vm1268, %v1860, %v1871
    %v1875 = vsel %vm452, %v1866, 0.0
    %v1876 = vsel %vm452, %v1872, 0.0
    %v1877 = vadd.f32 %v1584, %v1875
    %v1878 = vadd.f32 %v1585, %v1876
    %v1881 = vmul.f32 %v1082, %v1855
    %v1882 = vmul.f32 %v1083, %v1858
    %v1883 = vsel %vm1286, %v1881, 0.0
    %v1884 = vrot.slane %v1883, 4
    %v1885 = vadd.f32 %v1883, %v1884
    %v1886 = vrot.slane %v1885, 2
    %v1887 = vadd.f32 %v1885, %v1886
    %v1888 = vrot.slane %v1887, 1
    %v1889 = vadd.f32 %v1887, %v1888
    %v1890 = vsel %vm1286, %v1882, 0.0
    %v1891 = vrot.slane %v1890, 4
    %v1892 = vadd.f32 %v1890, %v1891
    %v1893 = vrot.slane %v1892, 2
    %v1894 = vadd.f32 %v1892, %v1893
    %v1895 = vrot.slane %v1894, 1
    %v1896 = vadd.f32 %v1894, %v1895
    %v1899 = vsel %vm214, %v1896, %v1889
    %1900 = vrot.lane.b32.xlu0 %v1899, 32
    %v1901 = vpop.permute.xlu0 %1900
    %v1904 = vsel %vm214, %v1762, %v1756
    %v1906 = vsel %vm95, %v1901, 0
    %1908 = vmatpush.msra.mxu0 0.0
    %1909 = vmatpush.msra.mxu0 0.0
    %1910 = vmatpush.msra.mxu0 0.0
    %1911 = vmatpush.msra.mxu0 0.0
    %1912 = vmatpush.msra.mxu0 0.0
    %1913 = vmatpush.msra.mxu0 0.0
    %1914 = vmatpush.msra.mxu0 0.0
    %1915 = vmatpush.msra.mxu0 0.0
    %1916 = vmatpush.msra.mxu0 0.0
    %1917 = vmatpush.msra.mxu0 0.0
    %1918 = vmatpush.msra.mxu0 0.0
    %1919 = vmatpush.msra.mxu0 0.0
    %1920 = vmatpush.msra.mxu0 %v1099
    %1921 = vmatpush.msra.mxu0 %v1098
    %1922 = vmatpush.msra.mxu0 %v1097
    %1923 = vmatpush.msra.mxu0 %v1096
    %1924 = vmatmul.f32.gmra.mxu0 %v1906
    %v1925 = vpop.f32.mrf.mxu0
    %v1926 = vadd.f32 %v1904, %v1925
    %1927 = vdwg.mxu0
    %1928 = vmatpush.msra.mxu0 0.0
    %1929 = vmatpush.msra.mxu0 0.0
    %1930 = vmatpush.msra.mxu0 0.0
    %1931 = vmatpush.msra.mxu0 0.0
    %1932 = vmatpush.msra.mxu0 0.0
    %1933 = vmatpush.msra.mxu0 0.0
    %1934 = vmatpush.msra.mxu0 0.0
    %1935 = vmatpush.msra.mxu0 0.0
    %1936 = vmatpush.msra.mxu0 0.0
    %1937 = vmatpush.msra.mxu0 0.0
    %1938 = vmatpush.msra.mxu0 0.0
    %1939 = vmatpush.msra.mxu0 0.0
    %1940 = vmatpush.msra.mxu0 %v1103
    %1941 = vmatpush.msra.mxu0 %v1102
    %1942 = vmatpush.msra.mxu0 %v1101
    %1943 = vmatpush.msra.mxu0 %v1100
    %1944 = vmatmul.f32.gmra.mxu0 %v1766
    %v1945 = vpop.f32.mrf.mxu0
    %v1946 = vadd.f32 0.0, %v1945
    %1947 = vdwg.mxu0
    %v1948 = vadd.f32 %v1926, %v1946
    %v1949 = vadd.f32 %v1948, %v1349
    %v1950 = vxor.u32 %v1949, 2147483648
    %v1951 = vmul.f32 %v1950, 1.442695
    %v1952 = vpow.pop %v1951
    %v1953 = vadd.f32 %v1952, 1.0
    %v1954 = vrcp.pop %v1953
    %v1955 = vmul.f32 %v1953, %v1954
    %v1956 = vsub.f32 1.0, %v1955
    %v1957 = vmul.f32 %v1954, %v1956
    %v1958 = vadd.f32 %v1954, %v1957
    %vm1959 = vweird.f32 %v1953
    %vm1960 = vweird.f32 %v1954
    %vm1961 = vmor %vm1959, %vm1960
    %v1962 = vsel %vm1961, %v1954, %v1958
    %v1963 = vand.u32 2147483647, %v1953
    %vm1964 = vcmp.eq.f32.partialorder %v1963, 8.507059e+37
    %v1965 = vand.u32 %v1953, 2147483648
    %v1966 = vor.u32 1.1754944e-38, %v1965
    %v1967 = vsel %vm1964, %v1966, %v1962
    %v1968 = vmul.f32 1.0, %v1967
    %v1969 = vtanh.pop %v1949
    %v1970 = vmul.f32 %v1968, %v1687
    %1972 = vrot.lane.b32.xlu0 %v1969, 64
    %v1973 = vpop.permute.xlu0 %1972
    %v1975 = vmul.f32 %v1968, %v1973
    %1977 = vrot.lane.b32.xlu0 %v1975, 32
    %v1978 = vpop.permute.xlu0 %1977
    %v1980 = vadd.f32 %v1970, %v1978
    %v1981 = vtanh.pop %v1980
    %1983 = vrot.lane.b32.xlu0 %v1981, 64
    %v1984 = vpop.permute.xlu0 %1983
    %v1986 = vmul.f32 %v1968, %v1984
    %v1987 = vsel %vm214, %v1860, %v1859
    %v1989 = vsel %vm1210, %v1987, -inf
    %1990 = vmax.xlane.f32.xlu0 %v1989
    %v1991 = vpop.xlane.xlu0 %1990
    %v1993 = vperm.slane %v1991, 0
    %v1994 = vperm.slane %v1991, 1
    %vm1997 = vcmp.eq.f32.partialorder %v1849, %v1993
    %vm1998 = vcmp.eq.f32.partialorder %v1850, %v1994
    %v1999 = vsel %vm1997, %v1412, 8
    %v2000 = vsel %vm1998, %v1412, 8
    %2001 = vset.pattern.permute.xlu0 0
    %2002 = vperm.xlu0 %2001, %v1999
    %v2003 = vpop.permute.xlu0 %2002
    %2004 = vset.pattern.permute.xlu0 0
    %2005 = vperm.xlu0 %2004, %v2000
    %v2006 = vpop.permute.xlu0 %2005
    %v2007 = vperm.slane %v2003, %v1142
    %v2008 = vperm.slane %v2006, %v1142
    %v2009 = vsel %vm214, %v2008, %v2007
    %v2010 = vsel %vm1210, %v2009, 2147483647
    %v2011 = vand.u32 %v2010, 65535
    %v2012 = vshra.s32 %v2010, 16
    %v2013 = vcvt.s32.f32 %v2011
    %v2014 = vcvt.s32.f32 %v2012
    %2015 = vmin.xlane.f32.xlu0 %v2014
    %v2016 = vpop.xlane.xlu0 %2015
    %vm2017 = vcmp.eq.f32.partialorder %v2014, %v2016
    %v2018 = vsel %vm2017, %v2013, inf
    %2019 = vmin.xlane.f32.xlu0 %v2018
    %v2020 = vpop.xlane.xlu0 %2019
    %v2021 = vcvt.f32.s32 %v2020
    %v2022 = vcvt.f32.s32 %v2016
    %v2023 = vshll.u32 %v2022, 16
    %v2024 = vadd.s32 %v2023, %v2021
    %vm2025 = vcmp.eq.s32.totalorder %v1142, %v2024
    %v2026 = vsel %vm2025, 1, 0
    %v2027 = vcvt.s32.f32 %v2026
    %v2028 = vperm.slane %v2027, 0
    %v2029 = vlaneseq
    %v2030 = vshrl.u32 %v2029, 7
    %2032 = vset.pattern.permute.xlu0 %v2030
    %2033 = vperm.xlu0 %2032, %v2028
    %v2034 = vpop.permute.xlu0 %2033
    %v2035 = vperm.slane %v2027, 1
    %v2036 = vlaneseq
    %v2037 = vshrl.u32 %v2036, 7
    %2039 = vset.pattern.permute.xlu0 %v2037
    %2040 = vperm.xlu0 %2039, %v2035
    %v2041 = vpop.permute.xlu0 %2040
    %v2042 = vmul.f32 %v86, %v2034
    %v2043 = vmul.f32 %v87, %v2041
    %v2044 = vrot.slane %v2042, 4
    %v2045 = vadd.f32 %v2042, %v2044
    %v2046 = vrot.slane %v2045, 2
    %v2047 = vadd.f32 %v2045, %v2046
    %v2048 = vrot.slane %v2047, 1
    %v2049 = vadd.f32 %v2047, %v2048
    %v2050 = vrot.slane %v2043, 4
    %v2051 = vadd.f32 %v2043, %v2050
    %v2052 = vrot.slane %v2051, 2
    %v2053 = vadd.f32 %v2051, %v2052
    %v2054 = vrot.slane %v2053, 1
    %v2055 = vadd.f32 %v2053, %v2054
    %2057 = vrot.lane.b32.xlu0 %v1986, 32
    %v2058 = vpop.permute.xlu0 %2057
    %v2059 = vsel %vm95, %v2058, 0
    %2061 = vmatpush.msra.mxu0 0.0
    %2062 = vmatpush.msra.mxu0 0.0
    %2063 = vmatpush.msra.mxu0 0.0
    %2064 = vmatpush.msra.mxu0 0.0
    %2065 = vmatpush.msra.mxu0 0.0
    %2066 = vmatpush.msra.mxu0 0.0
    %2067 = vmatpush.msra.mxu0 0.0
    %2068 = vmatpush.msra.mxu0 0.0
    %2069 = vmatpush.msra.mxu0 0.0
    %2070 = vmatpush.msra.mxu0 0.0
    %2071 = vmatpush.msra.mxu0 0.0
    %2072 = vmatpush.msra.mxu0 0.0
    %2073 = vmatpush.msra.mxu0 %v1087
    %2074 = vmatpush.msra.mxu0 %v1086
    %2075 = vmatpush.msra.mxu0 %v1085
    %2076 = vmatpush.msra.mxu0 %v1084
    %2077 = vmatmul.f32.gmra.mxu0 %v2059
    %v2078 = vpop.f32.mrf.mxu0
    %v2079 = vadd.f32 %v1144, %v2078
    %2080 = vdwg.mxu0
    %v2082 = vrot.slane %v2079, 1
    %v2083 = vperm.slane %v2079, 0
    %v2084 = vperm.slane %v2082, 0
    %v2087 = vadd.f32 %v2083, %v1136
    %v2088 = vadd.f32 %v2084, %v1139
    %v2089 = vtanh.pop %v2087
    %v2090 = vtanh.pop %v2088
    %v2091 = vmul.f32 %v2089, %v1186
    %v2092 = vmul.f32 %v2090, %v1186
    %v2093 = vsel %vm95, %v2091, 0.0
    %2094 = vadd.xlane.f32.xlu0 %v2093
    %v2095 = vpop.xlane.xlu0 %2094
    %v2096 = vsel %vm95, %v2092, 0.0
    %2097 = vadd.xlane.f32.xlu0 %v2096
    %v2098 = vpop.xlane.xlu0 %2097
    %v2099 = vadd.f32 %v2095, %v1200
    %v2100 = vadd.f32 %v2098, %v1200
    %v2103 = vperm.slane %v2099, %v1142
    %v2104 = vperm.slane %v2100, %v1142
    %v2105 = vsel %vm214, %v2104, %v2103
    %v2107 = vsel %vm1210, %v2105, -inf
    %2108 = vmax.xlane.f32.xlu0 %v2107
    %v2109 = vpop.xlane.xlu0 %2108
    %v2111 = vperm.slane %v2109, 0
    %v2112 = vperm.slane %v2109, 1
    %v2115 = vsub.f32 %v2099, %v2111
    %v2116 = vsub.f32 %v2100, %v2112
    %v2117 = vmul.f32 %v2115, 1.442695
    %v2118 = vpow.pop %v2117
    %v2119 = vmul.f32 %v2116, 1.442695
    %v2120 = vpow.pop %v2119
    %2123 = vset.pattern.permute.xlu0 0
    %2124 = vperm.xlu0 %2123, %v2118
    %v2125 = vpop.permute.xlu0 %2124
    %2126 = vset.pattern.permute.xlu0 0
    %2127 = vperm.xlu0 %2126, %v2120
    %v2128 = vpop.permute.xlu0 %2127
    %v2129 = vperm.slane %v2125, %v1142
    %v2130 = vperm.slane %v2128, %v1142
    %v2131 = vsel %vm214, %v2130, %v2129
    %v2133 = vsel %vm1210, %v2131, 0.0
    %2134 = vadd.xlane.f32.xlu0 %v2133
    %v2135 = vpop.xlane.xlu0 %2134
    %v2136 = vrcp.pop %v2135
    %v2138 = vperm.slane %v2136, 0
    %v2139 = vperm.slane %v2136, 1
    %v2142 = vmul.f32 %v2118, %v2138
    %v2143 = vmul.f32 %v2120, %v2139
    %2146 = vset.pattern.permute.xlu0 0
    %2147 = vperm.xlu0 %2146, %v2142
    %v2148 = vpop.permute.xlu0 %2147
    %2149 = vset.pattern.permute.xlu0 0
    %2150 = vperm.xlu0 %2149, %v2143
    %v2151 = vpop.permute.xlu0 %2150
    %v2152 = vperm.slane %v2148, %v1142
    %v2153 = vperm.slane %v2151, %v1142
    %v2154 = vsel %vm1258, %v2152, %v2152
    %v2155 = vsel %vm1260, %v2152, %v2154
    %v2156 = vsel %vm1262, %v2152, %v2155
    %v2157 = vsel %vm1264, %v2152, %v2156
    %v2158 = vsel %vm1266, %v2152, %v2157
    %v2159 = vsel %vm1268, %v2152, %v2158
    %v2160 = vsel %vm1258, %v2153, %v2153
    %v2161 = vsel %vm1260, %v2153, %v2160
    %v2162 = vsel %vm1262, %v2153, %v2161
    %v2163 = vsel %vm1264, %v2153, %v2162
    %v2164 = vsel %vm1266, %v2153, %v2163
    %v2165 = vsel %vm1268, %v2153, %v2164
    %v2168 = vsel %vm577, %v2159, 0.0
    %v2169 = vsel %vm577, %v2165, 0.0
    %v2170 = vadd.f32 %v1877, %v2168
    %v2171 = vadd.f32 %v1878, %v2169
    %v2174 = vmul.f32 %v1082, %v2148
    %v2175 = vmul.f32 %v1083, %v2151
    %v2176 = vsel %vm1286, %v2174, 0.0
    %v2177 = vrot.slane %v2176, 4
    %v2178 = vadd.f32 %v2176, %v2177
    %v2179 = vrot.slane %v2178, 2
    %v2180 = vadd.f32 %v2178, %v2179
    %v2181 = vrot.slane %v2180, 1
    %v2182 = vadd.f32 %v2180, %v2181
    %v2183 = vsel %vm1286, %v2175, 0.0
    %v2184 = vrot.slane %v2183, 4
    %v2185 = vadd.f32 %v2183, %v2184
    %v2186 = vrot.slane %v2185, 2
    %v2187 = vadd.f32 %v2185, %v2186
    %v2188 = vrot.slane %v2187, 1
    %v2189 = vadd.f32 %v2187, %v2188
    %v2192 = vsel %vm214, %v2189, %v2182
    %2193 = vrot.lane.b32.xlu0 %v2192, 32
    %v2194 = vpop.permute.xlu0 %2193
    %v2197 = vsel %vm214, %v2055, %v2049
    %v2199 = vsel %vm95, %v2194, 0
    %2201 = vmatpush.msra.mxu0 0.0
    %2202 = vmatpush.msra.mxu0 0.0
    %2203 = vmatpush.msra.mxu0 0.0
    %2204 = vmatpush.msra.mxu0 0.0
    %2205 = vmatpush.msra.mxu0 0.0
    %2206 = vmatpush.msra.mxu0 0.0
    %2207 = vmatpush.msra.mxu0 0.0
    %2208 = vmatpush.msra.mxu0 0.0
    %2209 = vmatpush.msra.mxu0 0.0
    %2210 = vmatpush.msra.mxu0 0.0
    %2211 = vmatpush.msra.mxu0 0.0
    %2212 = vmatpush.msra.mxu0 0.0
    %2213 = vmatpush.msra.mxu0 %v1099
    %2214 = vmatpush.msra.mxu0 %v1098
    %2215 = vmatpush.msra.mxu0 %v1097
    %2216 = vmatpush.msra.mxu0 %v1096
    %2217 = vmatmul.f32.gmra.mxu0 %v2199
    %v2218 = vpop.f32.mrf.mxu0
    %v2219 = vadd.f32 %v2197, %v2218
    %2220 = vdwg.mxu0
    %2221 = vmatpush.msra.mxu0 0.0
    %2222 = vmatpush.msra.mxu0 0.0
    %2223 = vmatpush.msra.mxu0 0.0
    %2224 = vmatpush.msra.mxu0 0.0
    %2225 = vmatpush.msra.mxu0 0.0
    %2226 = vmatpush.msra.mxu0 0.0
    %2227 = vmatpush.msra.mxu0 0.0
    %2228 = vmatpush.msra.mxu0 0.0
    %2229 = vmatpush.msra.mxu0 0.0
    %2230 = vmatpush.msra.mxu0 0.0
    %2231 = vmatpush.msra.mxu0 0.0
    %2232 = vmatpush.msra.mxu0 0.0
    %2233 = vmatpush.msra.mxu0 %v1103
    %2234 = vmatpush.msra.mxu0 %v1102
    %2235 = vmatpush.msra.mxu0 %v1101
    %2236 = vmatpush.msra.mxu0 %v1100
    %2237 = vmatmul.f32.gmra.mxu0 %v2059
    %v2238 = vpop.f32.mrf.mxu0
    %v2239 = vadd.f32 0.0, %v2238
    %2240 = vdwg.mxu0
    %v2241 = vadd.f32 %v2219, %v2239
    %v2242 = vadd.f32 %v2241, %v1349
    %v2243 = vxor.u32 %v2242, 2147483648
    %v2244 = vmul.f32 %v2243, 1.442695
    %v2245 = vpow.pop %v2244
    %v2246 = vadd.f32 %v2245, 1.0
    %v2247 = vrcp.pop %v2246
    %v2248 = vmul.f32 %v2246, %v2247
    %v2249 = vsub.f32 1.0, %v2248
    %v2250 = vmul.f32 %v2247, %v2249
    %v2251 = vadd.f32 %v2247, %v2250
    %vm2252 = vweird.f32 %v2246
    %vm2253 = vweird.f32 %v2247
    %vm2254 = vmor %vm2252, %vm2253
    %v2255 = vsel %vm2254, %v2247, %v2251
    %v2256 = vand.u32 2147483647, %v2246
    %vm2257 = vcmp.eq.f32.partialorder %v2256, 8.507059e+37
    %v2258 = vand.u32 %v2246, 2147483648
    %v2259 = vor.u32 1.1754944e-38, %v2258
    %v2260 = vsel %vm2257, %v2259, %v2255
    %v2261 = vmul.f32 1.0, %v2260
    %v2262 = vtanh.pop %v2242
    %v2263 = vmul.f32 %v2261, %v1980
    %2265 = vrot.lane.b32.xlu0 %v2262, 64
    %v2266 = vpop.permute.xlu0 %2265
    %v2268 = vmul.f32 %v2261, %v2266
    %2270 = vrot.lane.b32.xlu0 %v2268, 32
    %v2271 = vpop.permute.xlu0 %2270
    %v2273 = vadd.f32 %v2263, %v2271
    %v2274 = vtanh.pop %v2273
    %2276 = vrot.lane.b32.xlu0 %v2274, 64
    %v2277 = vpop.permute.xlu0 %2276
    %v2279 = vmul.f32 %v2261, %v2277
    %v2280 = vsel %vm214, %v2153, %v2152
    %v2282 = vsel %vm1210, %v2280, -inf
    %2283 = vmax.xlane.f32.xlu0 %v2282
    %v2284 = vpop.xlane.xlu0 %2283
    %v2286 = vperm.slane %v2284, 0
    %v2287 = vperm.slane %v2284, 1
    %vm2290 = vcmp.eq.f32.partialorder %v2142, %v2286
    %vm2291 = vcmp.eq.f32.partialorder %v2143, %v2287
    %v2292 = vsel %vm2290, %v1412, 8
    %v2293 = vsel %vm2291, %v1412, 8
    %2294 = vset.pattern.permute.xlu0 0
    %2295 = vperm.xlu0 %2294, %v2292
    %v2296 = vpop.permute.xlu0 %2295
    %2297 = vset.pattern.permute.xlu0 0
    %2298 = vperm.xlu0 %2297, %v2293
    %v2299 = vpop.permute.xlu0 %2298
    %v2300 = vperm.slane %v2296, %v1142
    %v2301 = vperm.slane %v2299, %v1142
    %v2302 = vsel %vm214, %v2301, %v2300
    %v2303 = vsel %vm1210, %v2302, 2147483647
    %v2304 = vand.u32 %v2303, 65535
    %v2305 = vshra.s32 %v2303, 16
    %v2306 = vcvt.s32.f32 %v2304
    %v2307 = vcvt.s32.f32 %v2305
    %2308 = vmin.xlane.f32.xlu0 %v2307
    %v2309 = vpop.xlane.xlu0 %2308
    %vm2310 = vcmp.eq.f32.partialorder %v2307, %v2309
    %v2311 = vsel %vm2310, %v2306, inf
    %2312 = vmin.xlane.f32.xlu0 %v2311
    %v2313 = vpop.xlane.xlu0 %2312
    %v2314 = vcvt.f32.s32 %v2313
    %v2315 = vcvt.f32.s32 %v2309
    %v2316 = vshll.u32 %v2315, 16
    %v2317 = vadd.s32 %v2316, %v2314
    %vm2318 = vcmp.eq.s32.totalorder %v1142, %v2317
    %v2319 = vsel %vm2318, 1, 0
    %v2320 = vcvt.s32.f32 %v2319
    %v2321 = vperm.slane %v2320, 0
    %v2322 = vlaneseq
    %v2323 = vshrl.u32 %v2322, 7
    %2325 = vset.pattern.permute.xlu0 %v2323
    %2326 = vperm.xlu0 %2325, %v2321
    %v2327 = vpop.permute.xlu0 %2326
    %v2328 = vperm.slane %v2320, 1
    %v2329 = vlaneseq
    %v2330 = vshrl.u32 %v2329, 7
    %2332 = vset.pattern.permute.xlu0 %v2330
    %2333 = vperm.xlu0 %2332, %v2328
    %v2334 = vpop.permute.xlu0 %2333
    %v2335 = vmul.f32 %v86, %v2327
    %v2336 = vmul.f32 %v87, %v2334
    %v2337 = vrot.slane %v2335, 4
    %v2338 = vadd.f32 %v2335, %v2337
    %v2339 = vrot.slane %v2338, 2
    %v2340 = vadd.f32 %v2338, %v2339
    %v2341 = vrot.slane %v2340, 1
    %v2342 = vadd.f32 %v2340, %v2341
    %v2343 = vrot.slane %v2336, 4
    %v2344 = vadd.f32 %v2336, %v2343
    %v2345 = vrot.slane %v2344, 2
    %v2346 = vadd.f32 %v2344, %v2345
    %v2347 = vrot.slane %v2346, 1
    %v2348 = vadd.f32 %v2346, %v2347
    %2350 = vrot.lane.b32.xlu0 %v2279, 32
    %v2351 = vpop.permute.xlu0 %2350
    %v2352 = vsel %vm95, %v2351, 0
    %2354 = vmatpush.msra.mxu0 0.0
    %2355 = vmatpush.msra.mxu0 0.0
    %2356 = vmatpush.msra.mxu0 0.0
    %2357 = vmatpush.msra.mxu0 0.0
    %2358 = vmatpush.msra.mxu0 0.0
    %2359 = vmatpush.msra.mxu0 0.0
    %2360 = vmatpush.msra.mxu0 0.0
    %2361 = vmatpush.msra.mxu0 0.0
    %2362 = vmatpush.msra.mxu0 0.0
    %2363 = vmatpush.msra.mxu0 0.0
    %2364 = vmatpush.msra.mxu0 0.0
    %2365 = vmatpush.msra.mxu0 0.0
    %2366 = vmatpush.msra.mxu0 %v1087
    %2367 = vmatpush.msra.mxu0 %v1086
    %2368 = vmatpush.msra.mxu0 %v1085
    %2369 = vmatpush.msra.mxu0 %v1084
    %2370 = vmatmul.f32.gmra.mxu0 %v2352
    %v2371 = vpop.f32.mrf.mxu0
    %v2372 = vadd.f32 %v1144, %v2371
    %2373 = vdwg.mxu0
    %v2375 = vrot.slane %v2372, 1
    %v2376 = vperm.slane %v2372, 0
    %v2377 = vperm.slane %v2375, 0
    %v2380 = vadd.f32 %v2376, %v1136
    %v2381 = vadd.f32 %v2377, %v1139
    %v2382 = vtanh.pop %v2380
    %v2383 = vtanh.pop %v2381
    %v2384 = vmul.f32 %v2382, %v1186
    %v2385 = vmul.f32 %v2383, %v1186
    %v2386 = vsel %vm95, %v2384, 0.0
    %2387 = vadd.xlane.f32.xlu0 %v2386
    %v2388 = vpop.xlane.xlu0 %2387
    %v2389 = vsel %vm95, %v2385, 0.0
    %2390 = vadd.xlane.f32.xlu0 %v2389
    %v2391 = vpop.xlane.xlu0 %2390
    %v2392 = vadd.f32 %v2388, %v1200
    %v2393 = vadd.f32 %v2391, %v1200
    %v2396 = vperm.slane %v2392, %v1142
    %v2397 = vperm.slane %v2393, %v1142
    %v2398 = vsel %vm214, %v2397, %v2396
    %v2400 = vsel %vm1210, %v2398, -inf
    %2401 = vmax.xlane.f32.xlu0 %v2400
    %v2402 = vpop.xlane.xlu0 %2401
    %v2404 = vperm.slane %v2402, 0
    %v2405 = vperm.slane %v2402, 1
    %v2408 = vsub.f32 %v2392, %v2404
    %v2409 = vsub.f32 %v2393, %v2405
    %v2410 = vmul.f32 %v2408, 1.442695
    %v2411 = vpow.pop %v2410
    %v2412 = vmul.f32 %v2409, 1.442695
    %v2413 = vpow.pop %v2412
    %2416 = vset.pattern.permute.xlu0 0
    %2417 = vperm.xlu0 %2416, %v2411
    %v2418 = vpop.permute.xlu0 %2417
    %2419 = vset.pattern.permute.xlu0 0
    %2420 = vperm.xlu0 %2419, %v2413
    %v2421 = vpop.permute.xlu0 %2420
    %v2422 = vperm.slane %v2418, %v1142
    %v2423 = vperm.slane %v2421, %v1142
    %v2424 = vsel %vm214, %v2423, %v2422
    %v2426 = vsel %vm1210, %v2424, 0.0
    %2427 = vadd.xlane.f32.xlu0 %v2426
    %v2428 = vpop.xlane.xlu0 %2427
    %v2429 = vrcp.pop %v2428
    %v2431 = vperm.slane %v2429, 0
    %v2432 = vperm.slane %v2429, 1
    %v2435 = vmul.f32 %v2411, %v2431
    %v2436 = vmul.f32 %v2413, %v2432
    %2439 = vset.pattern.permute.xlu0 0
    %2440 = vperm.xlu0 %2439, %v2435
    %v2441 = vpop.permute.xlu0 %2440
    %2442 = vset.pattern.permute.xlu0 0
    %2443 = vperm.xlu0 %2442, %v2436
    %v2444 = vpop.permute.xlu0 %2443
    %v2445 = vperm.slane %v2441, %v1142
    %v2446 = vperm.slane %v2444, %v1142
    %v2447 = vsel %vm1258, %v2445, %v2445
    %v2448 = vsel %vm1260, %v2445, %v2447
    %v2449 = vsel %vm1262, %v2445, %v2448
    %v2450 = vsel %vm1264, %v2445, %v2449
    %v2451 = vsel %vm1266, %v2445, %v2450
    %v2452 = vsel %vm1268, %v2445, %v2451
    %v2453 = vsel %vm1258, %v2446, %v2446
    %v2454 = vsel %vm1260, %v2446, %v2453
    %v2455 = vsel %vm1262, %v2446, %v2454
    %v2456 = vsel %vm1264, %v2446, %v2455
    %v2457 = vsel %vm1266, %v2446, %v2456
    %v2458 = vsel %vm1268, %v2446, %v2457
    %v2461 = vsel %vm702, %v2452, 0.0
    %v2462 = vsel %vm702, %v2458, 0.0
    %v2463 = vadd.f32 %v2170, %v2461
    %v2464 = vadd.f32 %v2171, %v2462
    %v2467 = vmul.f32 %v1082, %v2441
    %v2468 = vmul.f32 %v1083, %v2444
    %v2469 = vsel %vm1286, %v2467, 0.0
    %v2470 = vrot.slane %v2469, 4
    %v2471 = vadd.f32 %v2469, %v2470
    %v2472 = vrot.slane %v2471, 2
    %v2473 = vadd.f32 %v2471, %v2472
    %v2474 = vrot.slane %v2473, 1
    %v2475 = vadd.f32 %v2473, %v2474
    %v2476 = vsel %vm1286, %v2468, 0.0
    %v2477 = vrot.slane %v2476, 4
    %v2478 = vadd.f32 %v2476, %v2477
    %v2479 = vrot.slane %v2478, 2
    %v2480 = vadd.f32 %v2478, %v2479
    %v2481 = vrot.slane %v2480, 1
    %v2482 = vadd.f32 %v2480, %v2481
    %v2485 = vsel %vm214, %v2482, %v2475
    %2486 = vrot.lane.b32.xlu0 %v2485, 32
    %v2487 = vpop.permute.xlu0 %2486
    %v2490 = vsel %vm214, %v2348, %v2342
    %v2492 = vsel %vm95, %v2487, 0
    %2494 = vmatpush.msra.mxu0 0.0
    %2495 = vmatpush.msra.mxu0 0.0
    %2496 = vmatpush.msra.mxu0 0.0
    %2497 = vmatpush.msra.mxu0 0.0
    %2498 = vmatpush.msra.mxu0 0.0
    %2499 = vmatpush.msra.mxu0 0.0
    %2500 = vmatpush.msra.mxu0 0.0
    %2501 = vmatpush.msra.mxu0 0.0
    %2502 = vmatpush.msra.mxu0 0.0
    %2503 = vmatpush.msra.mxu0 0.0
    %2504 = vmatpush.msra.mxu0 0.0
    %2505 = vmatpush.msra.mxu0 0.0
    %2506 = vmatpush.msra.mxu0 %v1099
    %2507 = vmatpush.msra.mxu0 %v1098
    %2508 = vmatpush.msra.mxu0 %v1097
    %2509 = vmatpush.msra.mxu0 %v1096
    %2510 = vmatmul.f32.gmra.mxu0 %v2492
    %v2511 = vpop.f32.mrf.mxu0
    %v2512 = vadd.f32 %v2490, %v2511
    %2513 = vdwg.mxu0
    %2514 = vmatpush.msra.mxu0 0.0
    %2515 = vmatpush.msra.mxu0 0.0
    %2516 = vmatpush.msra.mxu0 0.0
    %2517 = vmatpush.msra.mxu0 0.0
    %2518 = vmatpush.msra.mxu0 0.0
    %2519 = vmatpush.msra.mxu0 0.0
    %2520 = vmatpush.msra.mxu0 0.0
    %2521 = vmatpush.msra.mxu0 0.0
    %2522 = vmatpush.msra.mxu0 0.0
    %2523 = vmatpush.msra.mxu0 0.0
    %2524 = vmatpush.msra.mxu0 0.0
    %2525 = vmatpush.msra.mxu0 0.0
    %2526 = vmatpush.msra.mxu0 %v1103
    %2527 = vmatpush.msra.mxu0 %v1102
    %2528 = vmatpush.msra.mxu0 %v1101
    %2529 = vmatpush.msra.mxu0 %v1100
    %2530 = vmatmul.f32.gmra.mxu0 %v2352
    %v2531 = vpop.f32.mrf.mxu0
    %v2532 = vadd.f32 0.0, %v2531
    %2533 = vdwg.mxu0
    %v2534 = vadd.f32 %v2512, %v2532
    %v2535 = vadd.f32 %v2534, %v1349
    %v2536 = vxor.u32 %v2535, 2147483648
    %v2537 = vmul.f32 %v2536, 1.442695
    %v2538 = vpow.pop %v2537
    %v2539 = vadd.f32 %v2538, 1.0
    %v2540 = vrcp.pop %v2539
    %v2541 = vmul.f32 %v2539, %v2540
    %v2542 = vsub.f32 1.0, %v2541
    %v2543 = vmul.f32 %v2540, %v2542
    %v2544 = vadd.f32 %v2540, %v2543
    %vm2545 = vweird.f32 %v2539
    %vm2546 = vweird.f32 %v2540
    %vm2547 = vmor %vm2545, %vm2546
    %v2548 = vsel %vm2547, %v2540, %v2544
    %v2549 = vand.u32 2147483647, %v2539
    %vm2550 = vcmp.eq.f32.partialorder %v2549, 8.507059e+37
    %v2551 = vand.u32 %v2539, 2147483648
    %v2552 = vor.u32 1.1754944e-38, %v2551
    %v2553 = vsel %vm2550, %v2552, %v2548
    %v2554 = vmul.f32 1.0, %v2553
    %v2555 = vtanh.pop %v2535
    %v2556 = vmul.f32 %v2554, %v2273
    %2558 = vrot.lane.b32.xlu0 %v2555, 64
    %v2559 = vpop.permute.xlu0 %2558
    %v2561 = vmul.f32 %v2554, %v2559
    %2563 = vrot.lane.b32.xlu0 %v2561, 32
    %v2564 = vpop.permute.xlu0 %2563
    %v2566 = vadd.f32 %v2556, %v2564
    %v2567 = vtanh.pop %v2566
    %2569 = vrot.lane.b32.xlu0 %v2567, 64
    %v2570 = vpop.permute.xlu0 %2569
    %v2572 = vmul.f32 %v2554, %v2570
    %v2573 = vsel %vm214, %v2446, %v2445
    %v2575 = vsel %vm1210, %v2573, -inf
    %2576 = vmax.xlane.f32.xlu0 %v2575
    %v2577 = vpop.xlane.xlu0 %2576
    %v2579 = vperm.slane %v2577, 0
    %v2580 = vperm.slane %v2577, 1
    %vm2583 = vcmp.eq.f32.partialorder %v2435, %v2579
    %vm2584 = vcmp.eq.f32.partialorder %v2436, %v2580
    %v2585 = vsel %vm2583, %v1412, 8
    %v2586 = vsel %vm2584, %v1412, 8
    %2587 = vset.pattern.permute.xlu0 0
    %2588 = vperm.xlu0 %2587, %v2585
    %v2589 = vpop.permute.xlu0 %2588
    %2590 = vset.pattern.permute.xlu0 0
    %2591 = vperm.xlu0 %2590, %v2586
    %v2592 = vpop.permute.xlu0 %2591
    %v2593 = vperm.slane %v2589, %v1142
    %v2594 = vperm.slane %v2592, %v1142
    %v2595 = vsel %vm214, %v2594, %v2593
    %v2596 = vsel %vm1210, %v2595, 2147483647
    %v2597 = vand.u32 %v2596, 65535
    %v2598 = vshra.s32 %v2596, 16
    %v2599 = vcvt.s32.f32 %v2597
    %v2600 = vcvt.s32.f32 %v2598
    %2601 = vmin.xlane.f32.xlu0 %v2600
    %v2602 = vpop.xlane.xlu0 %2601
    %vm2603 = vcmp.eq.f32.partialorder %v2600, %v2602
    %v2604 = vsel %vm2603, %v2599, inf
    %2605 = vmin.xlane.f32.xlu0 %v2604
    %v2606 = vpop.xlane.xlu0 %2605
    %v2607 = vcvt.f32.s32 %v2606
    %v2608 = vcvt.f32.s32 %v2602
    %v2609 = vshll.u32 %v2608, 16
    %v2610 = vadd.s32 %v2609, %v2607
    %vm2611 = vcmp.eq.s32.totalorder %v1142, %v2610
    %v2612 = vsel %vm2611, 1, 0
    %v2613 = vcvt.s32.f32 %v2612
    %v2614 = vperm.slane %v2613, 0
    %v2615 = vlaneseq
    %v2616 = vshrl.u32 %v2615, 7
    %2618 = vset.pattern.permute.xlu0 %v2616
    %2619 = vperm.xlu0 %2618, %v2614
    %v2620 = vpop.permute.xlu0 %2619
    %v2621 = vperm.slane %v2613, 1
    %v2622 = vlaneseq
    %v2623 = vshrl.u32 %v2622, 7
    %2625 = vset.pattern.permute.xlu0 %v2623
    %2626 = vperm.xlu0 %2625, %v2621
    %v2627 = vpop.permute.xlu0 %2626
    %v2628 = vmul.f32 %v86, %v2620
    %v2629 = vmul.f32 %v87, %v2627
    %v2630 = vrot.slane %v2628, 4
    %v2631 = vadd.f32 %v2628, %v2630
    %v2632 = vrot.slane %v2631, 2
    %v2633 = vadd.f32 %v2631, %v2632
    %v2634 = vrot.slane %v2633, 1
    %v2635 = vadd.f32 %v2633, %v2634
    %v2636 = vrot.slane %v2629, 4
    %v2637 = vadd.f32 %v2629, %v2636
    %v2638 = vrot.slane %v2637, 2
    %v2639 = vadd.f32 %v2637, %v2638
    %v2640 = vrot.slane %v2639, 1
    %v2641 = vadd.f32 %v2639, %v2640
    %2643 = vrot.lane.b32.xlu0 %v2572, 32
    %v2644 = vpop.permute.xlu0 %2643
    %v2645 = vsel %vm95, %v2644, 0
    %2647 = vmatpush.msra.mxu0 0.0
    %2648 = vmatpush.msra.mxu0 0.0
    %2649 = vmatpush.msra.mxu0 0.0
    %2650 = vmatpush.msra.mxu0 0.0
    %2651 = vmatpush.msra.mxu0 0.0
    %2652 = vmatpush.msra.mxu0 0.0
    %2653 = vmatpush.msra.mxu0 0.0
    %2654 = vmatpush.msra.mxu0 0.0
    %2655 = vmatpush.msra.mxu0 0.0
    %2656 = vmatpush.msra.mxu0 0.0
    %2657 = vmatpush.msra.mxu0 0.0
    %2658 = vmatpush.msra.mxu0 0.0
    %2659 = vmatpush.msra.mxu0 %v1087
    %2660 = vmatpush.msra.mxu0 %v1086
    %2661 = vmatpush.msra.mxu0 %v1085
    %2662 = vmatpush.msra.mxu0 %v1084
    %2663 = vmatmul.f32.gmra.mxu0 %v2645
    %v2664 = vpop.f32.mrf.mxu0
    %v2665 = vadd.f32 %v1144, %v2664
    %2666 = vdwg.mxu0
    %v2668 = vrot.slane %v2665, 1
    %v2669 = vperm.slane %v2665, 0
    %v2670 = vperm.slane %v2668, 0
    %v2673 = vadd.f32 %v2669, %v1136
    %v2674 = vadd.f32 %v2670, %v1139
    %v2675 = vtanh.pop %v2673
    %v2676 = vtanh.pop %v2674
    %v2677 = vmul.f32 %v2675, %v1186
    %v2678 = vmul.f32 %v2676, %v1186
    %v2679 = vsel %vm95, %v2677, 0.0
    %2680 = vadd.xlane.f32.xlu0 %v2679
    %v2681 = vpop.xlane.xlu0 %2680
    %v2682 = vsel %vm95, %v2678, 0.0
    %2683 = vadd.xlane.f32.xlu0 %v2682
    %v2684 = vpop.xlane.xlu0 %2683
    %v2685 = vadd.f32 %v2681, %v1200
    %v2686 = vadd.f32 %v2684, %v1200
    %v2689 = vperm.slane %v2685, %v1142
    %v2690 = vperm.slane %v2686, %v1142
    %v2691 = vsel %vm214, %v2690, %v2689
    %v2693 = vsel %vm1210, %v2691, -inf
    %2694 = vmax.xlane.f32.xlu0 %v2693
    %v2695 = vpop.xlane.xlu0 %2694
    %v2697 = vperm.slane %v2695, 0
    %v2698 = vperm.slane %v2695, 1
    %v2701 = vsub.f32 %v2685, %v2697
    %v2702 = vsub.f32 %v2686, %v2698
    %v2703 = vmul.f32 %v2701, 1.442695
    %v2704 = vpow.pop %v2703
    %v2705 = vmul.f32 %v2702, 1.442695
    %v2706 = vpow.pop %v2705
    %2709 = vset.pattern.permute.xlu0 0
    %2710 = vperm.xlu0 %2709, %v2704
    %v2711 = vpop.permute.xlu0 %2710
    %2712 = vset.pattern.permute.xlu0 0
    %2713 = vperm.xlu0 %2712, %v2706
    %v2714 = vpop.permute.xlu0 %2713
    %v2715 = vperm.slane %v2711, %v1142
    %v2716 = vperm.slane %v2714, %v1142
    %v2717 = vsel %vm214, %v2716, %v2715
    %v2719 = vsel %vm1210, %v2717, 0.0
    %2720 = vadd.xlane.f32.xlu0 %v2719
    %v2721 = vpop.xlane.xlu0 %2720
    %v2722 = vrcp.pop %v2721
    %v2724 = vperm.slane %v2722, 0
    %v2725 = vperm.slane %v2722, 1
    %v2728 = vmul.f32 %v2704, %v2724
    %v2729 = vmul.f32 %v2706, %v2725
    %2732 = vset.pattern.permute.xlu0 0
    %2733 = vperm.xlu0 %2732, %v2728
    %v2734 = vpop.permute.xlu0 %2733
    %2735 = vset.pattern.permute.xlu0 0
    %2736 = vperm.xlu0 %2735, %v2729
    %v2737 = vpop.permute.xlu0 %2736
    %v2738 = vperm.slane %v2734, %v1142
    %v2739 = vperm.slane %v2737, %v1142
    %v2740 = vsel %vm1258, %v2738, %v2738
    %v2741 = vsel %vm1260, %v2738, %v2740
    %v2742 = vsel %vm1262, %v2738, %v2741
    %v2743 = vsel %vm1264, %v2738, %v2742
    %v2744 = vsel %vm1266, %v2738, %v2743
    %v2745 = vsel %vm1268, %v2738, %v2744
    %v2746 = vsel %vm1258, %v2739, %v2739
    %v2747 = vsel %vm1260, %v2739, %v2746
    %v2748 = vsel %vm1262, %v2739, %v2747
    %v2749 = vsel %vm1264, %v2739, %v2748
    %v2750 = vsel %vm1266, %v2739, %v2749
    %v2751 = vsel %vm1268, %v2739, %v2750
    %v2754 = vsel %vm827, %v2745, 0.0
    %v2755 = vsel %vm827, %v2751, 0.0
    %v2756 = vadd.f32 %v2463, %v2754
    %v2757 = vadd.f32 %v2464, %v2755
    %v2760 = vmul.f32 %v1082, %v2734
    %v2761 = vmul.f32 %v1083, %v2737
    %v2762 = vsel %vm1286, %v2760, 0.0
    %v2763 = vrot.slane %v2762, 4
    %v2764 = vadd.f32 %v2762, %v2763
    %v2765 = vrot.slane %v2764, 2
    %v2766 = vadd.f32 %v2764, %v2765
    %v2767 = vrot.slane %v2766, 1
    %v2768 = vadd.f32 %v2766, %v2767
    %v2769 = vsel %vm1286, %v2761, 0.0
    %v2770 = vrot.slane %v2769, 4
    %v2771 = vadd.f32 %v2769, %v2770
    %v2772 = vrot.slane %v2771, 2
    %v2773 = vadd.f32 %v2771, %v2772
    %v2774 = vrot.slane %v2773, 1
    %v2775 = vadd.f32 %v2773, %v2774
    %v2778 = vsel %vm214, %v2775, %v2768
    %2779 = vrot.lane.b32.xlu0 %v2778, 32
    %v2780 = vpop.permute.xlu0 %2779
    %v2783 = vsel %vm214, %v2641, %v2635
    %v2785 = vsel %vm95, %v2780, 0
    %2787 = vmatpush.msra.mxu0 0.0
    %2788 = vmatpush.msra.mxu0 0.0
    %2789 = vmatpush.msra.mxu0 0.0
    %2790 = vmatpush.msra.mxu0 0.0
    %2791 = vmatpush.msra.mxu0 0.0
    %2792 = vmatpush.msra.mxu0 0.0
    %2793 = vmatpush.msra.mxu0 0.0
    %2794 = vmatpush.msra.mxu0 0.0
    %2795 = vmatpush.msra.mxu0 0.0
    %2796 = vmatpush.msra.mxu0 0.0
    %2797 = vmatpush.msra.mxu0 0.0
    %2798 = vmatpush.msra.mxu0 0.0
    %2799 = vmatpush.msra.mxu0 %v1099
    %2800 = vmatpush.msra.mxu0 %v1098
    %2801 = vmatpush.msra.mxu0 %v1097
    %2802 = vmatpush.msra.mxu0 %v1096
    %2803 = vmatmul.f32.gmra.mxu0 %v2785
    %v2804 = vpop.f32.mrf.mxu0
    %v2805 = vadd.f32 %v2783, %v2804
    %2806 = vdwg.mxu0
    %2807 = vmatpush.msra.mxu0 0.0
    %2808 = vmatpush.msra.mxu0 0.0
    %2809 = vmatpush.msra.mxu0 0.0
    %2810 = vmatpush.msra.mxu0 0.0
    %2811 = vmatpush.msra.mxu0 0.0
    %2812 = vmatpush.msra.mxu0 0.0
    %2813 = vmatpush.msra.mxu0 0.0
    %2814 = vmatpush.msra.mxu0 0.0
    %2815 = vmatpush.msra.mxu0 0.0
    %2816 = vmatpush.msra.mxu0 0.0
    %2817 = vmatpush.msra.mxu0 0.0
    %2818 = vmatpush.msra.mxu0 0.0
    %2819 = vmatpush.msra.mxu0 %v1103
    %2820 = vmatpush.msra.mxu0 %v1102
    %2821 = vmatpush.msra.mxu0 %v1101
    %2822 = vmatpush.msra.mxu0 %v1100
    %2823 = vmatmul.f32.gmra.mxu0 %v2645
    %v2824 = vpop.f32.mrf.mxu0
    %v2825 = vadd.f32 0.0, %v2824
    %2826 = vdwg.mxu0
    %v2827 = vadd.f32 %v2805, %v2825
    %v2828 = vadd.f32 %v2827, %v1349
    %v2829 = vxor.u32 %v2828, 2147483648
    %v2830 = vmul.f32 %v2829, 1.442695
    %v2831 = vpow.pop %v2830
    %v2832 = vadd.f32 %v2831, 1.0
    %v2833 = vrcp.pop %v2832
    %v2834 = vmul.f32 %v2832, %v2833
    %v2835 = vsub.f32 1.0, %v2834
    %v2836 = vmul.f32 %v2833, %v2835
    %v2837 = vadd.f32 %v2833, %v2836
    %vm2838 = vweird.f32 %v2832
    %vm2839 = vweird.f32 %v2833
    %vm2840 = vmor %vm2838, %vm2839
    %v2841 = vsel %vm2840, %v2833, %v2837
    %v2842 = vand.u32 2147483647, %v2832
    %vm2843 = vcmp.eq.f32.partialorder %v2842, 8.507059e+37
    %v2844 = vand.u32 %v2832, 2147483648
    %v2845 = vor.u32 1.1754944e-38, %v2844
    %v2846 = vsel %vm2843, %v2845, %v2841
    %v2847 = vmul.f32 1.0, %v2846
    %v2848 = vtanh.pop %v2828
    %v2849 = vmul.f32 %v2847, %v2566
    %2851 = vrot.lane.b32.xlu0 %v2848, 64
    %v2852 = vpop.permute.xlu0 %2851
    %v2854 = vmul.f32 %v2847, %v2852
    %2856 = vrot.lane.b32.xlu0 %v2854, 32
    %v2857 = vpop.permute.xlu0 %2856
    %v2859 = vadd.f32 %v2849, %v2857
    %v2860 = vtanh.pop %v2859
    %2862 = vrot.lane.b32.xlu0 %v2860, 64
    %v2863 = vpop.permute.xlu0 %2862
    %v2865 = vmul.f32 %v2847, %v2863
    %v2866 = vsel %vm214, %v2739, %v2738
    %v2868 = vsel %vm1210, %v2866, -inf
    %2869 = vmax.xlane.f32.xlu0 %v2868
    %v2870 = vpop.xlane.xlu0 %2869
    %v2872 = vperm.slane %v2870, 0
    %v2873 = vperm.slane %v2870, 1
    %vm2876 = vcmp.eq.f32.partialorder %v2728, %v2872
    %vm2877 = vcmp.eq.f32.partialorder %v2729, %v2873
    %v2878 = vsel %vm2876, %v1412, 8
    %v2879 = vsel %vm2877, %v1412, 8
    %2880 = vset.pattern.permute.xlu0 0
    %2881 = vperm.xlu0 %2880, %v2878
    %v2882 = vpop.permute.xlu0 %2881
    %2883 = vset.pattern.permute.xlu0 0
    %2884 = vperm.xlu0 %2883, %v2879
    %v2885 = vpop.permute.xlu0 %2884
    %v2886 = vperm.slane %v2882, %v1142
    %v2887 = vperm.slane %v2885, %v1142
    %v2888 = vsel %vm214, %v2887, %v2886
    %v2889 = vsel %vm1210, %v2888, 2147483647
    %v2890 = vand.u32 %v2889, 65535
    %v2891 = vshra.s32 %v2889, 16
    %v2892 = vcvt.s32.f32 %v2890
    %v2893 = vcvt.s32.f32 %v2891
    %2894 = vmin.xlane.f32.xlu0 %v2893
    %v2895 = vpop.xlane.xlu0 %2894
    %vm2896 = vcmp.eq.f32.partialorder %v2893, %v2895
    %v2897 = vsel %vm2896, %v2892, inf
    %2898 = vmin.xlane.f32.xlu0 %v2897
    %v2899 = vpop.xlane.xlu0 %2898
    %v2900 = vcvt.f32.s32 %v2899
    %v2901 = vcvt.f32.s32 %v2895
    %v2902 = vshll.u32 %v2901, 16
    %v2903 = vadd.s32 %v2902, %v2900
    %vm2904 = vcmp.eq.s32.totalorder %v1142, %v2903
    %v2905 = vsel %vm2904, 1, 0
    %v2906 = vcvt.s32.f32 %v2905
    %v2907 = vperm.slane %v2906, 0
    %v2908 = vlaneseq
    %v2909 = vshrl.u32 %v2908, 7
    %2911 = vset.pattern.permute.xlu0 %v2909
    %2912 = vperm.xlu0 %2911, %v2907
    %v2913 = vpop.permute.xlu0 %2912
    %v2914 = vperm.slane %v2906, 1
    %v2915 = vlaneseq
    %v2916 = vshrl.u32 %v2915, 7
    %2918 = vset.pattern.permute.xlu0 %v2916
    %2919 = vperm.xlu0 %2918, %v2914
    %v2920 = vpop.permute.xlu0 %2919
    %v2921 = vmul.f32 %v86, %v2913
    %v2922 = vmul.f32 %v87, %v2920
    %v2923 = vrot.slane %v2921, 4
    %v2924 = vadd.f32 %v2921, %v2923
    %v2925 = vrot.slane %v2924, 2
    %v2926 = vadd.f32 %v2924, %v2925
    %v2927 = vrot.slane %v2926, 1
    %v2928 = vadd.f32 %v2926, %v2927
    %v2929 = vrot.slane %v2922, 4
    %v2930 = vadd.f32 %v2922, %v2929
    %v2931 = vrot.slane %v2930, 2
    %v2932 = vadd.f32 %v2930, %v2931
    %v2933 = vrot.slane %v2932, 1
    %v2934 = vadd.f32 %v2932, %v2933
    %2936 = vrot.lane.b32.xlu0 %v2865, 32
    %v2937 = vpop.permute.xlu0 %2936
    %v2938 = vsel %vm95, %v2937, 0
    %2940 = vmatpush.msra.mxu0 0.0
    %2941 = vmatpush.msra.mxu0 0.0
    %2942 = vmatpush.msra.mxu0 0.0
    %2943 = vmatpush.msra.mxu0 0.0
    %2944 = vmatpush.msra.mxu0 0.0
    %2945 = vmatpush.msra.mxu0 0.0
    %2946 = vmatpush.msra.mxu0 0.0
    %2947 = vmatpush.msra.mxu0 0.0
    %2948 = vmatpush.msra.mxu0 0.0
    %2949 = vmatpush.msra.mxu0 0.0
    %2950 = vmatpush.msra.mxu0 0.0
    %2951 = vmatpush.msra.mxu0 0.0
    %2952 = vmatpush.msra.mxu0 %v1087
    %2953 = vmatpush.msra.mxu0 %v1086
    %2954 = vmatpush.msra.mxu0 %v1085
    %2955 = vmatpush.msra.mxu0 %v1084
    %2956 = vmatmul.f32.gmra.mxu0 %v2938
    %v2957 = vpop.f32.mrf.mxu0
    %v2958 = vadd.f32 %v1144, %v2957
    %2959 = vdwg.mxu0
    %v2961 = vrot.slane %v2958, 1
    %v2962 = vperm.slane %v2958, 0
    %v2963 = vperm.slane %v2961, 0
    %v2966 = vadd.f32 %v2962, %v1136
    %v2967 = vadd.f32 %v2963, %v1139
    %v2968 = vtanh.pop %v2966
    %v2969 = vtanh.pop %v2967
    %v2970 = vmul.f32 %v2968, %v1186
    %v2971 = vmul.f32 %v2969, %v1186
    %v2972 = vsel %vm95, %v2970, 0.0
    %2973 = vadd.xlane.f32.xlu0 %v2972
    %v2974 = vpop.xlane.xlu0 %2973
    %v2975 = vsel %vm95, %v2971, 0.0
    %2976 = vadd.xlane.f32.xlu0 %v2975
    %v2977 = vpop.xlane.xlu0 %2976
    %v2978 = vadd.f32 %v2974, %v1200
    %v2979 = vadd.f32 %v2977, %v1200
    %v2982 = vperm.slane %v2978, %v1142
    %v2983 = vperm.slane %v2979, %v1142
    %v2984 = vsel %vm214, %v2983, %v2982
    %v2986 = vsel %vm1210, %v2984, -inf
    %2987 = vmax.xlane.f32.xlu0 %v2986
    %v2988 = vpop.xlane.xlu0 %2987
    %v2990 = vperm.slane %v2988, 0
    %v2991 = vperm.slane %v2988, 1
    %v2994 = vsub.f32 %v2978, %v2990
    %v2995 = vsub.f32 %v2979, %v2991
    %v2996 = vmul.f32 %v2994, 1.442695
    %v2997 = vpow.pop %v2996
    %v2998 = vmul.f32 %v2995, 1.442695
    %v2999 = vpow.pop %v2998
    %3002 = vset.pattern.permute.xlu0 0
    %3003 = vperm.xlu0 %3002, %v2997
    %v3004 = vpop.permute.xlu0 %3003
    %3005 = vset.pattern.permute.xlu0 0
    %3006 = vperm.xlu0 %3005, %v2999
    %v3007 = vpop.permute.xlu0 %3006
    %v3008 = vperm.slane %v3004, %v1142
    %v3009 = vperm.slane %v3007, %v1142
    %v3010 = vsel %vm214, %v3009, %v3008
    %v3012 = vsel %vm1210, %v3010, 0.0
    %3013 = vadd.xlane.f32.xlu0 %v3012
    %v3014 = vpop.xlane.xlu0 %3013
    %v3015 = vrcp.pop %v3014
    %v3017 = vperm.slane %v3015, 0
    %v3018 = vperm.slane %v3015, 1
    %v3021 = vmul.f32 %v2997, %v3017
    %v3022 = vmul.f32 %v2999, %v3018
    %3025 = vset.pattern.permute.xlu0 0
    %3026 = vperm.xlu0 %3025, %v3021
    %v3027 = vpop.permute.xlu0 %3026
    %3028 = vset.pattern.permute.xlu0 0
    %3029 = vperm.xlu0 %3028, %v3022
    %v3030 = vpop.permute.xlu0 %3029
    %v3031 = vperm.slane %v3027, %v1142
    %v3032 = vperm.slane %v3030, %v1142
    %v3033 = vsel %vm1258, %v3031, %v3031
    %v3034 = vsel %vm1260, %v3031, %v3033
    %v3035 = vsel %vm1262, %v3031, %v3034
    %v3036 = vsel %vm1264, %v3031, %v3035
    %v3037 = vsel %vm1266, %v3031, %v3036
    %v3038 = vsel %vm1268, %v3031, %v3037
    %v3039 = vsel %vm1258, %v3032, %v3032
    %v3040 = vsel %vm1260, %v3032, %v3039
    %v3041 = vsel %vm1262, %v3032, %v3040
    %v3042 = vsel %vm1264, %v3032, %v3041
    %v3043 = vsel %vm1266, %v3032, %v3042
    %v3044 = vsel %vm1268, %v3032, %v3043
    %v3047 = vsel %vm952, %v3038, 0.0
    %v3048 = vsel %vm952, %v3044, 0.0
    %v3049 = vadd.f32 %v2756, %v3047
    %v3050 = vadd.f32 %v2757, %v3048
    %v3053 = vmul.f32 %v1082, %v3027
    %v3054 = vmul.f32 %v1083, %v3030
    %v3055 = vsel %vm1286, %v3053, 0.0
    %v3056 = vrot.slane %v3055, 4
    %v3057 = vadd.f32 %v3055, %v3056
    %v3058 = vrot.slane %v3057, 2
    %v3059 = vadd.f32 %v3057, %v3058
    %v3060 = vrot.slane %v3059, 1
    %v3061 = vadd.f32 %v3059, %v3060
    %v3062 = vsel %vm1286, %v3054, 0.0
    %v3063 = vrot.slane %v3062, 4
    %v3064 = vadd.f32 %v3062, %v3063
    %v3065 = vrot.slane %v3064, 2
    %v3066 = vadd.f32 %v3064, %v3065
    %v3067 = vrot.slane %v3066, 1
    %v3068 = vadd.f32 %v3066, %v3067
    %v3071 = vsel %vm214, %v3068, %v3061
    %3072 = vrot.lane.b32.xlu0 %v3071, 32
    %v3073 = vpop.permute.xlu0 %3072
    %v3076 = vsel %vm214, %v2934, %v2928
    %v3078 = vsel %vm95, %v3073, 0
    %3080 = vmatpush.msra.mxu0 0.0
    %3081 = vmatpush.msra.mxu0 0.0
    %3082 = vmatpush.msra.mxu0 0.0
    %3083 = vmatpush.msra.mxu0 0.0
    %3084 = vmatpush.msra.mxu0 0.0
    %3085 = vmatpush.msra.mxu0 0.0
    %3086 = vmatpush.msra.mxu0 0.0
    %3087 = vmatpush.msra.mxu0 0.0
    %3088 = vmatpush.msra.mxu0 0.0
    %3089 = vmatpush.msra.mxu0 0.0
    %3090 = vmatpush.msra.mxu0 0.0
    %3091 = vmatpush.msra.mxu0 0.0
    %3092 = vmatpush.msra.mxu0 %v1099
    %3093 = vmatpush.msra.mxu0 %v1098
    %3094 = vmatpush.msra.mxu0 %v1097
    %3095 = vmatpush.msra.mxu0 %v1096
    %3096 = vmatmul.f32.gmra.mxu0 %v3078
    %v3097 = vpop.f32.mrf.mxu0
    %v3098 = vadd.f32 %v3076, %v3097
    %3099 = vdwg.mxu0
    %3100 = vmatpush.msra.mxu0 0.0
    %3101 = vmatpush.msra.mxu0 0.0
    %3102 = vmatpush.msra.mxu0 0.0
    %3103 = vmatpush.msra.mxu0 0.0
    %3104 = vmatpush.msra.mxu0 0.0
    %3105 = vmatpush.msra.mxu0 0.0
    %3106 = vmatpush.msra.mxu0 0.0
    %3107 = vmatpush.msra.mxu0 0.0
    %3108 = vmatpush.msra.mxu0 0.0
    %3109 = vmatpush.msra.mxu0 0.0
    %3110 = vmatpush.msra.mxu0 0.0
    %3111 = vmatpush.msra.mxu0 0.0
    %3112 = vmatpush.msra.mxu0 %v1103
    %3113 = vmatpush.msra.mxu0 %v1102
    %3114 = vmatpush.msra.mxu0 %v1101
    %3115 = vmatpush.msra.mxu0 %v1100
    %3116 = vmatmul.f32.gmra.mxu0 %v2938
    %v3117 = vpop.f32.mrf.mxu0
    %v3118 = vadd.f32 0.0, %v3117
    %3119 = vdwg.mxu0
    %v3120 = vadd.f32 %v3098, %v3118
    %v3121 = vadd.f32 %v3120, %v1349
    %v3122 = vxor.u32 %v3121, 2147483648
    %v3123 = vmul.f32 %v3122, 1.442695
    %v3124 = vpow.pop %v3123
    %v3125 = vadd.f32 %v3124, 1.0
    %v3126 = vrcp.pop %v3125
    %v3127 = vmul.f32 %v3125, %v3126
    %v3128 = vsub.f32 1.0, %v3127
    %v3129 = vmul.f32 %v3126, %v3128
    %v3130 = vadd.f32 %v3126, %v3129
    %vm3131 = vweird.f32 %v3125
    %vm3132 = vweird.f32 %v3126
    %vm3133 = vmor %vm3131, %vm3132
    %v3134 = vsel %vm3133, %v3126, %v3130
    %v3135 = vand.u32 2147483647, %v3125
    %vm3136 = vcmp.eq.f32.partialorder %v3135, 8.507059e+37
    %v3137 = vand.u32 %v3125, 2147483648
    %v3138 = vor.u32 1.1754944e-38, %v3137
    %v3139 = vsel %vm3136, %v3138, %v3134
    %v3140 = vmul.f32 1.0, %v3139
    %v3141 = vtanh.pop %v3121
    %v3142 = vmul.f32 %v3140, %v2859
    %3144 = vrot.lane.b32.xlu0 %v3141, 64
    %v3145 = vpop.permute.xlu0 %3144
    %v3147 = vmul.f32 %v3140, %v3145
    %3149 = vrot.lane.b32.xlu0 %v3147, 32
    %v3150 = vpop.permute.xlu0 %3149
    %v3152 = vadd.f32 %v3142, %v3150
    %v3153 = vtanh.pop %v3152
    %3155 = vrot.lane.b32.xlu0 %v3153, 64
    %v3156 = vpop.permute.xlu0 %3155
    %v3158 = vmul.f32 %v3140, %v3156
    %3160 = vrot.lane.b32.xlu0 %v3158, 32
    %v3161 = vpop.permute.xlu0 %3160
    %v3162 = vsel %vm95, %v3161, 0
    %3164 = vmatpush.msra.mxu0 0.0
    %3165 = vmatpush.msra.mxu0 0.0
    %3166 = vmatpush.msra.mxu0 0.0
    %3167 = vmatpush.msra.mxu0 0.0
    %3168 = vmatpush.msra.mxu0 0.0
    %3169 = vmatpush.msra.mxu0 0.0
    %3170 = vmatpush.msra.mxu0 0.0
    %3171 = vmatpush.msra.mxu0 0.0
    %3172 = vmatpush.msra.mxu0 0.0
    %3173 = vmatpush.msra.mxu0 0.0
    %3174 = vmatpush.msra.mxu0 0.0
    %3175 = vmatpush.msra.mxu0 0.0
    %3176 = vmatpush.msra.mxu0 %v1087
    %3177 = vmatpush.msra.mxu0 %v1086
    %3178 = vmatpush.msra.mxu0 %v1085
    %3179 = vmatpush.msra.mxu0 %v1084
    %3180 = vmatmul.f32.gmra.mxu0 %v3162
    %v3181 = vpop.f32.mrf.mxu0
    %v3182 = vadd.f32 %v1144, %v3181
    %3183 = vdwg.mxu0
    %v3185 = vrot.slane %v3182, 1
    %v3186 = vperm.slane %v3182, 0
    %v3187 = vperm.slane %v3185, 0
    %v3190 = vadd.f32 %v3186, %v1136
    %v3191 = vadd.f32 %v3187, %v1139
    %v3192 = vtanh.pop %v3190
    %v3193 = vtanh.pop %v3191
    %v3194 = vmul.f32 %v3192, %v1186
    %v3195 = vmul.f32 %v3193, %v1186
    %v3196 = vsel %vm95, %v3194, 0.0
    %3197 = vadd.xlane.f32.xlu0 %v3196
    %v3198 = vpop.xlane.xlu0 %3197
    %v3199 = vsel %vm95, %v3195, 0.0
    %3200 = vadd.xlane.f32.xlu0 %v3199
    %v3201 = vpop.xlane.xlu0 %3200
    %v3202 = vadd.f32 %v3198, %v1200
    %v3203 = vadd.f32 %v3201, %v1200
    %v3206 = vperm.slane %v3202, %v1142
    %v3207 = vperm.slane %v3203, %v1142
    %v3208 = vsel %vm214, %v3207, %v3206
    %v3210 = vsel %vm1210, %v3208, -inf
    %3211 = vmax.xlane.f32.xlu0 %v3210
    %v3212 = vpop.xlane.xlu0 %3211
    %v3214 = vperm.slane %v3212, 0
    %v3215 = vperm.slane %v3212, 1
    %v3218 = vsub.f32 %v3202, %v3214
    %v3219 = vsub.f32 %v3203, %v3215
    %v3220 = vmul.f32 %v3218, 1.442695
    %v3221 = vpow.pop %v3220
    %v3222 = vmul.f32 %v3219, 1.442695
    %v3223 = vpow.pop %v3222
    %3226 = vset.pattern.permute.xlu0 0
    %3227 = vperm.xlu0 %3226, %v3221
    %v3228 = vpop.permute.xlu0 %3227
    %3229 = vset.pattern.permute.xlu0 0
    %3230 = vperm.xlu0 %3229, %v3223
    %v3231 = vpop.permute.xlu0 %3230
    %v3232 = vperm.slane %v3228, %v1142
    %v3233 = vperm.slane %v3231, %v1142
    %v3234 = vsel %vm214, %v3233, %v3232
    %v3236 = vsel %vm1210, %v3234, 0.0
    %3237 = vadd.xlane.f32.xlu0 %v3236
    %v3238 = vpop.xlane.xlu0 %3237
    %v3239 = vrcp.pop %v3238
    %v3241 = vperm.slane %v3239, 0
    %v3242 = vperm.slane %v3239, 1
    %v3245 = vmul.f32 %v3221, %v3241
    %v3246 = vmul.f32 %v3223, %v3242
    %3249 = vset.pattern.permute.xlu0 0
    %3250 = vperm.xlu0 %3249, %v3245
    %v3251 = vpop.permute.xlu0 %3250
    %3252 = vset.pattern.permute.xlu0 0
    %3253 = vperm.xlu0 %3252, %v3246
    %v3254 = vpop.permute.xlu0 %3253
    %v3255 = vperm.slane %v3251, %v1142
    %v3256 = vperm.slane %v3254, %v1142
    %v3257 = vsel %vm1258, %v3255, %v3255
    %v3258 = vsel %vm1260, %v3255, %v3257
    %v3259 = vsel %vm1262, %v3255, %v3258
    %v3260 = vsel %vm1264, %v3255, %v3259
    %v3261 = vsel %vm1266, %v3255, %v3260
    %v3262 = vsel %vm1268, %v3255, %v3261
    %v3263 = vsel %vm1258, %v3256, %v3256
    %v3264 = vsel %vm1260, %v3256, %v3263
    %v3265 = vsel %vm1262, %v3256, %v3264
    %v3266 = vsel %vm1264, %v3256, %v3265
    %v3267 = vsel %vm1266, %v3256, %v3266
    %v3268 = vsel %vm1268, %v3256, %v3267
    %v3271 = vsel %vm1077, %v3262, 0.0
    %v3272 = vsel %vm1077, %v3268, 0.0
    %v3273 = vadd.f32 %v3049, %v3271
    %v3274 = vadd.f32 %v3050, %v3272
    %vm3275 = vcmask 64512
    %3276 = vst.msk [vmem:[#allocation3] sm:$0xff] %vm3275, %v3273
    %3277 = vst.msk [vmem:[#allocation3 + $0x8] sm:$0xff] %vm3275, %v3274
    // Predicated region
    $region58: #{pcb_pointer_net.1} parent=1 // pred_check
      _
    $region59: #{pcb_pointer_net.1} parent=1 // pred_check_branch
      %3279 = sbr.rel (0) target = $region61
    $region60: #{pcb_pointer_net.1} parent=1 // pred_region
      %3281 = vsyncadd [#allocation4], 0
      %s3282 = sshll.u32 [#allocation3], 4
      %s3283 = int_to_ptr.vmem [resolvable:$true] %s3282
      %s3284 = sshll.u32 %s14, 4
      %s3285 = int_to_ptr.hbm [resolvable:$true] %s3284
      %3290 = dma.vmem_to_hbm [thread:$0]  %s3283, 256, %s3285, [#allocation4], 128, 128, 8
    $region61: #{pcb_pointer_net.1} parent=1 // pred_fallthru
      _
    // Predicated region
    $region62: #{pcb_pointer_net.1} parent=1 // pred_check
      _
    $region63: #{pcb_pointer_net.1} parent=1 // pred_check_branch
      %3292 = sbr.rel (0) target = $region65
    $region64: #{pcb_pointer_net.1} parent=1 // pred_region
      %3294 = dma.done [#allocation4], 256
    $region65: #{pcb_pointer_net.1} parent=1 // pred_fallthru
      _
    %3295 = vsyncpa [#allocation4], 1

</llo_original>
